<compile_context>
chip_gen: v7x
topology: tpu7x:2x2x1
jax: 0.10.0
libtpu: 0.0.40
codegen_flags: <defaults>
</compile_context>

<pallas_src>
import functools

import jax
import jax.numpy as jnp
from jax import lax
from jax.experimental import pallas as pl
from jax.experimental.pallas import tpu as pltpu

DECODER_OUT = 32  # nn.Linear(num_channels[-1], 32)


# -----------------------------------------------------------------------------
# Fused kernel. refs = (emb_block, *packed_weights, out_block)
#   "wide"  level: [w_big (Cin, 3*Cout) bf16, b1 (1,Cout), bd (1,Cout),
#                   w2 (2*Cout, Cout) bf16, b2 (1,Cout)]
#   "fused" level: [w1 (2*C, C) bf16, b1 (1,C), w2 (2*C, C) bf16, b2 (1,C)]
#   decoder      : [dec_w (C, 32) bf16, dec_b (1, 32)]
# -----------------------------------------------------------------------------
def _tcn_kernel(*refs, dilations, level_kinds):
    x_ref = refs[0]
    out_ref = refs[-1]
    w = refs[1:-1]

    x = x_ref[0]  # (T, E) f32 activations for this batch element

    def shift_down(z, d):
        """y[t] = z[t - d] for t >= d else 0 (causal time shift along sublanes)."""
        if d >= z.shape[0]:
            return jnp.zeros_like(z)
        rolled = pltpu.roll(z, shift=d, axis=0)            # XLU sublane rotate
        t_idx = lax.broadcasted_iota(jnp.int32, z.shape, 0)
        return jnp.where(t_idx >= d, rolled, jnp.zeros_like(z))

    def fused_tap_conv(h, w_ref, b_ref, d):
        """Dilated causal conv (k=2), both taps fused along K:
           [h | shift(h)] @ [W_cur; W_past] + b  -> one K=2C MXU matmul."""
        lhs = jnp.concatenate([h, shift_down(h, d)], axis=1).astype(jnp.bfloat16)
        return jnp.dot(lhs, w_ref[...], preferred_element_type=jnp.float32) + b_ref[...]

    cursor = 0
    for i, d in enumerate(dilations):
        if level_kinds[i] == "wide":
            # Cin != Cout level: one K=Cin matmul (N = 3*Cout) produces
            # conv1-current-tap, conv1-past-tap and the 1x1 downsample residual.
            # The past tap is realized by shifting the NARROW output (not the
            # wide input), which moves 6x less data for Cin=768.
            w_big, b1, bd, w2, b2 = w[cursor:cursor + 5]
            cursor += 5
            C = b1.shape[-1]
            z = jnp.dot(x.astype(jnp.bfloat16), w_big[...],
                        preferred_element_type=jnp.float32)           # (T, 3C)
            h = jnp.maximum(z[:, :C] + shift_down(z[:, C:2 * C], d) + b1[...], 0.0)
            res = z[:, 2 * C:] + bd[...]
            h = jnp.maximum(fused_tap_conv(h, w2, b2, d), 0.0)
        else:
            # Cin == Cout level: K-fused taps, residual is the block input.
            w1, b1, w2, b2 = w[cursor:cursor + 4]
            cursor += 4
            res = x
            h = jnp.maximum(fused_tap_conv(x, w1, b1, d), 0.0)
            h = jnp.maximum(fused_tap_conv(h, w2, b2, d), 0.0)
        x = jnp.maximum(h + res, 0.0)  # TemporalBlock output ReLU

    dec_w, dec_b = w[cursor], w[cursor + 1]
    y = jnp.dot(x.astype(jnp.bfloat16), dec_w[...],
                preferred_element_type=jnp.float32) + dec_b[...]       # (T, 32)
    out_ref[0] = y


def _const_spec(arr):
    """Full-array block at a constant block index -> fetched once, stays resident."""
    zeros = (0,) * arr.ndim
    return pl.BlockSpec(arr.shape, lambda b, z=zeros: z)


# -----------------------------------------------------------------------------
# Wrapper: batch-parallel grid, constant-block weights, cost estimate, VMEM limit.
# -----------------------------------------------------------------------------
def text_encoder_tcn_forward(emb, flat_params, *, level_kinds, dilations):
    """emb: (B, T, embed_size) = BERT last_hidden_state (f32). Returns (y, 0)."""
    B, T, E = emb.shape

    kernel = functools.partial(_tcn_kernel, dilations=dilations,
                               level_kinds=level_kinds)

    in_specs = [pl.BlockSpec((1, T, E), lambda b: (b, 0, 0))]
    in_specs += [_const_spec(a) for a in flat_params]
    out_spec = pl.BlockSpec((1, T, DECODER_OUT), lambda b: (b, 0, 0))

    # Footprint-derived VMEM limit (weights double-buffered worst-case + act tiles).
    param_bytes = sum(int(a.size) * a.dtype.itemsize for a in flat_params)
    act_bytes = T * E * 4 + T * DECODER_OUT * 4
    vmem_limit = int(2 * param_bytes + 4 * act_bytes + 8 * 1024 * 1024)

    # Cost estimate: all matmul weights are the 2-D arrays with >1 rows (biases are (1,C)).
    matmul_cols = sum(int(a.shape[0]) * int(a.shape[1])
                      for a in flat_params if a.ndim == 2 and a.shape[0] > 1)
    flops = 2 * B * T * matmul_cols
    bytes_accessed = (int(emb.size) * emb.dtype.itemsize + param_bytes
                      + B * T * DECODER_OUT * 4)

    y = pl.pallas_call(
        kernel,
        grid=(B,),
        out_shape=jax.ShapeDtypeStruct((B, T, DECODER_OUT), jnp.float32),
        in_specs=in_specs,
        out_specs=out_spec,
        compiler_params=pltpu.CompilerParams(
            dimension_semantics=("parallel",),      # megacore sharding on v7x
            vmem_limit_bytes=vmem_limit),
        cost_estimate=pl.CostEstimate(flops=int(flops), transcendentals=0,
                                      bytes_accessed=int(bytes_accessed)),
    )(emb, *flat_params)
    return y, 0  # module returns (y.contiguous(), 0)


# -----------------------------------------------------------------------------
# Parameters (stand-in for a real checkpoint), stored in the "logical" layout:
#   conv weights (k, Cin, Cout) with k=2: w[0]=past tap, w[1]=current tap
#   (== PyTorch (Cout, Cin, k) transposed, weight_norm folded).
# -----------------------------------------------------------------------------
def init_params(key, embed_size, hidden_size, n_layers):
    keys = iter(jax.random.split(key, 8 * n_layers + 8))

    def normal(shape, std=0.01):
        return std * jax.random.normal(next(keys), shape, jnp.float32)

    def uniform(shape, bound):
        return jax.random.uniform(next(keys), shape, jnp.float32, -bound, bound)

    levels = []
    for i in range(n_layers):
        cin = embed_size if i == 0 else hidden_size
        cout = hidden_size
        lv = {
            "w1": normal((2, cin, cout)),
            "b1": uniform((1, cout), 1.0 / (2 * cin) ** 0.5),
            "w2": normal((2, cout, cout)),
            "b2": uniform((1, cout), 1.0 / (2 * cout) ** 0.5),
        }
        if cin != cout:  # downsample 1x1 conv only when channel count changes
            lv["wd"] = normal((cin, cout))
            lv["bd"] = uniform((1, cout), 1.0 / cin ** 0.5)
        levels.append(lv)

    return {
        "levels": levels,
        "dec_w": normal((hidden_size, DECODER_OUT)),
        "dec_b": jnp.zeros((1, DECODER_OUT), jnp.float32),
    }


def pack_params(params):
    """Pack/fuse weights for the kernel and cast matmul weights to bf16 (once,
    outside jit). Biases stay f32 (VPU path)."""
    flat, kinds = [], []
    for lv in params["levels"]:
        if "wd" in lv:  # wide level: [W_cur | W_past | W_downsample] -> (Cin, 3*Cout)
            w_big = jnp.concatenate([lv["w1"][1], lv["w1"][0], lv["wd"]],
                                    axis=1).astype(jnp.bfloat16)
            w2 = jnp.concatenate([lv["w2"][1], lv["w2"][0]], axis=0).astype(jnp.bfloat16)
            flat += [w_big, lv["b1"], lv["bd"], w2, lv["b2"]]
            kinds.append("wide")
        else:           # square level: stack taps along K -> (2*C, C)
            w1 = jnp.concatenate([lv["w1"][1], lv["w1"][0]], axis=0).astype(jnp.bfloat16)
            w2 = jnp.concatenate([lv["w2"][1], lv["w2"][0]], axis=0).astype(jnp.bfloat16)
            flat += [w1, lv["b1"], w2, lv["b2"]]
            kinds.append("fused")
    flat += [params["dec_w"].astype(jnp.bfloat16), params["dec_b"]]
    return flat, tuple(kinds)


# -----------------------------------------------------------------------------
# Pure-JAX reference (unfused, mirrors PyTorch eval-mode semantics and the same
# bf16-weight / f32-accumulate quantization as the kernel) — used as a self-check.
# -----------------------------------------------------------------------------
def reference_forward(emb, params):
    def mm(h, w):  # (B,T,Cin) x (Cin,Cout), bf16 inputs, f32 accumulate
        return jnp.einsum("btc,cd->btd", h.astype(jnp.bfloat16),
                          w.astype(jnp.bfloat16),
                          preferred_element_type=jnp.float32)

    def causal_conv(h, w, b, d):  # w: (2, Cin, Cout); w[0]=past tap, w[1]=current tap
        B_, T_, C_ = h.shape
        out = mm(h, w[1])
        if d < T_:
            past_in = jnp.concatenate(
                [jnp.zeros((B_, d, C_), h.dtype), h[:, :T_ - d, :]], axis=1)
            out = out + mm(past_in, w[0])
        return out + b

    x = emb
    for i, lv in enumerate(params["levels"]):
        d = 2 ** i
        h = jnp.maximum(causal_conv(x, lv["w1"], lv["b1"], d), 0.0)
        h = jnp.maximum(causal_conv(h, lv["w2"], lv["b2"], d), 0.0)
        res = (mm(x, lv["wd"]) + lv["bd"]) if "wd" in lv else x
        x = jnp.maximum(h + res, 0.0)
    return mm(x, params["dec_w"]) + params["dec_b"]


if __name__ == "__main__":
    key = jax.random.PRNGKey(0)
    k_param, k_x = jax.random.split(key)

    # Small but layout-friendly shapes consistent with the module:
    #   embed_size = 768 (BERT hidden), args.hidden_size = 128, args.n_layers = 4,
    #   B = 2, T = 16 (multiple of 8 -> sublane-aligned time axis).
    B, T = 2, 16
    EMBED_SIZE, HIDDEN_SIZE, N_LAYERS = 768, 128, 4

    # TODO(synk): pretrained BertModel is not runnable in-kernel; feed the
    # (B, T, embed_size) last_hidden_state directly.
    emb = jax.random.normal(k_x, (B, T, EMBED_SIZE), jnp.float32)
    params = init_params(k_param, EMBED_SIZE, HIDDEN_SIZE, N_LAYERS)
    flat, kinds = pack_params(params)                 # bf16 weights, packed once
    dilations = tuple(2 ** i for i in range(N_LAYERS))

    fwd = jax.jit(functools.partial(text_encoder_tcn_forward,
                                    level_kinds=kinds, dilations=dilations))
    y, aux = fwd(emb, flat)
    y = jax.block_until_ready(y)

    assert y.shape == (B, T, DECODER_OUT), y.shape
    assert aux == 0
    assert bool(jnp.all(jnp.isfinite(y)))

    # Self-check against the unfused reference (same quantization, different fusion).
    y_ref = jax.block_until_ready(jax.jit(reference_forward)(emb, params))
    max_abs_err = float(jnp.max(jnp.abs(y - y_ref)))
    assert max_abs_err < 1e-3, f"kernel/reference mismatch: {max_abs_err}"

    print("KERNEL_OK")
</pallas_src>

<mosaic_0001>
module attributes {stable_mosaic.version = 11 : i64} {
  func.func @_tcn_kernel(%arg0: i32, %arg1: memref<1x16x768xf32, #tpu.memory_space<vmem>>, %arg2: memref<768x384xbf16, #tpu.memory_space<vmem>>, %arg3: memref<1x128xf32, #tpu.memory_space<vmem>>, %arg4: memref<1x128xf32, #tpu.memory_space<vmem>>, %arg5: memref<256x128xbf16, #tpu.memory_space<vmem>>, %arg6: memref<1x128xf32, #tpu.memory_space<vmem>>, %arg7: memref<256x128xbf16, #tpu.memory_space<vmem>>, %arg8: memref<1x128xf32, #tpu.memory_space<vmem>>, %arg9: memref<256x128xbf16, #tpu.memory_space<vmem>>, %arg10: memref<1x128xf32, #tpu.memory_space<vmem>>, %arg11: memref<256x128xbf16, #tpu.memory_space<vmem>>, %arg12: memref<1x128xf32, #tpu.memory_space<vmem>>, %arg13: memref<256x128xbf16, #tpu.memory_space<vmem>>, %arg14: memref<1x128xf32, #tpu.memory_space<vmem>>, %arg15: memref<256x128xbf16, #tpu.memory_space<vmem>>, %arg16: memref<1x128xf32, #tpu.memory_space<vmem>>, %arg17: memref<256x128xbf16, #tpu.memory_space<vmem>>, %arg18: memref<1x128xf32, #tpu.memory_space<vmem>>, %arg19: memref<128x32xbf16, #tpu.memory_space<vmem>>, %arg20: memref<1x32xf32, #tpu.memory_space<vmem>>, %arg21: memref<1x16x32xf32, #tpu.memory_space<vmem>>) attributes {dimension_semantics = [#tpu.dimension_semantics<parallel>], iteration_bounds = array<i64: 2>, scalar_prefetch = 0 : i64, scratch_operands = 0 : i64, tpu.core_type = #tpu.core_type<tc>, window_params = [{transform_indices = @transform_0, window_bounds = array<i64: 1, 16, 768>}, {pipeline_mode = #tpu.pipeline_mode<synchronous>, transform_indices = @transform_1, window_bounds = array<i64: 768, 384>}, {pipeline_mode = #tpu.pipeline_mode<synchronous>, transform_indices = @transform_2, window_bounds = array<i64: 1, 128>}, {pipeline_mode = #tpu.pipeline_mode<synchronous>, transform_indices = @transform_3, window_bounds = array<i64: 1, 128>}, {pipeline_mode = #tpu.pipeline_mode<synchronous>, transform_indices = @transform_4, window_bounds = array<i64: 256, 128>}, {pipeline_mode = #tpu.pipeline_mode<synchronous>, transform_indices = @transform_5, window_bounds = array<i64: 1, 128>}, {pipeline_mode = #tpu.pipeline_mode<synchronous>, transform_indices = @transform_6, window_bounds = array<i64: 256, 128>}, {pipeline_mode = #tpu.pipeline_mode<synchronous>, transform_indices = @transform_7, window_bounds = array<i64: 1, 128>}, {pipeline_mode = #tpu.pipeline_mode<synchronous>, transform_indices = @transform_8, window_bounds = array<i64: 256, 128>}, {pipeline_mode = #tpu.pipeline_mode<synchronous>, transform_indices = @transform_9, window_bounds = array<i64: 1, 128>}, {pipeline_mode = #tpu.pipeline_mode<synchronous>, transform_indices = @transform_10, window_bounds = array<i64: 256, 128>}, {pipeline_mode = #tpu.pipeline_mode<synchronous>, transform_indices = @transform_11, window_bounds = array<i64: 1, 128>}, {pipeline_mode = #tpu.pipeline_mode<synchronous>, transform_indices = @transform_12, window_bounds = array<i64: 256, 128>}, {pipeline_mode = #tpu.pipeline_mode<synchronous>, transform_indices = @transform_13, window_bounds = array<i64: 1, 128>}, {pipeline_mode = #tpu.pipeline_mode<synchronous>, transform_indices = @transform_14, window_bounds = array<i64: 256, 128>}, {pipeline_mode = #tpu.pipeline_mode<synchronous>, transform_indices = @transform_15, window_bounds = array<i64: 1, 128>}, {pipeline_mode = #tpu.pipeline_mode<synchronous>, transform_indices = @transform_16, window_bounds = array<i64: 256, 128>}, {pipeline_mode = #tpu.pipeline_mode<synchronous>, transform_indices = @transform_17, window_bounds = array<i64: 1, 128>}, {pipeline_mode = #tpu.pipeline_mode<synchronous>, transform_indices = @transform_18, window_bounds = array<i64: 128, 32>}, {pipeline_mode = #tpu.pipeline_mode<synchronous>, transform_indices = @transform_19, window_bounds = array<i64: 1, 32>}, {transform_indices = @transform_20, window_bounds = array<i64: 1, 16, 32>}]} {
    %c0 = arith.constant 0 : index
    %c0_0 = arith.constant 0 : index
    %c0_1 = arith.constant 0 : index
    %0 = vector.load %arg1[%c0, %c0_0, %c0_1] : memref<1x16x768xf32, #tpu.memory_space<vmem>>, vector<1x16x768xf32>
    %1 = vector.shape_cast %0 : vector<1x16x768xf32> to vector<16x768xf32>
    %2 = arith.truncf %1 : vector<16x768xf32> to vector<16x768xbf16>
    %c0_2 = arith.constant 0 : index
    %c0_3 = arith.constant 0 : index
    %3 = vector.load %arg2[%c0_2, %c0_3] : memref<768x384xbf16, #tpu.memory_space<vmem>>, vector<768x384xbf16>
    %cst = arith.constant dense<0.000000e+00> : vector<16x384xf32>
    %4 = tpu.matmul %2, %3, %cst {dimension_numbers = #tpu.dot_dimension_numbers<[1], [0], [0], [1], [0, 0, 1, 1], [], []>} : vector<16x768xbf16>, vector<768x384xbf16>, vector<16x384xf32> -> vector<16x384xf32>
    %5 = vector.extract_strided_slice %4 {offsets = [0, 0], sizes = [16, 128], strides = [1, 1]} : vector<16x384xf32> to vector<16x128xf32>
    %6 = vector.extract_strided_slice %4 {offsets = [0, 128], sizes = [16, 128], strides = [1, 1]} : vector<16x384xf32> to vector<16x128xf32>
    %c1_i32 = arith.constant 1 : i32
    %7 = tpu.dynamic_rotate %6 by %c1_i32 dim 0 : vector<16x128xf32>, i32 -> vector<16x128xf32>
    %8 = tpu.iota {dimensions = array<i32: 0>} : vector<16x128xi32>
    %c1_i32_4 = arith.constant 1 : i32
    %9 = vector.broadcast %c1_i32_4 : i32 to vector<16x128xi32>
    %10 = arith.cmpi sge, %8, %9 : vector<16x128xi32>
    %cst_5 = arith.constant 0.000000e+00 : f32
    %11 = vector.broadcast %cst_5 : f32 to vector<16x128xf32>
    %12 = arith.select %10, %7, %11 : vector<16x128xi1>, vector<16x128xf32>
    %13 = arith.addf %5, %12 : vector<16x128xf32>
    %c0_6 = arith.constant 0 : index
    %c0_7 = arith.constant 0 : index
    %14 = vector.load %arg3[%c0_6, %c0_7] : memref<1x128xf32, #tpu.memory_space<vmem>>, vector<1x128xf32>
    %15 = vector.broadcast %14 : vector<1x128xf32> to vector<16x128xf32>
    %16 = arith.addf %13, %15 : vector<16x128xf32>
    %cst_8 = arith.constant 0.000000e+00 : f32
    %17 = vector.broadcast %cst_8 : f32 to vector<16x128xf32>
    %18 = arith.maximumf %16, %17 : vector<16x128xf32>
    %19 = vector.extract_strided_slice %4 {offsets = [0, 256], sizes = [16, 128], strides = [1, 1]} : vector<16x384xf32> to vector<16x128xf32>
    %c0_9 = arith.constant 0 : index
    %c0_10 = arith.constant 0 : index
    %20 = vector.load %arg4[%c0_9, %c0_10] : memref<1x128xf32, #tpu.memory_space<vmem>>, vector<1x128xf32>
    %21 = vector.broadcast %20 : vector<1x128xf32> to vector<16x128xf32>
    %22 = arith.addf %19, %21 : vector<16x128xf32>
    %c1_i32_11 = arith.constant 1 : i32
    %23 = tpu.dynamic_rotate %18 by %c1_i32_11 dim 0 : vector<16x128xf32>, i32 -> vector<16x128xf32>
    %24 = tpu.iota {dimensions = array<i32: 0>} : vector<16x128xi32>
    %c1_i32_12 = arith.constant 1 : i32
    %25 = vector.broadcast %c1_i32_12 : i32 to vector<16x128xi32>
    %26 = arith.cmpi sge, %24, %25 : vector<16x128xi32>
    %cst_13 = arith.constant 0.000000e+00 : f32
    %27 = vector.broadcast %cst_13 : f32 to vector<16x128xf32>
    %28 = arith.select %26, %23, %27 : vector<16x128xi1>, vector<16x128xf32>
    %29 = tpu.concatenate %18, %28 in 1 : vector<16x128xf32>, vector<16x128xf32> -> vector<16x256xf32>
    %30 = arith.truncf %29 : vector<16x256xf32> to vector<16x256xbf16>
    %c0_14 = arith.constant 0 : index
    %c0_15 = arith.constant 0 : index
    %31 = vector.load %arg5[%c0_14, %c0_15] : memref<256x128xbf16, #tpu.memory_space<vmem>>, vector<256x128xbf16>
    %cst_16 = arith.constant dense<0.000000e+00> : vector<16x128xf32>
    %32 = tpu.matmul %30, %31, %cst_16 {dimension_numbers = #tpu.dot_dimension_numbers<[1], [0], [0], [1], [0, 0, 1, 1], [], []>} : vector<16x256xbf16>, vector<256x128xbf16>, vector<16x128xf32> -> vector<16x128xf32>
    %c0_17 = arith.constant 0 : index
    %c0_18 = arith.constant 0 : index
    %33 = vector.load %arg6[%c0_17, %c0_18] : memref<1x128xf32, #tpu.memory_space<vmem>>, vector<1x128xf32>
    %34 = vector.broadcast %33 : vector<1x128xf32> to vector<16x128xf32>
    %35 = arith.addf %32, %34 : vector<16x128xf32>
    %cst_19 = arith.constant 0.000000e+00 : f32
    %36 = vector.broadcast %cst_19 : f32 to vector<16x128xf32>
    %37 = arith.maximumf %35, %36 : vector<16x128xf32>
    %38 = arith.addf %37, %22 : vector<16x128xf32>
    %cst_20 = arith.constant 0.000000e+00 : f32
    %39 = vector.broadcast %cst_20 : f32 to vector<16x128xf32>
    %40 = arith.maximumf %38, %39 : vector<16x128xf32>
    %c2_i32 = arith.constant 2 : i32
    %41 = tpu.dynamic_rotate %40 by %c2_i32 dim 0 : vector<16x128xf32>, i32 -> vector<16x128xf32>
    %42 = tpu.iota {dimensions = array<i32: 0>} : vector<16x128xi32>
    %c2_i32_21 = arith.constant 2 : i32
    %43 = vector.broadcast %c2_i32_21 : i32 to vector<16x128xi32>
    %44 = arith.cmpi sge, %42, %43 : vector<16x128xi32>
    %cst_22 = arith.constant 0.000000e+00 : f32
    %45 = vector.broadcast %cst_22 : f32 to vector<16x128xf32>
    %46 = arith.select %44, %41, %45 : vector<16x128xi1>, vector<16x128xf32>
    %47 = tpu.concatenate %40, %46 in 1 : vector<16x128xf32>, vector<16x128xf32> -> vector<16x256xf32>
    %48 = arith.truncf %47 : vector<16x256xf32> to vector<16x256xbf16>
    %c0_23 = arith.constant 0 : index
    %c0_24 = arith.constant 0 : index
    %49 = vector.load %arg7[%c0_23, %c0_24] : memref<256x128xbf16, #tpu.memory_space<vmem>>, vector<256x128xbf16>
    %cst_25 = arith.constant dense<0.000000e+00> : vector<16x128xf32>
    %50 = tpu.matmul %48, %49, %cst_25 {dimension_numbers = #tpu.dot_dimension_numbers<[1], [0], [0], [1], [0, 0, 1, 1], [], []>} : vector<16x256xbf16>, vector<256x128xbf16>, vector<16x128xf32> -> vector<16x128xf32>
    %c0_26 = arith.constant 0 : index
    %c0_27 = arith.constant 0 : index
    %51 = vector.load %arg8[%c0_26, %c0_27] : memref<1x128xf32, #tpu.memory_space<vmem>>, vector<1x128xf32>
    %52 = vector.broadcast %51 : vector<1x128xf32> to vector<16x128xf32>
    %53 = arith.addf %50, %52 : vector<16x128xf32>
    %cst_28 = arith.constant 0.000000e+00 : f32
    %54 = vector.broadcast %cst_28 : f32 to vector<16x128xf32>
    %55 = arith.maximumf %53, %54 : vector<16x128xf32>
    %c2_i32_29 = arith.constant 2 : i32
    %56 = tpu.dynamic_rotate %55 by %c2_i32_29 dim 0 : vector<16x128xf32>, i32 -> vector<16x128xf32>
    %57 = tpu.iota {dimensions = array<i32: 0>} : vector<16x128xi32>
    %c2_i32_30 = arith.constant 2 : i32
    %58 = vector.broadcast %c2_i32_30 : i32 to vector<16x128xi32>
    %59 = arith.cmpi sge, %57, %58 : vector<16x128xi32>
    %cst_31 = arith.constant 0.000000e+00 : f32
    %60 = vector.broadcast %cst_31 : f32 to vector<16x128xf32>
    %61 = arith.select %59, %56, %60 : vector<16x128xi1>, vector<16x128xf32>
    %62 = tpu.concatenate %55, %61 in 1 : vector<16x128xf32>, vector<16x128xf32> -> vector<16x256xf32>
    %63 = arith.truncf %62 : vector<16x256xf32> to vector<16x256xbf16>
    %c0_32 = arith.constant 0 : index
    %c0_33 = arith.constant 0 : index
    %64 = vector.load %arg9[%c0_32, %c0_33] : memref<256x128xbf16, #tpu.memory_space<vmem>>, vector<256x128xbf16>
    %cst_34 = arith.constant dense<0.000000e+00> : vector<16x128xf32>
    %65 = tpu.matmul %63, %64, %cst_34 {dimension_numbers = #tpu.dot_dimension_numbers<[1], [0], [0], [1], [0, 0, 1, 1], [], []>} : vector<16x256xbf16>, vector<256x128xbf16>, vector<16x128xf32> -> vector<16x128xf32>
    %c0_35 = arith.constant 0 : index
    %c0_36 = arith.constant 0 : index
    %66 = vector.load %arg10[%c0_35, %c0_36] : memref<1x128xf32, #tpu.memory_space<vmem>>, vector<1x128xf32>
    %67 = vector.broadcast %66 : vector<1x128xf32> to vector<16x128xf32>
    %68 = arith.addf %65, %67 : vector<16x128xf32>
    %cst_37 = arith.constant 0.000000e+00 : f32
    %69 = vector.broadcast %cst_37 : f32 to vector<16x128xf32>
    %70 = arith.maximumf %68, %69 : vector<16x128xf32>
    %71 = arith.addf %70, %40 : vector<16x128xf32>
    %cst_38 = arith.constant 0.000000e+00 : f32
    %72 = vector.broadcast %cst_38 : f32 to vector<16x128xf32>
    %73 = arith.maximumf %71, %72 : vector<16x128xf32>
    %c4_i32 = arith.constant 4 : i32
    %74 = tpu.dynamic_rotate %73 by %c4_i32 dim 0 : vector<16x128xf32>, i32 -> vector<16x128xf32>
    %75 = tpu.iota {dimensions = array<i32: 0>} : vector<16x128xi32>
    %c4_i32_39 = arith.constant 4 : i32
    %76 = vector.broadcast %c4_i32_39 : i32 to vector<16x128xi32>
    %77 = arith.cmpi sge, %75, %76 : vector<16x128xi32>
    %cst_40 = arith.constant 0.000000e+00 : f32
    %78 = vector.broadcast %cst_40 : f32 to vector<16x128xf32>
    %79 = arith.select %77, %74, %78 : vector<16x128xi1>, vector<16x128xf32>
    %80 = tpu.concatenate %73, %79 in 1 : vector<16x128xf32>, vector<16x128xf32> -> vector<16x256xf32>
    %81 = arith.truncf %80 : vector<16x256xf32> to vector<16x256xbf16>
    %c0_41 = arith.constant 0 : index
    %c0_42 = arith.constant 0 : index
    %82 = vector.load %arg11[%c0_41, %c0_42] : memref<256x128xbf16, #tpu.memory_space<vmem>>, vector<256x128xbf16>
    %cst_43 = arith.constant dense<0.000000e+00> : vector<16x128xf32>
    %83 = tpu.matmul %81, %82, %cst_43 {dimension_numbers = #tpu.dot_dimension_numbers<[1], [0], [0], [1], [0, 0, 1, 1], [], []>} : vector<16x256xbf16>, vector<256x128xbf16>, vector<16x128xf32> -> vector<16x128xf32>
    %c0_44 = arith.constant 0 : index
    %c0_45 = arith.constant 0 : index
    %84 = vector.load %arg12[%c0_44, %c0_45] : memref<1x128xf32, #tpu.memory_space<vmem>>, vector<1x128xf32>
    %85 = vector.broadcast %84 : vector<1x128xf32> to vector<16x128xf32>
    %86 = arith.addf %83, %85 : vector<16x128xf32>
    %cst_46 = arith.constant 0.000000e+00 : f32
    %87 = vector.broadcast %cst_46 : f32 to vector<16x128xf32>
    %88 = arith.maximumf %86, %87 : vector<16x128xf32>
    %c4_i32_47 = arith.constant 4 : i32
    %89 = tpu.dynamic_rotate %88 by %c4_i32_47 dim 0 : vector<16x128xf32>, i32 -> vector<16x128xf32>
    %90 = tpu.iota {dimensions = array<i32: 0>} : vector<16x128xi32>
    %c4_i32_48 = arith.constant 4 : i32
    %91 = vector.broadcast %c4_i32_48 : i32 to vector<16x128xi32>
    %92 = arith.cmpi sge, %90, %91 : vector<16x128xi32>
    %cst_49 = arith.constant 0.000000e+00 : f32
    %93 = vector.broadcast %cst_49 : f32 to vector<16x128xf32>
    %94 = arith.select %92, %89, %93 : vector<16x128xi1>, vector<16x128xf32>
    %95 = tpu.concatenate %88, %94 in 1 : vector<16x128xf32>, vector<16x128xf32> -> vector<16x256xf32>
    %96 = arith.truncf %95 : vector<16x256xf32> to vector<16x256xbf16>
    %c0_50 = arith.constant 0 : index
    %c0_51 = arith.constant 0 : index
    %97 = vector.load %arg13[%c0_50, %c0_51] : memref<256x128xbf16, #tpu.memory_space<vmem>>, vector<256x128xbf16>
    %cst_52 = arith.constant dense<0.000000e+00> : vector<16x128xf32>
    %98 = tpu.matmul %96, %97, %cst_52 {dimension_numbers = #tpu.dot_dimension_numbers<[1], [0], [0], [1], [0, 0, 1, 1], [], []>} : vector<16x256xbf16>, vector<256x128xbf16>, vector<16x128xf32> -> vector<16x128xf32>
    %c0_53 = arith.constant 0 : index
    %c0_54 = arith.constant 0 : index
    %99 = vector.load %arg14[%c0_53, %c0_54] : memref<1x128xf32, #tpu.memory_space<vmem>>, vector<1x128xf32>
    %100 = vector.broadcast %99 : vector<1x128xf32> to vector<16x128xf32>
    %101 = arith.addf %98, %100 : vector<16x128xf32>
    %cst_55 = arith.constant 0.000000e+00 : f32
    %102 = vector.broadcast %cst_55 : f32 to vector<16x128xf32>
    %103 = arith.maximumf %101, %102 : vector<16x128xf32>
    %104 = arith.addf %103, %73 : vector<16x128xf32>
    %cst_56 = arith.constant 0.000000e+00 : f32
    %105 = vector.broadcast %cst_56 : f32 to vector<16x128xf32>
    %106 = arith.maximumf %104, %105 : vector<16x128xf32>
    %c8_i32 = arith.constant 8 : i32
    %107 = tpu.dynamic_rotate %106 by %c8_i32 dim 0 : vector<16x128xf32>, i32 -> vector<16x128xf32>
    %108 = tpu.iota {dimensions = array<i32: 0>} : vector<16x128xi32>
    %c8_i32_57 = arith.constant 8 : i32
    %109 = vector.broadcast %c8_i32_57 : i32 to vector<16x128xi32>
    %110 = arith.cmpi sge, %108, %109 : vector<16x128xi32>
    %cst_58 = arith.constant 0.000000e+00 : f32
    %111 = vector.broadcast %cst_58 : f32 to vector<16x128xf32>
    %112 = arith.select %110, %107, %111 : vector<16x128xi1>, vector<16x128xf32>
    %113 = tpu.concatenate %106, %112 in 1 : vector<16x128xf32>, vector<16x128xf32> -> vector<16x256xf32>
    %114 = arith.truncf %113 : vector<16x256xf32> to vector<16x256xbf16>
    %c0_59 = arith.constant 0 : index
    %c0_60 = arith.constant 0 : index
    %115 = vector.load %arg15[%c0_59, %c0_60] : memref<256x128xbf16, #tpu.memory_space<vmem>>, vector<256x128xbf16>
    %cst_61 = arith.constant dense<0.000000e+00> : vector<16x128xf32>
    %116 = tpu.matmul %114, %115, %cst_61 {dimension_numbers = #tpu.dot_dimension_numbers<[1], [0], [0], [1], [0, 0, 1, 1], [], []>} : vector<16x256xbf16>, vector<256x128xbf16>, vector<16x128xf32> -> vector<16x128xf32>
    %c0_62 = arith.constant 0 : index
    %c0_63 = arith.constant 0 : index
    %117 = vector.load %arg16[%c0_62, %c0_63] : memref<1x128xf32, #tpu.memory_space<vmem>>, vector<1x128xf32>
    %118 = vector.broadcast %117 : vector<1x128xf32> to vector<16x128xf32>
    %119 = arith.addf %116, %118 : vector<16x128xf32>
    %cst_64 = arith.constant 0.000000e+00 : f32
    %120 = vector.broadcast %cst_64 : f32 to vector<16x128xf32>
    %121 = arith.maximumf %119, %120 : vector<16x128xf32>
    %c8_i32_65 = arith.constant 8 : i32
    %122 = tpu.dynamic_rotate %121 by %c8_i32_65 dim 0 : vector<16x128xf32>, i32 -> vector<16x128xf32>
    %123 = tpu.iota {dimensions = array<i32: 0>} : vector<16x128xi32>
    %c8_i32_66 = arith.constant 8 : i32
    %124 = vector.broadcast %c8_i32_66 : i32 to vector<16x128xi32>
    %125 = arith.cmpi sge, %123, %124 : vector<16x128xi32>
    %cst_67 = arith.constant 0.000000e+00 : f32
    %126 = vector.broadcast %cst_67 : f32 to vector<16x128xf32>
    %127 = arith.select %125, %122, %126 : vector<16x128xi1>, vector<16x128xf32>
    %128 = tpu.concatenate %121, %127 in 1 : vector<16x128xf32>, vector<16x128xf32> -> vector<16x256xf32>
    %129 = arith.truncf %128 : vector<16x256xf32> to vector<16x256xbf16>
    %c0_68 = arith.constant 0 : index
    %c0_69 = arith.constant 0 : index
    %130 = vector.load %arg17[%c0_68, %c0_69] : memref<256x128xbf16, #tpu.memory_space<vmem>>, vector<256x128xbf16>
    %cst_70 = arith.constant dense<0.000000e+00> : vector<16x128xf32>
    %131 = tpu.matmul %129, %130, %cst_70 {dimension_numbers = #tpu.dot_dimension_numbers<[1], [0], [0], [1], [0, 0, 1, 1], [], []>} : vector<16x256xbf16>, vector<256x128xbf16>, vector<16x128xf32> -> vector<16x128xf32>
    %c0_71 = arith.constant 0 : index
    %c0_72 = arith.constant 0 : index
    %132 = vector.load %arg18[%c0_71, %c0_72] : memref<1x128xf32, #tpu.memory_space<vmem>>, vector<1x128xf32>
    %133 = vector.broadcast %132 : vector<1x128xf32> to vector<16x128xf32>
    %134 = arith.addf %131, %133 : vector<16x128xf32>
    %cst_73 = arith.constant 0.000000e+00 : f32
    %135 = vector.broadcast %cst_73 : f32 to vector<16x128xf32>
    %136 = arith.maximumf %134, %135 : vector<16x128xf32>
    %137 = arith.addf %136, %106 : vector<16x128xf32>
    %cst_74 = arith.constant 0.000000e+00 : f32
    %138 = vector.broadcast %cst_74 : f32 to vector<16x128xf32>
    %139 = arith.maximumf %137, %138 : vector<16x128xf32>
    %140 = arith.truncf %139 : vector<16x128xf32> to vector<16x128xbf16>
    %c0_75 = arith.constant 0 : index
    %c0_76 = arith.constant 0 : index
    %141 = vector.load %arg19[%c0_75, %c0_76] : memref<128x32xbf16, #tpu.memory_space<vmem>>, vector<128x32xbf16>
    %cst_77 = arith.constant dense<0.000000e+00> : vector<16x32xf32>
    %142 = tpu.matmul %140, %141, %cst_77 {dimension_numbers = #tpu.dot_dimension_numbers<[1], [0], [0], [1], [0, 0, 1, 1], [], []>} : vector<16x128xbf16>, vector<128x32xbf16>, vector<16x32xf32> -> vector<16x32xf32>
    %c0_78 = arith.constant 0 : index
    %c0_79 = arith.constant 0 : index
    %143 = vector.load %arg20[%c0_78, %c0_79] : memref<1x32xf32, #tpu.memory_space<vmem>>, vector<1x32xf32>
    %144 = vector.broadcast %143 : vector<1x32xf32> to vector<16x32xf32>
    %145 = arith.addf %142, %144 : vector<16x32xf32>
    %c0_80 = arith.constant 0 : index
    %c0_81 = arith.constant 0 : index
    %c0_82 = arith.constant 0 : index
    %146 = vector.load %arg21[%c0_80, %c0_81, %c0_82] : memref<1x16x32xf32, #tpu.memory_space<vmem>>, vector<1x16x32xf32>
    %147 = vector.shape_cast %146 : vector<1x16x32xf32> to vector<16x32xf32>
    %148 = vector.shape_cast %145 : vector<16x32xf32> to vector<1x16x32xf32>
    tpu.vector_store %arg21[%c0_80, %c0_81, %c0_82], %148 {strides = array<i32>} : memref<1x16x32xf32, #tpu.memory_space<vmem>>, vector<1x16x32xf32>,
    return
  }
  func.func @transform_0(%arg0: i32) -> (i32, i32, i32) {
    %c0_i32 = arith.constant 0 : i32
    %c0_i32_0 = arith.constant 0 : i32
    %c0_i32_1 = arith.constant 0 : i32
    return %arg0, %c0_i32, %c0_i32_0 : i32, i32, i32
  }
  func.func @transform_1(%arg0: i32) -> (i32, i32) {
    %c0_i32 = arith.constant 0 : i32
    %c0_i32_0 = arith.constant 0 : i32
    %c0_i32_1 = arith.constant 0 : i32
    return %c0_i32, %c0_i32_0 : i32, i32
  }
  func.func @transform_2(%arg0: i32) -> (i32, i32) {
    %c0_i32 = arith.constant 0 : i32
    %c0_i32_0 = arith.constant 0 : i32
    %c0_i32_1 = arith.constant 0 : i32
    return %c0_i32, %c0_i32_0 : i32, i32
  }
  func.func @transform_3(%arg0: i32) -> (i32, i32) {
    %c0_i32 = arith.constant 0 : i32
    %c0_i32_0 = arith.constant 0 : i32
    %c0_i32_1 = arith.constant 0 : i32
    return %c0_i32, %c0_i32_0 : i32, i32
  }
  func.func @transform_4(%arg0: i32) -> (i32, i32) {
    %c0_i32 = arith.constant 0 : i32
    %c0_i32_0 = arith.constant 0 : i32
    %c0_i32_1 = arith.constant 0 : i32
    return %c0_i32, %c0_i32_0 : i32, i32
  }
  func.func @transform_5(%arg0: i32) -> (i32, i32) {
    %c0_i32 = arith.constant 0 : i32
    %c0_i32_0 = arith.constant 0 : i32
    %c0_i32_1 = arith.constant 0 : i32
    return %c0_i32, %c0_i32_0 : i32, i32
  }
  func.func @transform_6(%arg0: i32) -> (i32, i32) {
    %c0_i32 = arith.constant 0 : i32
    %c0_i32_0 = arith.constant 0 : i32
    %c0_i32_1 = arith.constant 0 : i32
    return %c0_i32, %c0_i32_0 : i32, i32
  }
  func.func @transform_7(%arg0: i32) -> (i32, i32) {
    %c0_i32 = arith.constant 0 : i32
    %c0_i32_0 = arith.constant 0 : i32
    %c0_i32_1 = arith.constant 0 : i32
    return %c0_i32, %c0_i32_0 : i32, i32
  }
  func.func @transform_8(%arg0: i32) -> (i32, i32) {
    %c0_i32 = arith.constant 0 : i32
    %c0_i32_0 = arith.constant 0 : i32
    %c0_i32_1 = arith.constant 0 : i32
    return %c0_i32, %c0_i32_0 : i32, i32
  }
  func.func @transform_9(%arg0: i32) -> (i32, i32) {
    %c0_i32 = arith.constant 0 : i32
    %c0_i32_0 = arith.constant 0 : i32
    %c0_i32_1 = arith.constant 0 : i32
    return %c0_i32, %c0_i32_0 : i32, i32
  }
  func.func @transform_10(%arg0: i32) -> (i32, i32) {
    %c0_i32 = arith.constant 0 : i32
    %c0_i32_0 = arith.constant 0 : i32
    %c0_i32_1 = arith.constant 0 : i32
    return %c0_i32, %c0_i32_0 : i32, i32
  }
  func.func @transform_11(%arg0: i32) -> (i32, i32) {
    %c0_i32 = arith.constant 0 : i32
    %c0_i32_0 = arith.constant 0 : i32
    %c0_i32_1 = arith.constant 0 : i32
    return %c0_i32, %c0_i32_0 : i32, i32
  }
  func.func @transform_12(%arg0: i32) -> (i32, i32) {
    %c0_i32 = arith.constant 0 : i32
    %c0_i32_0 = arith.constant 0 : i32
    %c0_i32_1 = arith.constant 0 : i32
    return %c0_i32, %c0_i32_0 : i32, i32
  }
  func.func @transform_13(%arg0: i32) -> (i32, i32) {
    %c0_i32 = arith.constant 0 : i32
    %c0_i32_0 = arith.constant 0 : i32
    %c0_i32_1 = arith.constant 0 : i32
    return %c0_i32, %c0_i32_0 : i32, i32
  }
  func.func @transform_14(%arg0: i32) -> (i32, i32) {
    %c0_i32 = arith.constant 0 : i32
    %c0_i32_0 = arith.constant 0 : i32
    %c0_i32_1 = arith.constant 0 : i32
    return %c0_i32, %c0_i32_0 : i32, i32
  }
  func.func @transform_15(%arg0: i32) -> (i32, i32) {
    %c0_i32 = arith.constant 0 : i32
    %c0_i32_0 = arith.constant 0 : i32
    %c0_i32_1 = arith.constant 0 : i32
    return %c0_i32, %c0_i32_0 : i32, i32
  }
  func.func @transform_16(%arg0: i32) -> (i32, i32) {
    %c0_i32 = arith.constant 0 : i32
    %c0_i32_0 = arith.constant 0 : i32
    %c0_i32_1 = arith.constant 0 : i32
    return %c0_i32, %c0_i32_0 : i32, i32
  }
  func.func @transform_17(%arg0: i32) -> (i32, i32) {
    %c0_i32 = arith.constant 0 : i32
    %c0_i32_0 = arith.constant 0 : i32
    %c0_i32_1 = arith.constant 0 : i32
    return %c0_i32, %c0_i32_0 : i32, i32
  }
  func.func @transform_18(%arg0: i32) -> (i32, i32) {
    %c0_i32 = arith.constant 0 : i32
    %c0_i32_0 = arith.constant 0 : i32
    %c0_i32_1 = arith.constant 0 : i32
    return %c0_i32, %c0_i32_0 : i32, i32
  }
  func.func @transform_19(%arg0: i32) -> (i32, i32) {
    %c0_i32 = arith.constant 0 : i32
    %c0_i32_0 = arith.constant 0 : i32
    %c0_i32_1 = arith.constant 0 : i32
    return %c0_i32, %c0_i32_0 : i32, i32
  }
  func.func @transform_20(%arg0: i32) -> (i32, i32, i32) {
    %c0_i32 = arith.constant 0 : i32
    %c0_i32_0 = arith.constant 0 : i32
    %c0_i32_1 = arith.constant 0 : i32
    return %arg0, %c0_i32, %c0_i32_0 : i32, i32, i32
  }
}

</mosaic_0001>

<llo_original>
// kernel: text_encoder_tcn_forward.1
$region0: #{text_encoder_tcn_forward.1}
  #allocation0 [shape = 'u32[]', space=smem, size = 0x4, offset = 0x4, fixed_abs, tag = 'smem constant byte address 0x4 - core index']
  #allocation1 [shape = 'u32[144,128]{1,0:T(1,128)}', space=vmem, size = 0x12000, scoped, tag = 'internal scratch']
  %s0 = inlined_call_operand.hbm [shape: f32[2,16,768], index: 0, kind: input, shape index: {}]
  %s1 = inlined_call_operand.hbm [shape: bf16[768,384], index: 1, kind: input, shape index: {}]
  %s2 = inlined_call_operand.hbm [shape: f32[1,128], index: 2, kind: input, shape index: {}]
  %s3 = inlined_call_operand.hbm [shape: f32[1,128], index: 3, kind: input, shape index: {}]
  %s4 = inlined_call_operand.hbm [shape: bf16[256,128], index: 4, kind: input, shape index: {}]
  %s5 = inlined_call_operand.hbm [shape: f32[1,128], index: 5, kind: input, shape index: {}]
  %s6 = inlined_call_operand.hbm [shape: bf16[256,128], index: 6, kind: input, shape index: {}]
  %s7 = inlined_call_operand.hbm [shape: f32[1,128], index: 7, kind: input, shape index: {}]
  %s8 = inlined_call_operand.hbm [shape: bf16[256,128], index: 8, kind: input, shape index: {}]
  %s9 = inlined_call_operand.hbm [shape: f32[1,128], index: 9, kind: input, shape index: {}]
  %s10 = inlined_call_operand.hbm [shape: bf16[256,128], index: 10, kind: input, shape index: {}]
  %s11 = inlined_call_operand.hbm [shape: f32[1,128], index: 11, kind: input, shape index: {}]
  %s12 = inlined_call_operand.vmem [shape: bf16[256,128], index: 12, kind: input, shape index: {}]
  %s13 = inlined_call_operand.hbm [shape: f32[1,128], index: 13, kind: input, shape index: {}]
  %s14 = inlined_call_operand.hbm [shape: bf16[256,128], index: 14, kind: input, shape index: {}]
  %s15 = inlined_call_operand.hbm [shape: f32[1,128], index: 15, kind: input, shape index: {}]
  %s16 = inlined_call_operand.hbm [shape: bf16[256,128], index: 16, kind: input, shape index: {}]
  %s17 = inlined_call_operand.hbm [shape: f32[1,128], index: 17, kind: input, shape index: {}]
  %s18 = inlined_call_operand.vmem [shape: bf16[128,32], index: 18, kind: input, shape index: {}]
  %s19 = inlined_call_operand.hbm [shape: f32[1,32], index: 19, kind: input, shape index: {}]
  %s20 = inlined_call_operand.hbm [shape: f32[2,16,32], index: 20, kind: output, shape index: {}]
  %s21 = sld [smem:[#allocation0]]
  $region185: #{text_encoder_tcn_forward.1} parent=0
    _
  %s23 = ssub.s32 1, %s21
  %s24 = scalar_select 0, %s23, %s21
  $region1: #{text_encoder_tcn_forward.1} parent=0
    #allocation2 [shape = 'u8[98304]{0}', space=vmem, size = 0x18000, scoped, tag = 'input window, operand 0']
    #allocation3 [shape = 's32[2]{0}', space=sflag, size = 0x8, scoped, tag = 'scoped memory for text_encoder_tcn_forward.1']
    #allocation4 [shape = 's32[2]{0}', space=sflag, size = 0x8, scoped, tag = 'scoped memory for text_encoder_tcn_forward.1']
    #allocation5 [shape = 'u8[589824]{0}', space=vmem, size = 0x90000, scoped, tag = 'input window, operand 1, single buffered']
    #allocation6 [shape = 's32[1]{0}', space=sflag, size = 0x4, scoped, tag = 'scoped memory for text_encoder_tcn_forward.1']
    #allocation7 [shape = 'u8[512]{0}', space=vmem, size = 0x400, scoped, tag = 'input window, operand 2, single buffered']
    #allocation8 [shape = 'u8[512]{0}', space=vmem, size = 0x400, scoped, tag = 'input window, operand 3, single buffered']
    #allocation9 [shape = 's32[1]{0}', space=sflag, size = 0x4, scoped, tag = 'scoped memory for text_encoder_tcn_forward.1']
    #allocation10 [shape = 'u8[65536]{0}', space=vmem, size = 0x10000, scoped, tag = 'input window, operand 4, single buffered']
    #allocation11 [shape = 'u8[512]{0}', space=vmem, size = 0x400, scoped, tag = 'input window, operand 5, single buffered']
    #allocation12 [shape = 's32[1]{0}', space=sflag, size = 0x4, scoped, tag = 'scoped memory for text_encoder_tcn_forward.1']
    #allocation13 [shape = 'u8[65536]{0}', space=vmem, size = 0x10000, scoped, tag = 'input window, operand 6, single buffered']
    #allocation14 [shape = 'u8[512]{0}', space=vmem, size = 0x400, scoped, tag = 'input window, operand 7, single buffered']
    #allocation15 [shape = 's32[1]{0}', space=sflag, size = 0x4, scoped, tag = 'scoped memory for text_encoder_tcn_forward.1']
    #allocation16 [shape = 'u8[65536]{0}', space=vmem, size = 0x10000, scoped, tag = 'input window, operand 8, single buffered']
    #allocation17 [shape = 'u8[512]{0}', space=vmem, size = 0x400, scoped, tag = 'input window, operand 9, single buffered']
    #allocation18 [shape = 's32[1]{0}', space=sflag, size = 0x4, scoped, tag = 'scoped memory for text_encoder_tcn_forward.1']
    #allocation19 [shape = 'u8[65536]{0}', space=vmem, size = 0x10000, scoped, tag = 'input window, operand 10, single buffered']
    #allocation20 [shape = 'u8[512]{0}', space=vmem, size = 0x400, scoped, tag = 'input window, operand 11, single buffered']
    #allocation21 [shape = 's32[1]{0}', space=sflag, size = 0x4, scoped, tag = 'scoped memory for text_encoder_tcn_forward.1']
    #allocation22 [shape = 'u8[512]{0}', space=vmem, size = 0x400, scoped, tag = 'input window, operand 13, single buffered']
    #allocation23 [shape = 'u8[65536]{0}', space=vmem, size = 0x10000, scoped, tag = 'input window, operand 14, single buffered']
    #allocation24 [shape = 's32[1]{0}', space=sflag, size = 0x4, scoped, tag = 'scoped memory for text_encoder_tcn_forward.1']
    #allocation25 [shape = 'u8[512]{0}', space=vmem, size = 0x400, scoped, tag = 'input window, operand 15, single buffered']
    #allocation26 [shape = 'u8[65536]{0}', space=vmem, size = 0x10000, scoped, tag = 'input window, operand 16, single buffered']
    #allocation27 [shape = 's32[1]{0}', space=sflag, size = 0x4, scoped, tag = 'scoped memory for text_encoder_tcn_forward.1']
    #allocation28 [shape = 'u8[512]{0}', space=vmem, size = 0x400, scoped, tag = 'input window, operand 17, single buffered']
    #allocation29 [shape = 'u8[512]{0}', space=vmem, size = 0x400, scoped, tag = 'input window, operand 19, single buffered']
    #allocation30 [shape = 's32[1]{0}', space=sflag, size = 0x4, scoped, tag = 'scoped memory for text_encoder_tcn_forward.1']
    #allocation31 [shape = 'u8[16384]{0}', space=vmem, size = 0x4000, scoped, tag = 'output window, operand 0']
    %25 = vsyncpa [#allocation3], 0
    %s26 = scalar_lea.sflag [#allocation3], 1
    %27 = vsyncpa %s26, 0
    %28 = vsyncpa [#allocation6], 0
    %29 = vsyncpa [#allocation9], 0
    %30 = vsyncpa [#allocation12], 0
    %31 = vsyncpa [#allocation15], 0
    %32 = vsyncpa [#allocation18], 0
    %33 = vsyncpa [#allocation21], 0
    %34 = vsyncpa [#allocation24], 0
    %35 = vsyncpa [#allocation27], 0
    %36 = vsyncpa [#allocation30], 0
    %37 = vsyncpa [#allocation4], 0
    %s38 = scalar_lea.sflag [#allocation4], 1
    %39 = vsyncpa %s38, 0
    loop: start=0, step=1, limit=4
    $region2: #{text_encoder_tcn_forward.1} parent=1 // loop_pre_header
      _
    $region3: #{text_encoder_tcn_forward.1} parent=1 // loop_header
      %s41 = sphi 0, %s45
      %p42 = scmp.ge.s32.totalorder %s41, 4
      %s51 = sphi 0, %s53
      %s54 = sphi 0, %s51
      %s55 = sphi 0, %s54
      %s71 = sphi 0, %s55
      %s75 = sphi 0, %s75
      %s77 = sphi 0, %s75
      %s78 = sphi 0, %s77
      %s92 = sphi 0, %s78
      %s96 = sphi 0, %s96
      %s98 = sphi 0, %s96
      %s99 = sphi 0, %s98
      %s113 = sphi 0, %s99
      %s117 = sphi 0, %s117
      %s119 = sphi 0, %s117
      %s120 = sphi 0, %s119
      %s134 = sphi 0, %s120
      %s138 = sphi 0, %s138
      %s140 = sphi 0, %s138
      %s141 = sphi 0, %s140
      %s155 = sphi 0, %s141
      %s159 = sphi 0, %s159
      %s161 = sphi 0, %s159
      %s162 = sphi 0, %s161
      %s176 = sphi 0, %s162
      %s180 = sphi 0, %s180
      %s182 = sphi 0, %s180
      %s183 = sphi 0, %s182
      %s197 = sphi 0, %s183
      %s201 = sphi 0, %s201
      %s203 = sphi 0, %s201
      %s204 = sphi 0, %s203
      %s218 = sphi 0, %s204
      %s222 = sphi 0, %s222
      %s224 = sphi 0, %s222
      %s225 = sphi 0, %s224
      %s239 = sphi 0, %s225
      %s243 = sphi 0, %s243
      %s245 = sphi 0, %s243
      %s246 = sphi 0, %s245
      %s260 = sphi 0, %s246
      %s264 = sphi 0, %s264
      %s266 = sphi 0, %s264
      %s267 = sphi 0, %s266
      %s281 = sphi 0, %s267
      %s285 = sphi 0, %s285
      %s287 = sphi 0, %s285
      %s288 = sphi 0, %s287
      %s302 = sphi 0, %s288
      %s306 = sphi 0, %s306
      %s308 = sphi 0, %s306
      %s309 = sphi 0, %s308
      %s323 = sphi 0, %s309
      %s327 = sphi 0, %s327
      %s329 = sphi 0, %s327
      %s330 = sphi 0, %s329
      %s344 = sphi 0, %s330
      %s348 = sphi 0, %s348
      %s350 = sphi 0, %s348
      %s351 = sphi 0, %s350
      %s365 = sphi 0, %s351
      %s369 = sphi 0, %s369
      %s371 = sphi 0, %s369
      %s372 = sphi 0, %s371
      %s386 = sphi 0, %s372
      %s390 = sphi 0, %s390
      %s392 = sphi 0, %s390
      %s393 = sphi 0, %s392
      %s407 = sphi 0, %s393
      %s411 = sphi 0, %s411
      %s413 = sphi 0, %s411
      %s414 = sphi 0, %s413
      %s428 = sphi 0, %s414
      %s432 = sphi 0, %s432
      %s434 = sphi 0, %s432
      %s435 = sphi 0, %s434
      %s449 = sphi 0, %s435
      %s453 = sphi 0, %s453
      %s455 = sphi 0, %s453
      %s456 = sphi 0, %s455
      %s470 = sphi 0, %s456
      %s476 = sphi 0, %s478
      %s479 = sphi 0, %s476
      %s480 = sphi 0, %s479
      %s496 = sphi 0, %s480
    $region4: #{text_encoder_tcn_forward.1} parent=1 // loop_header_branch
      %44 = sbr.rel (%p42) target = $region8
    $region5: #{text_encoder_tcn_forward.1} parent=1 // loop_body
      %s46 = ssub.s32 %s41, 1
      %s47 = ssub.s32 %s41, 2
      %s48 = sadd.s32 %s41, 1
      %s49 = ssub.s32 %s41, %s48
      %p50 = scmp.eq.s32.totalorder %s49, 0
      %s52 = sadd.s32 %s51, 1
      %s53 = scalar_select %p50, %s51, %s52
      %p56 = pneg %p50
      %p57 = scmp.eq.s32.totalorder %s41, 1
      %p58 = por %p56, %p57
      %p59 = scmp.ne.s32.totalorder %s51, %s54
      %p60 = scmp.eq.s32.totalorder %s41, 0
      %p61 = por %p59, %p60
      %p62 = scmp.ne.s32.totalorder %s51, %s54
      %p63 = scmp.eq.s32.totalorder %s46, 1
      %p64 = por %p62, %p63
      %p65 = scmp.ne.s32.totalorder %s54, %s55
      %p66 = scmp.eq.s32.totalorder %s46, 0
      %p67 = por %p65, %p66
      %p68 = scmp.ne.s32.totalorder %s54, %s55
      %p69 = scmp.eq.s32.totalorder %s47, 1
      %p70 = por %p68, %p69
      %p72 = scmp.ne.s32.totalorder %s55, %s71
      %p73 = scmp.eq.s32.totalorder %s47, 0
      %p74 = por %p72, %p73
      %s76 = sadd.s32 %s75, 1
      %p79 = scmp.eq.s32.totalorder %s41, 1
      %p80 = scmp.ne.s32.totalorder %s75, %s77
      %p81 = scmp.eq.s32.totalorder %s41, 0
      %p82 = por %p80, %p81
      %p83 = scmp.ne.s32.totalorder %s75, %s77
      %p84 = scmp.eq.s32.totalorder %s46, 1
      %p85 = por %p83, %p84
      %p86 = scmp.ne.s32.totalorder %s77, %s78
      %p87 = scmp.eq.s32.totalorder %s46, 0
      %p88 = por %p86, %p87
      %p89 = scmp.ne.s32.totalorder %s77, %s78
      %p90 = scmp.eq.s32.totalorder %s47, 1
      %p91 = por %p89, %p90
      %p93 = scmp.ne.s32.totalorder %s78, %s92
      %p94 = scmp.eq.s32.totalorder %s47, 0
      %p95 = por %p93, %p94
      %s97 = sadd.s32 %s96, 1
      %p100 = scmp.eq.s32.totalorder %s41, 1
      %p101 = scmp.ne.s32.totalorder %s96, %s98
      %p102 = scmp.eq.s32.totalorder %s41, 0
      %p103 = por %p101, %p102
      %p104 = scmp.ne.s32.totalorder %s96, %s98
      %p105 = scmp.eq.s32.totalorder %s46, 1
      %p106 = por %p104, %p105
      %p107 = scmp.ne.s32.totalorder %s98, %s99
      %p108 = scmp.eq.s32.totalorder %s46, 0
      %p109 = por %p107, %p108
      %p110 = scmp.ne.s32.totalorder %s98, %s99
      %p111 = scmp.eq.s32.totalorder %s47, 1
      %p112 = por %p110, %p111
      %p114 = scmp.ne.s32.totalorder %s99, %s113
      %p115 = scmp.eq.s32.totalorder %s47, 0
      %p116 = por %p114, %p115
      %s118 = sadd.s32 %s117, 1
      %p121 = scmp.eq.s32.totalorder %s41, 1
      %p122 = scmp.ne.s32.totalorder %s117, %s119
      %p123 = scmp.eq.s32.totalorder %s41, 0
      %p124 = por %p122, %p123
      %p125 = scmp.ne.s32.totalorder %s117, %s119
      %p126 = scmp.eq.s32.totalorder %s46, 1
      %p127 = por %p125, %p126
      %p128 = scmp.ne.s32.totalorder %s119, %s120
      %p129 = scmp.eq.s32.totalorder %s46, 0
      %p130 = por %p128, %p129
      %p131 = scmp.ne.s32.totalorder %s119, %s120
      %p132 = scmp.eq.s32.totalorder %s47, 1
      %p133 = por %p131, %p132
      %p135 = scmp.ne.s32.totalorder %s120, %s134
      %p136 = scmp.eq.s32.totalorder %s47, 0
      %p137 = por %p135, %p136
      %s139 = sadd.s32 %s138, 1
      %p142 = scmp.eq.s32.totalorder %s41, 1
      %p143 = scmp.ne.s32.totalorder %s138, %s140
      %p144 = scmp.eq.s32.totalorder %s41, 0
      %p145 = por %p143, %p144
      %p146 = scmp.ne.s32.totalorder %s138, %s140
      %p147 = scmp.eq.s32.totalorder %s46, 1
      %p148 = por %p146, %p147
      %p149 = scmp.ne.s32.totalorder %s140, %s141
      %p150 = scmp.eq.s32.totalorder %s46, 0
      %p151 = por %p149, %p150
      %p152 = scmp.ne.s32.totalorder %s140, %s141
      %p153 = scmp.eq.s32.totalorder %s47, 1
      %p154 = por %p152, %p153
      %p156 = scmp.ne.s32.totalorder %s141, %s155
      %p157 = scmp.eq.s32.totalorder %s47, 0
      %p158 = por %p156, %p157
      %s160 = sadd.s32 %s159, 1
      %p163 = scmp.eq.s32.totalorder %s41, 1
      %p164 = scmp.ne.s32.totalorder %s159, %s161
      %p165 = scmp.eq.s32.totalorder %s41, 0
      %p166 = por %p164, %p165
      %p167 = scmp.ne.s32.totalorder %s159, %s161
      %p168 = scmp.eq.s32.totalorder %s46, 1
      %p169 = por %p167, %p168
      %p170 = scmp.ne.s32.totalorder %s161, %s162
      %p171 = scmp.eq.s32.totalorder %s46, 0
      %p172 = por %p170, %p171
      %p173 = scmp.ne.s32.totalorder %s161, %s162
      %p174 = scmp.eq.s32.totalorder %s47, 1
      %p175 = por %p173, %p174
      %p177 = scmp.ne.s32.totalorder %s162, %s176
      %p178 = scmp.eq.s32.totalorder %s47, 0
      %p179 = por %p177, %p178
      %s181 = sadd.s32 %s180, 1
      %p184 = scmp.eq.s32.totalorder %s41, 1
      %p185 = scmp.ne.s32.totalorder %s180, %s182
      %p186 = scmp.eq.s32.totalorder %s41, 0
      %p187 = por %p185, %p186
      %p188 = scmp.ne.s32.totalorder %s180, %s182
      %p189 = scmp.eq.s32.totalorder %s46, 1
      %p190 = por %p188, %p189
      %p191 = scmp.ne.s32.totalorder %s182, %s183
      %p192 = scmp.eq.s32.totalorder %s46, 0
      %p193 = por %p191, %p192
      %p194 = scmp.ne.s32.totalorder %s182, %s183
      %p195 = scmp.eq.s32.totalorder %s47, 1
      %p196 = por %p194, %p195
      %p198 = scmp.ne.s32.totalorder %s183, %s197
      %p199 = scmp.eq.s32.totalorder %s47, 0
      %p200 = por %p198, %p199
      %s202 = sadd.s32 %s201, 1
      %p205 = scmp.eq.s32.totalorder %s41, 1
      %p206 = scmp.ne.s32.totalorder %s201, %s203
      %p207 = scmp.eq.s32.totalorder %s41, 0
      %p208 = por %p206, %p207
      %p209 = scmp.ne.s32.totalorder %s201, %s203
      %p210 = scmp.eq.s32.totalorder %s46, 1
      %p211 = por %p209, %p210
      %p212 = scmp.ne.s32.totalorder %s203, %s204
      %p213 = scmp.eq.s32.totalorder %s46, 0
      %p214 = por %p212, %p213
      %p215 = scmp.ne.s32.totalorder %s203, %s204
      %p216 = scmp.eq.s32.totalorder %s47, 1
      %p217 = por %p215, %p216
      %p219 = scmp.ne.s32.totalorder %s204, %s218
      %p220 = scmp.eq.s32.totalorder %s47, 0
      %p221 = por %p219, %p220
      %s223 = sadd.s32 %s222, 1
      %p226 = scmp.eq.s32.totalorder %s41, 1
      %p227 = scmp.ne.s32.totalorder %s222, %s224
      %p228 = scmp.eq.s32.totalorder %s41, 0
      %p229 = por %p227, %p228
      %p230 = scmp.ne.s32.totalorder %s222, %s224
      %p231 = scmp.eq.s32.totalorder %s46, 1
      %p232 = por %p230, %p231
      %p233 = scmp.ne.s32.totalorder %s224, %s225
      %p234 = scmp.eq.s32.totalorder %s46, 0
      %p235 = por %p233, %p234
      %p236 = scmp.ne.s32.totalorder %s224, %s225
      %p237 = scmp.eq.s32.totalorder %s47, 1
      %p238 = por %p236, %p237
      %p240 = scmp.ne.s32.totalorder %s225, %s239
      %p241 = scmp.eq.s32.totalorder %s47, 0
      %p242 = por %p240, %p241
      %s244 = sadd.s32 %s243, 1
      %p247 = scmp.eq.s32.totalorder %s41, 1
      %p248 = scmp.ne.s32.totalorder %s243, %s245
      %p249 = scmp.eq.s32.totalorder %s41, 0
      %p250 = por %p248, %p249
      %p251 = scmp.ne.s32.totalorder %s243, %s245
      %p252 = scmp.eq.s32.totalorder %s46, 1
      %p253 = por %p251, %p252
      %p254 = scmp.ne.s32.totalorder %s245, %s246
      %p255 = scmp.eq.s32.totalorder %s46, 0
      %p256 = por %p254, %p255
      %p257 = scmp.ne.s32.totalorder %s245, %s246
      %p258 = scmp.eq.s32.totalorder %s47, 1
      %p259 = por %p257, %p258
      %p261 = scmp.ne.s32.totalorder %s246, %s260
      %p262 = scmp.eq.s32.totalorder %s47, 0
      %p263 = por %p261, %p262
      %s265 = sadd.s32 %s264, 1
      %p268 = scmp.eq.s32.totalorder %s41, 1
      %p269 = scmp.ne.s32.totalorder %s264, %s266
      %p270 = scmp.eq.s32.totalorder %s41, 0
      %p271 = por %p269, %p270
      %p272 = scmp.ne.s32.totalorder %s264, %s266
      %p273 = scmp.eq.s32.totalorder %s46, 1
      %p274 = por %p272, %p273
      %p275 = scmp.ne.s32.totalorder %s266, %s267
      %p276 = scmp.eq.s32.totalorder %s46, 0
      %p277 = por %p275, %p276
      %p278 = scmp.ne.s32.totalorder %s266, %s267
      %p279 = scmp.eq.s32.totalorder %s47, 1
      %p280 = por %p278, %p279
      %p282 = scmp.ne.s32.totalorder %s267, %s281
      %p283 = scmp.eq.s32.totalorder %s47, 0
      %p284 = por %p282, %p283
      %s286 = sadd.s32 %s285, 1
      %p289 = scmp.eq.s32.totalorder %s41, 1
      %p290 = scmp.ne.s32.totalorder %s285, %s287
      %p291 = scmp.eq.s32.totalorder %s41, 0
      %p292 = por %p290, %p291
      %p293 = scmp.ne.s32.totalorder %s285, %s287
      %p294 = scmp.eq.s32.totalorder %s46, 1
      %p295 = por %p293, %p294
      %p296 = scmp.ne.s32.totalorder %s287, %s288
      %p297 = scmp.eq.s32.totalorder %s46, 0
      %p298 = por %p296, %p297
      %p299 = scmp.ne.s32.totalorder %s287, %s288
      %p300 = scmp.eq.s32.totalorder %s47, 1
      %p301 = por %p299, %p300
      %p303 = scmp.ne.s32.totalorder %s288, %s302
      %p304 = scmp.eq.s32.totalorder %s47, 0
      %p305 = por %p303, %p304
      %s307 = sadd.s32 %s306, 1
      %p310 = scmp.eq.s32.totalorder %s41, 1
      %p311 = scmp.ne.s32.totalorder %s306, %s308
      %p312 = scmp.eq.s32.totalorder %s41, 0
      %p313 = por %p311, %p312
      %p314 = scmp.ne.s32.totalorder %s306, %s308
      %p315 = scmp.eq.s32.totalorder %s46, 1
      %p316 = por %p314, %p315
      %p317 = scmp.ne.s32.totalorder %s308, %s309
      %p318 = scmp.eq.s32.totalorder %s46, 0
      %p319 = por %p317, %p318
      %p320 = scmp.ne.s32.totalorder %s308, %s309
      %p321 = scmp.eq.s32.totalorder %s47, 1
      %p322 = por %p320, %p321
      %p324 = scmp.ne.s32.totalorder %s309, %s323
      %p325 = scmp.eq.s32.totalorder %s47, 0
      %p326 = por %p324, %p325
      %s328 = sadd.s32 %s327, 1
      %p331 = scmp.eq.s32.totalorder %s41, 1
      %p332 = scmp.ne.s32.totalorder %s327, %s329
      %p333 = scmp.eq.s32.totalorder %s41, 0
      %p334 = por %p332, %p333
      %p335 = scmp.ne.s32.totalorder %s327, %s329
      %p336 = scmp.eq.s32.totalorder %s46, 1
      %p337 = por %p335, %p336
      %p338 = scmp.ne.s32.totalorder %s329, %s330
      %p339 = scmp.eq.s32.totalorder %s46, 0
      %p340 = por %p338, %p339
      %p341 = scmp.ne.s32.totalorder %s329, %s330
      %p342 = scmp.eq.s32.totalorder %s47, 1
      %p343 = por %p341, %p342
      %p345 = scmp.ne.s32.totalorder %s330, %s344
      %p346 = scmp.eq.s32.totalorder %s47, 0
      %p347 = por %p345, %p346
      %s349 = sadd.s32 %s348, 1
      %p352 = scmp.eq.s32.totalorder %s41, 1
      %p353 = scmp.ne.s32.totalorder %s348, %s350
      %p354 = scmp.eq.s32.totalorder %s41, 0
      %p355 = por %p353, %p354
      %p356 = scmp.ne.s32.totalorder %s348, %s350
      %p357 = scmp.eq.s32.totalorder %s46, 1
      %p358 = por %p356, %p357
      %p359 = scmp.ne.s32.totalorder %s350, %s351
      %p360 = scmp.eq.s32.totalorder %s46, 0
      %p361 = por %p359, %p360
      %p362 = scmp.ne.s32.totalorder %s350, %s351
      %p363 = scmp.eq.s32.totalorder %s47, 1
      %p364 = por %p362, %p363
      %p366 = scmp.ne.s32.totalorder %s351, %s365
      %p367 = scmp.eq.s32.totalorder %s47, 0
      %p368 = por %p366, %p367
      %s370 = sadd.s32 %s369, 1
      %p373 = scmp.eq.s32.totalorder %s41, 1
      %p374 = scmp.ne.s32.totalorder %s369, %s371
      %p375 = scmp.eq.s32.totalorder %s41, 0
      %p376 = por %p374, %p375
      %p377 = scmp.ne.s32.totalorder %s369, %s371
      %p378 = scmp.eq.s32.totalorder %s46, 1
      %p379 = por %p377, %p378
      %p380 = scmp.ne.s32.totalorder %s371, %s372
      %p381 = scmp.eq.s32.totalorder %s46, 0
      %p382 = por %p380, %p381
      %p383 = scmp.ne.s32.totalorder %s371, %s372
      %p384 = scmp.eq.s32.totalorder %s47, 1
      %p385 = por %p383, %p384
      %p387 = scmp.ne.s32.totalorder %s372, %s386
      %p388 = scmp.eq.s32.totalorder %s47, 0
      %p389 = por %p387, %p388
      %s391 = sadd.s32 %s390, 1
      %p394 = scmp.eq.s32.totalorder %s41, 1
      %p395 = scmp.ne.s32.totalorder %s390, %s392
      %p396 = scmp.eq.s32.totalorder %s41, 0
      %p397 = por %p395, %p396
      %p398 = scmp.ne.s32.totalorder %s390, %s392
      %p399 = scmp.eq.s32.totalorder %s46, 1
      %p400 = por %p398, %p399
      %p401 = scmp.ne.s32.totalorder %s392, %s393
      %p402 = scmp.eq.s32.totalorder %s46, 0
      %p403 = por %p401, %p402
      %p404 = scmp.ne.s32.totalorder %s392, %s393
      %p405 = scmp.eq.s32.totalorder %s47, 1
      %p406 = por %p404, %p405
      %p408 = scmp.ne.s32.totalorder %s393, %s407
      %p409 = scmp.eq.s32.totalorder %s47, 0
      %p410 = por %p408, %p409
      %s412 = sadd.s32 %s411, 1
      %p415 = scmp.eq.s32.totalorder %s41, 1
      %p416 = scmp.ne.s32.totalorder %s411, %s413
      %p417 = scmp.eq.s32.totalorder %s41, 0
      %p418 = por %p416, %p417
      %p419 = scmp.ne.s32.totalorder %s411, %s413
      %p420 = scmp.eq.s32.totalorder %s46, 1
      %p421 = por %p419, %p420
      %p422 = scmp.ne.s32.totalorder %s413, %s414
      %p423 = scmp.eq.s32.totalorder %s46, 0
      %p424 = por %p422, %p423
      %p425 = scmp.ne.s32.totalorder %s413, %s414
      %p426 = scmp.eq.s32.totalorder %s47, 1
      %p427 = por %p425, %p426
      %p429 = scmp.ne.s32.totalorder %s414, %s428
      %p430 = scmp.eq.s32.totalorder %s47, 0
      %p431 = por %p429, %p430
      %s433 = sadd.s32 %s432, 1
      %p436 = scmp.eq.s32.totalorder %s41, 1
      %p437 = scmp.ne.s32.totalorder %s432, %s434
      %p438 = scmp.eq.s32.totalorder %s41, 0
      %p439 = por %p437, %p438
      %p440 = scmp.ne.s32.totalorder %s432, %s434
      %p441 = scmp.eq.s32.totalorder %s46, 1
      %p442 = por %p440, %p441
      %p443 = scmp.ne.s32.totalorder %s434, %s435
      %p444 = scmp.eq.s32.totalorder %s46, 0
      %p445 = por %p443, %p444
      %p446 = scmp.ne.s32.totalorder %s434, %s435
      %p447 = scmp.eq.s32.totalorder %s47, 1
      %p448 = por %p446, %p447
      %p450 = scmp.ne.s32.totalorder %s435, %s449
      %p451 = scmp.eq.s32.totalorder %s47, 0
      %p452 = por %p450, %p451
      %s454 = sadd.s32 %s453, 1
      %p457 = scmp.eq.s32.totalorder %s41, 1
      %p458 = scmp.ne.s32.totalorder %s453, %s455
      %p459 = scmp.eq.s32.totalorder %s41, 0
      %p460 = por %p458, %p459
      %p461 = scmp.ne.s32.totalorder %s453, %s455
      %p462 = scmp.eq.s32.totalorder %s46, 1
      %p463 = por %p461, %p462
      %p464 = scmp.ne.s32.totalorder %s455, %s456
      %p465 = scmp.eq.s32.totalorder %s46, 0
      %p466 = por %p464, %p465
      %p467 = scmp.ne.s32.totalorder %s455, %s456
      %p468 = scmp.eq.s32.totalorder %s47, 1
      %p469 = por %p467, %p468
      %p471 = scmp.ne.s32.totalorder %s456, %s470
      %p472 = scmp.eq.s32.totalorder %s47, 0
      %p473 = por %p471, %p472
      %s474 = ssub.s32 %s41, %s48
      %p475 = scmp.eq.s32.totalorder %s474, 0
      %s477 = sadd.s32 %s476, 1
      %s478 = scalar_select %p475, %s476, %s477
      %p481 = pneg %p475
      %p482 = scmp.eq.s32.totalorder %s41, 1
      %p483 = por %p481, %p482
      %p484 = scmp.ne.s32.totalorder %s476, %s479
      %p485 = scmp.eq.s32.totalorder %s41, 0
      %p486 = por %p484, %p485
      %p487 = scmp.ne.s32.totalorder %s476, %s479
      %p488 = scmp.eq.s32.totalorder %s46, 1
      %p489 = por %p487, %p488
      %p490 = scmp.ne.s32.totalorder %s479, %s480
      %p491 = scmp.eq.s32.totalorder %s46, 0
      %p492 = por %p490, %p491
      %p493 = scmp.ne.s32.totalorder %s479, %s480
      %p494 = scmp.eq.s32.totalorder %s47, 1
      %p495 = por %p493, %p494
      %p497 = scmp.ne.s32.totalorder %s480, %s496
      %p498 = scmp.eq.s32.totalorder %s47, 0
      %p499 = por %p497, %p498
      %p500 = scmp.le.s32.totalorder 1, %s41
      %p501 = scmp.lt.s32.totalorder %s41, 3
      %p502 = pnand %p500, %p501
      %p503 = pneg %p502
      // Predicated region
      $region9: #{text_encoder_tcn_forward.1} parent=5 // pred_check
        _
      $region10: #{text_encoder_tcn_forward.1} parent=5 // pred_check_branch
        %505 = sbr.rel (%p502) target = $region12
      $region11: #{text_encoder_tcn_forward.1} parent=5 // pred_region
        %s506 = ssub.s32 %s41, 1
        // Predicated region
        $region13: #{text_encoder_tcn_forward.1} parent=11 // pred_check
          %p507 = pneg %p88
        $region14: #{text_encoder_tcn_forward.1} parent=11 // pred_check_branch
          %509 = sbr.rel (%p507) target = $region16
        $region15: #{text_encoder_tcn_forward.1} parent=11 // pred_region
          %s511 = ssub.s32 18432, 18432
          %512 = vsyncadd [#allocation6], %s511
          %s513 = sshll.u32 [#allocation5], 4
          %s514 = int_to_ptr.vmem [resolvable:$true] %s513
          %519 = dma.hbm_to_vmem [thread:$0]  %s1, 18432, %s514, [#allocation6], 192, 192, 12
        $region16: #{text_encoder_tcn_forward.1} parent=11 // pred_fallthru
          _
        // Predicated region
        $region17: #{text_encoder_tcn_forward.1} parent=11 // pred_check
          %p520 = pneg %p109
        $region18: #{text_encoder_tcn_forward.1} parent=11 // pred_check_branch
          %522 = sbr.rel (%p520) target = $region20
        $region19: #{text_encoder_tcn_forward.1} parent=11 // pred_region
          %s524 = ssub.s32 16, 16
          %525 = vsyncadd [#allocation6], %s524
          %s527 = sshll.u32 [#allocation7], 4
          %s528 = int_to_ptr.vmem [resolvable:$true] %s527
          %530 = dma.hbm_to_vmem [thread:$0]  %s2, 16, %s528, [#allocation6]
        $region20: #{text_encoder_tcn_forward.1} parent=11 // pred_fallthru
          _
        // Predicated region
        $region21: #{text_encoder_tcn_forward.1} parent=11 // pred_check
          %p531 = pneg %p130
        $region22: #{text_encoder_tcn_forward.1} parent=11 // pred_check_branch
          %533 = sbr.rel (%p531) target = $region24
        $region23: #{text_encoder_tcn_forward.1} parent=11 // pred_region
          %s535 = ssub.s32 16, 16
          %536 = vsyncadd [#allocation9], %s535
          %s538 = sshll.u32 [#allocation8], 4
          %s539 = int_to_ptr.vmem [resolvable:$true] %s538
          %541 = dma.hbm_to_vmem [thread:$0]  %s3, 16, %s539, [#allocation9]
        $region24: #{text_encoder_tcn_forward.1} parent=11 // pred_fallthru
          _
        // Predicated region
        $region25: #{text_encoder_tcn_forward.1} parent=11 // pred_check
          %p542 = pneg %p151
        $region26: #{text_encoder_tcn_forward.1} parent=11 // pred_check_branch
          %544 = sbr.rel (%p542) target = $region28
        $region27: #{text_encoder_tcn_forward.1} parent=11 // pred_region
          %s546 = ssub.s32 2048, 2048
          %547 = vsyncadd [#allocation9], %s546
          %s548 = sshll.u32 [#allocation10], 4
          %s549 = int_to_ptr.vmem [resolvable:$true] %s548
          %554 = dma.hbm_to_vmem [thread:$0]  %s4, 2048, %s549, [#allocation9], 64, 64, 4
        $region28: #{text_encoder_tcn_forward.1} parent=11 // pred_fallthru
          _
        // Predicated region
        $region29: #{text_encoder_tcn_forward.1} parent=11 // pred_check
          %p555 = pneg %p172
        $region30: #{text_encoder_tcn_forward.1} parent=11 // pred_check_branch
          %557 = sbr.rel (%p555) target = $region32
        $region31: #{text_encoder_tcn_forward.1} parent=11 // pred_region
          %s559 = ssub.s32 16, 16
          %560 = vsyncadd [#allocation12], %s559
          %s562 = sshll.u32 [#allocation11], 4
          %s563 = int_to_ptr.vmem [resolvable:$true] %s562
          %565 = dma.hbm_to_vmem [thread:$0]  %s5, 16, %s563, [#allocation12]
        $region32: #{text_encoder_tcn_forward.1} parent=11 // pred_fallthru
          _
        // Predicated region
        $region33: #{text_encoder_tcn_forward.1} parent=11 // pred_check
          %p566 = pneg %p193
        $region34: #{text_encoder_tcn_forward.1} parent=11 // pred_check_branch
          %568 = sbr.rel (%p566) target = $region36
        $region35: #{text_encoder_tcn_forward.1} parent=11 // pred_region
          %s570 = ssub.s32 2048, 2048
          %571 = vsyncadd [#allocation12], %s570
          %s572 = sshll.u32 [#allocation13], 4
          %s573 = int_to_ptr.vmem [resolvable:$true] %s572
          %578 = dma.hbm_to_vmem [thread:$0]  %s6, 2048, %s573, [#allocation12], 64, 64, 4
        $region36: #{text_encoder_tcn_forward.1} parent=11 // pred_fallthru
          _
        // Predicated region
        $region37: #{text_encoder_tcn_forward.1} parent=11 // pred_check
          %p579 = pneg %p214
        $region38: #{text_encoder_tcn_forward.1} parent=11 // pred_check_branch
          %581 = sbr.rel (%p579) target = $region40
        $region39: #{text_encoder_tcn_forward.1} parent=11 // pred_region
          %s583 = ssub.s32 16, 16
          %584 = vsyncadd [#allocation15], %s583
          %s586 = sshll.u32 [#allocation14], 4
          %s587 = int_to_ptr.vmem [resolvable:$true] %s586
          %589 = dma.hbm_to_vmem [thread:$0]  %s7, 16, %s587, [#allocation15]
        $region40: #{text_encoder_tcn_forward.1} parent=11 // pred_fallthru
          _
        // Predicated region
        $region41: #{text_encoder_tcn_forward.1} parent=11 // pred_check
          %p590 = pneg %p235
        $region42: #{text_encoder_tcn_forward.1} parent=11 // pred_check_branch
          %592 = sbr.rel (%p590) target = $region44
        $region43: #{text_encoder_tcn_forward.1} parent=11 // pred_region
          %s594 = ssub.s32 2048, 2048
          %595 = vsyncadd [#allocation15], %s594
          %s596 = sshll.u32 [#allocation16], 4
          %s597 = int_to_ptr.vmem [resolvable:$true] %s596
          %602 = dma.hbm_to_vmem [thread:$0]  %s8, 2048, %s597, [#allocation15], 64, 64, 4
        $region44: #{text_encoder_tcn_forward.1} parent=11 // pred_fallthru
          _
        // Predicated region
        $region45: #{text_encoder_tcn_forward.1} parent=11 // pred_check
          %p603 = pneg %p256
        $region46: #{text_encoder_tcn_forward.1} parent=11 // pred_check_branch
          %605 = sbr.rel (%p603) target = $region48
        $region47: #{text_encoder_tcn_forward.1} parent=11 // pred_region
          %s607 = ssub.s32 16, 16
          %608 = vsyncadd [#allocation18], %s607
          %s610 = sshll.u32 [#allocation17], 4
          %s611 = int_to_ptr.vmem [resolvable:$true] %s610
          %613 = dma.hbm_to_vmem [thread:$0]  %s9, 16, %s611, [#allocation18]
        $region48: #{text_encoder_tcn_forward.1} parent=11 // pred_fallthru
          _
        // Predicated region
        $region49: #{text_encoder_tcn_forward.1} parent=11 // pred_check
          %p614 = pneg %p277
        $region50: #{text_encoder_tcn_forward.1} parent=11 // pred_check_branch
          %616 = sbr.rel (%p614) target = $region52
        $region51: #{text_encoder_tcn_forward.1} parent=11 // pred_region
          %s618 = ssub.s32 2048, 2048
          %619 = vsyncadd [#allocation18], %s618
          %s620 = sshll.u32 [#allocation19], 4
          %s621 = int_to_ptr.vmem [resolvable:$true] %s620
          %626 = dma.hbm_to_vmem [thread:$0]  %s10, 2048, %s621, [#allocation18], 64, 64, 4
        $region52: #{text_encoder_tcn_forward.1} parent=11 // pred_fallthru
          _
        // Predicated region
        $region53: #{text_encoder_tcn_forward.1} parent=11 // pred_check
          %p627 = pneg %p298
        $region54: #{text_encoder_tcn_forward.1} parent=11 // pred_check_branch
          %629 = sbr.rel (%p627) target = $region56
        $region55: #{text_encoder_tcn_forward.1} parent=11 // pred_region
          %s631 = ssub.s32 16, 16
          %632 = vsyncadd [#allocation21], %s631
          %s634 = sshll.u32 [#allocation20], 4
          %s635 = int_to_ptr.vmem [resolvable:$true] %s634
          %637 = dma.hbm_to_vmem [thread:$0]  %s11, 16, %s635, [#allocation21]
        $region56: #{text_encoder_tcn_forward.1} parent=11 // pred_fallthru
          _
        // Predicated region
        $region57: #{text_encoder_tcn_forward.1} parent=11 // pred_check
          %p638 = pneg %p319
        $region58: #{text_encoder_tcn_forward.1} parent=11 // pred_check_branch
          %640 = sbr.rel (%p638) target = $region60
        $region59: #{text_encoder_tcn_forward.1} parent=11 // pred_region
          _
        $region60: #{text_encoder_tcn_forward.1} parent=11 // pred_fallthru
          _
        // Predicated region
        $region61: #{text_encoder_tcn_forward.1} parent=11 // pred_check
          %p641 = pneg %p340
        $region62: #{text_encoder_tcn_forward.1} parent=11 // pred_check_branch
          %643 = sbr.rel (%p641) target = $region64
        $region63: #{text_encoder_tcn_forward.1} parent=11 // pred_region
          %s645 = ssub.s32 16, 16
          %646 = vsyncadd [#allocation21], %s645
          %s648 = sshll.u32 [#allocation22], 4
          %s649 = int_to_ptr.vmem [resolvable:$true] %s648
          %651 = dma.hbm_to_vmem [thread:$0]  %s13, 16, %s649, [#allocation21]
        $region64: #{text_encoder_tcn_forward.1} parent=11 // pred_fallthru
          _
        // Predicated region
        $region65: #{text_encoder_tcn_forward.1} parent=11 // pred_check
          %p652 = pneg %p361
        $region66: #{text_encoder_tcn_forward.1} parent=11 // pred_check_branch
          %654 = sbr.rel (%p652) target = $region68
        $region67: #{text_encoder_tcn_forward.1} parent=11 // pred_region
          %s656 = ssub.s32 2048, 2048
          %657 = vsyncadd [#allocation24], %s656
          %s658 = sshll.u32 [#allocation23], 4
          %s659 = int_to_ptr.vmem [resolvable:$true] %s658
          %664 = dma.hbm_to_vmem [thread:$0]  %s14, 2048, %s659, [#allocation24], 64, 64, 4
        $region68: #{text_encoder_tcn_forward.1} parent=11 // pred_fallthru
          _
        // Predicated region
        $region69: #{text_encoder_tcn_forward.1} parent=11 // pred_check
          %p665 = pneg %p382
        $region70: #{text_encoder_tcn_forward.1} parent=11 // pred_check_branch
          %667 = sbr.rel (%p665) target = $region72
        $region71: #{text_encoder_tcn_forward.1} parent=11 // pred_region
          %s669 = ssub.s32 16, 16
          %670 = vsyncadd [#allocation24], %s669
          %s672 = sshll.u32 [#allocation25], 4
          %s673 = int_to_ptr.vmem [resolvable:$true] %s672
          %675 = dma.hbm_to_vmem [thread:$0]  %s15, 16, %s673, [#allocation24]
        $region72: #{text_encoder_tcn_forward.1} parent=11 // pred_fallthru
          _
        // Predicated region
        $region73: #{text_encoder_tcn_forward.1} parent=11 // pred_check
          %p676 = pneg %p403
        $region74: #{text_encoder_tcn_forward.1} parent=11 // pred_check_branch
          %678 = sbr.rel (%p676) target = $region76
        $region75: #{text_encoder_tcn_forward.1} parent=11 // pred_region
          %s680 = ssub.s32 2048, 2048
          %681 = vsyncadd [#allocation27], %s680
          %s682 = sshll.u32 [#allocation26], 4
          %s683 = int_to_ptr.vmem [resolvable:$true] %s682
          %688 = dma.hbm_to_vmem [thread:$0]  %s16, 2048, %s683, [#allocation27], 64, 64, 4
        $region76: #{text_encoder_tcn_forward.1} parent=11 // pred_fallthru
          _
        // Predicated region
        $region77: #{text_encoder_tcn_forward.1} parent=11 // pred_check
          %p689 = pneg %p424
        $region78: #{text_encoder_tcn_forward.1} parent=11 // pred_check_branch
          %691 = sbr.rel (%p689) target = $region80
        $region79: #{text_encoder_tcn_forward.1} parent=11 // pred_region
          %s693 = ssub.s32 16, 16
          %694 = vsyncadd [#allocation27], %s693
          %s696 = sshll.u32 [#allocation28], 4
          %s697 = int_to_ptr.vmem [resolvable:$true] %s696
          %699 = dma.hbm_to_vmem [thread:$0]  %s17, 16, %s697, [#allocation27]
        $region80: #{text_encoder_tcn_forward.1} parent=11 // pred_fallthru
          _
        // Predicated region
        $region81: #{text_encoder_tcn_forward.1} parent=11 // pred_check
          %p700 = pneg %p445
        $region82: #{text_encoder_tcn_forward.1} parent=11 // pred_check_branch
          %702 = sbr.rel (%p700) target = $region84
        $region83: #{text_encoder_tcn_forward.1} parent=11 // pred_region
          _
        $region84: #{text_encoder_tcn_forward.1} parent=11 // pred_fallthru
          _
        // Predicated region
        $region85: #{text_encoder_tcn_forward.1} parent=11 // pred_check
          %p703 = pneg %p466
        $region86: #{text_encoder_tcn_forward.1} parent=11 // pred_check_branch
          %705 = sbr.rel (%p703) target = $region88
        $region87: #{text_encoder_tcn_forward.1} parent=11 // pred_region
          %s707 = ssub.s32 16, 16
          %708 = vsyncadd [#allocation30], %s707
          %s710 = sshll.u32 [#allocation29], 4
          %s711 = int_to_ptr.vmem [resolvable:$true] %s710
          %713 = dma.hbm_to_vmem [thread:$0]  %s19, 16, %s711, [#allocation30]
        $region88: #{text_encoder_tcn_forward.1} parent=11 // pred_fallthru
          _
      $region12: #{text_encoder_tcn_forward.1} parent=5 // pred_fallthru
        _
      %p714 = scmp.lt.s32.totalorder %s41, 2
      // Predicated region
      $region89: #{text_encoder_tcn_forward.1} parent=5 // pred_check
        %p715 = pneg %p714
      $region90: #{text_encoder_tcn_forward.1} parent=5 // pred_check_branch
        %717 = sbr.rel (%p715) target = $region92
      $region91: #{text_encoder_tcn_forward.1} parent=5 // pred_region
        // Predicated region
        $region93: #{text_encoder_tcn_forward.1} parent=91 // pred_check
          %p718 = pneg %p61
        $region94: #{text_encoder_tcn_forward.1} parent=91 // pred_check_branch
          %720 = sbr.rel (%p718) target = $region96
        $region95: #{text_encoder_tcn_forward.1} parent=91 // pred_region
          %s721 = sand.u32 %s51, 1
          %s722 = scalar_lea.sflag [#allocation3], %s721
          %s723 = sand.u32 %s51, 1
          %s724 = smul.addr %s723, 96
          %s725 = scalar_lea.vmem [#allocation2], %s724
          %s727 = ssub.s32 1536, 1536
          %728 = vsyncadd %s722, %s727
          %s729 = smul.addr %s41, 12
          %s730 = smul.addr %s729, 128
          %s731 = scalar_lea.hbm %s0, %s730
          %s732 = sshll.u32 %s725, 4
          %s733 = int_to_ptr.vmem [resolvable:$true] %s732
          %738 = dma.hbm_to_vmem [thread:$0]  %s731, 1536, %s733, %s722, 768, 768, 48
        $region96: #{text_encoder_tcn_forward.1} parent=91 // pred_fallthru
          _
      $region92: #{text_encoder_tcn_forward.1} parent=5 // pred_fallthru
        _
      %p739 = scmp.le.s32.totalorder 1, %s41
      %p740 = scmp.lt.s32.totalorder %s41, 3
      %p741 = pnand %p739, %p740
      %p742 = pneg %p741
      // Predicated region
      $region97: #{text_encoder_tcn_forward.1} parent=5 // pred_check
        _
      $region98: #{text_encoder_tcn_forward.1} parent=5 // pred_check_branch
        %744 = sbr.rel (%p741) target = $region100
      $region99: #{text_encoder_tcn_forward.1} parent=5 // pred_region
        %s745 = ssub.s32 %s41, 1
        %s746 = sand.u32 %s54, 1
        %s747 = scalar_lea.sflag [#allocation3], %s746
        %s748 = sand.u32 %s54, 1
        %s749 = smul.addr %s748, 96
        %s750 = scalar_lea.vmem [#allocation2], %s749
        // Predicated region
        $region101: #{text_encoder_tcn_forward.1} parent=99 // pred_check
          %p751 = pneg %p67
        $region102: #{text_encoder_tcn_forward.1} parent=99 // pred_check_branch
          %753 = sbr.rel (%p751) target = $region104
        $region103: #{text_encoder_tcn_forward.1} parent=99 // pred_region
          %754 = dma.done %s747, 1536
        $region104: #{text_encoder_tcn_forward.1} parent=99 // pred_fallthru
          _
        // Predicated region
        $region105: #{text_encoder_tcn_forward.1} parent=99 // pred_check
          %p755 = pneg %p88
        $region106: #{text_encoder_tcn_forward.1} parent=99 // pred_check_branch
          %757 = sbr.rel (%p755) target = $region108
        $region107: #{text_encoder_tcn_forward.1} parent=99 // pred_region
          %758 = dma.done [#allocation6], 18432
        $region108: #{text_encoder_tcn_forward.1} parent=99 // pred_fallthru
          _
        // Predicated region
        $region109: #{text_encoder_tcn_forward.1} parent=99 // pred_check
          %p759 = pneg %p109
        $region110: #{text_encoder_tcn_forward.1} parent=99 // pred_check_branch
          %761 = sbr.rel (%p759) target = $region112
        $region111: #{text_encoder_tcn_forward.1} parent=99 // pred_region
          %762 = dma.done [#allocation6], 16
        $region112: #{text_encoder_tcn_forward.1} parent=99 // pred_fallthru
          _
        // Predicated region
        $region113: #{text_encoder_tcn_forward.1} parent=99 // pred_check
          %p763 = pneg %p130
        $region114: #{text_encoder_tcn_forward.1} parent=99 // pred_check_branch
          %765 = sbr.rel (%p763) target = $region116
        $region115: #{text_encoder_tcn_forward.1} parent=99 // pred_region
          %766 = dma.done [#allocation9], 16
        $region116: #{text_encoder_tcn_forward.1} parent=99 // pred_fallthru
          _
        // Predicated region
        $region117: #{text_encoder_tcn_forward.1} parent=99 // pred_check
          %p767 = pneg %p151
        $region118: #{text_encoder_tcn_forward.1} parent=99 // pred_check_branch
          %769 = sbr.rel (%p767) target = $region120
        $region119: #{text_encoder_tcn_forward.1} parent=99 // pred_region
          %770 = dma.done [#allocation9], 2048
        $region120: #{text_encoder_tcn_forward.1} parent=99 // pred_fallthru
          _
        // Predicated region
        $region121: #{text_encoder_tcn_forward.1} parent=99 // pred_check
          %p771 = pneg %p172
        $region122: #{text_encoder_tcn_forward.1} parent=99 // pred_check_branch
          %773 = sbr.rel (%p771) target = $region124
        $region123: #{text_encoder_tcn_forward.1} parent=99 // pred_region
          %774 = dma.done [#allocation12], 16
        $region124: #{text_encoder_tcn_forward.1} parent=99 // pred_fallthru
          _
        // Predicated region
        $region125: #{text_encoder_tcn_forward.1} parent=99 // pred_check
          %p775 = pneg %p193
        $region126: #{text_encoder_tcn_forward.1} parent=99 // pred_check_branch
          %777 = sbr.rel (%p775) target = $region128
        $region127: #{text_encoder_tcn_forward.1} parent=99 // pred_region
          %778 = dma.done [#allocation12], 2048
        $region128: #{text_encoder_tcn_forward.1} parent=99 // pred_fallthru
          _
        // Predicated region
        $region129: #{text_encoder_tcn_forward.1} parent=99 // pred_check
          %p779 = pneg %p214
        $region130: #{text_encoder_tcn_forward.1} parent=99 // pred_check_branch
          %781 = sbr.rel (%p779) target = $region132
        $region131: #{text_encoder_tcn_forward.1} parent=99 // pred_region
          %782 = dma.done [#allocation15], 16
        $region132: #{text_encoder_tcn_forward.1} parent=99 // pred_fallthru
          _
        // Predicated region
        $region133: #{text_encoder_tcn_forward.1} parent=99 // pred_check
          %p783 = pneg %p235
        $region134: #{text_encoder_tcn_forward.1} parent=99 // pred_check_branch
          %785 = sbr.rel (%p783) target = $region136
        $region135: #{text_encoder_tcn_forward.1} parent=99 // pred_region
          %786 = dma.done [#allocation15], 2048
        $region136: #{text_encoder_tcn_forward.1} parent=99 // pred_fallthru
          _
        // Predicated region
        $region137: #{text_encoder_tcn_forward.1} parent=99 // pred_check
          %p787 = pneg %p256
        $region138: #{text_encoder_tcn_forward.1} parent=99 // pred_check_branch
          %789 = sbr.rel (%p787) target = $region140
        $region139: #{text_encoder_tcn_forward.1} parent=99 // pred_region
          %790 = dma.done [#allocation18], 16
        $region140: #{text_encoder_tcn_forward.1} parent=99 // pred_fallthru
          _
        // Predicated region
        $region141: #{text_encoder_tcn_forward.1} parent=99 // pred_check
          %p791 = pneg %p277
        $region142: #{text_encoder_tcn_forward.1} parent=99 // pred_check_branch
          %793 = sbr.rel (%p791) target = $region144
        $region143: #{text_encoder_tcn_forward.1} parent=99 // pred_region
          %794 = dma.done [#allocation18], 2048
        $region144: #{text_encoder_tcn_forward.1} parent=99 // pred_fallthru
          _
        // Predicated region
        $region145: #{text_encoder_tcn_forward.1} parent=99 // pred_check
          %p795 = pneg %p298
        $region146: #{text_encoder_tcn_forward.1} parent=99 // pred_check_branch
          %797 = sbr.rel (%p795) target = $region148
        $region147: #{text_encoder_tcn_forward.1} parent=99 // pred_region
          %798 = dma.done [#allocation21], 16
        $region148: #{text_encoder_tcn_forward.1} parent=99 // pred_fallthru
          _
        // Predicated region
        $region149: #{text_encoder_tcn_forward.1} parent=99 // pred_check
          %p799 = pneg %p340
        $region150: #{text_encoder_tcn_forward.1} parent=99 // pred_check_branch
          %801 = sbr.rel (%p799) target = $region152
        $region151: #{text_encoder_tcn_forward.1} parent=99 // pred_region
          %802 = dma.done [#allocation21], 16
        $region152: #{text_encoder_tcn_forward.1} parent=99 // pred_fallthru
          _
        // Predicated region
        $region153: #{text_encoder_tcn_forward.1} parent=99 // pred_check
          %p803 = pneg %p361
        $region154: #{text_encoder_tcn_forward.1} parent=99 // pred_check_branch
          %805 = sbr.rel (%p803) target = $region156
        $region155: #{text_encoder_tcn_forward.1} parent=99 // pred_region
          %806 = dma.done [#allocation24], 2048
        $region156: #{text_encoder_tcn_forward.1} parent=99 // pred_fallthru
          _
        // Predicated region
        $region157: #{text_encoder_tcn_forward.1} parent=99 // pred_check
          %p807 = pneg %p382
        $region158: #{text_encoder_tcn_forward.1} parent=99 // pred_check_branch
          %809 = sbr.rel (%p807) target = $region160
        $region159: #{text_encoder_tcn_forward.1} parent=99 // pred_region
          %810 = dma.done [#allocation24], 16
        $region160: #{text_encoder_tcn_forward.1} parent=99 // pred_fallthru
          _
        // Predicated region
        $region161: #{text_encoder_tcn_forward.1} parent=99 // pred_check
          %p811 = pneg %p403
        $region162: #{text_encoder_tcn_forward.1} parent=99 // pred_check_branch
          %813 = sbr.rel (%p811) target = $region164
        $region163: #{text_encoder_tcn_forward.1} parent=99 // pred_region
          %814 = dma.done [#allocation27], 2048
        $region164: #{text_encoder_tcn_forward.1} parent=99 // pred_fallthru
          _
        // Predicated region
        $region165: #{text_encoder_tcn_forward.1} parent=99 // pred_check
          %p815 = pneg %p424
        $region166: #{text_encoder_tcn_forward.1} parent=99 // pred_check_branch
          %817 = sbr.rel (%p815) target = $region168
        $region167: #{text_encoder_tcn_forward.1} parent=99 // pred_region
          %818 = dma.done [#allocation27], 16
        $region168: #{text_encoder_tcn_forward.1} parent=99 // pred_fallthru
          _
        // Predicated region
        $region169: #{text_encoder_tcn_forward.1} parent=99 // pred_check
          %p819 = pneg %p466
        $region170: #{text_encoder_tcn_forward.1} parent=99 // pred_check_branch
          %821 = sbr.rel (%p819) target = $region172
        $region171: #{text_encoder_tcn_forward.1} parent=99 // pred_region
          %822 = dma.done [#allocation30], 16
        $region172: #{text_encoder_tcn_forward.1} parent=99 // pred_fallthru
          _
        %s823 = sand.u32 %s54, 1
        %s824 = scalar_lea.sflag [#allocation3], %s823
        %s825 = sand.u32 %s54, 1
        %s826 = smul.addr %s825, 96
        %s827 = scalar_lea.vmem [#allocation2], %s826
        %p828 = pneg %p67
        %p829 = pneg %p64
        %p830 = pneg %p88
        %p831 = pneg %p85
        %p832 = pneg %p109
        %p833 = pneg %p106
        %p834 = pneg %p130
        %p835 = pneg %p127
        %p836 = pneg %p151
        %p837 = pneg %p148
        %p838 = pneg %p172
        %p839 = pneg %p169
        %p840 = pneg %p193
        %p841 = pneg %p190
        %p842 = pneg %p214
        %p843 = pneg %p211
        %p844 = pneg %p235
        %p845 = pneg %p232
        %p846 = pneg %p256
        %p847 = pneg %p253
        %p848 = pneg %p277
        %p849 = pneg %p274
        %p850 = pneg %p298
        %p851 = pneg %p295
        %p852 = pneg %p319
        %p853 = pneg %p316
        %p854 = pneg %p340
        %p855 = pneg %p337
        %p856 = pneg %p361
        %p857 = pneg %p358
        %p858 = pneg %p382
        %p859 = pneg %p379
        %p860 = pneg %p403
        %p861 = pneg %p400
        %p862 = pneg %p424
        %p863 = pneg %p421
        %p864 = pneg %p445
        %p865 = pneg %p442
        %p866 = pneg %p466
        %p867 = pneg %p463
        %p868 = pneg %p492
        %p869 = pneg %p489
        %s870 = sand.u32 %s479, 1
        %s871 = scalar_lea.sflag [#allocation4], %s870
        %s872 = sand.u32 %s479, 1
        %s873 = smul.addr %s872, 16
        %s874 = scalar_lea.vmem [#allocation31], %s873
        %v876 = vld [vmem:[%s750] sm:$0xff]
        %v877 = vld [vmem:[%s750 + $0x8] sm:$0xff]
        %v878 = vld [vmem:[%s750 + $0x10] sm:$0xff]
        %v879 = vld [vmem:[%s750 + $0x18] sm:$0xff]
        %v880 = vld [vmem:[%s750 + $0x20] sm:$0xff]
        %v881 = vld [vmem:[%s750 + $0x28] sm:$0xff]
        %v882 = vld [vmem:[%s750 + $0x30] sm:$0xff]
        %v883 = vld [vmem:[%s750 + $0x38] sm:$0xff]
        %v884 = vld [vmem:[%s750 + $0x40] sm:$0xff]
        %v885 = vld [vmem:[%s750 + $0x48] sm:$0xff]
        %v886 = vld [vmem:[%s750 + $0x50] sm:$0xff]
        %v887 = vld [vmem:[%s750 + $0x58] sm:$0xff]
        %v888 = vpack.c.bf16 %v882, %v876
        %v889 = vpack.c.bf16 %v883, %v877
        %v890 = vpack.c.bf16 %v884, %v878
        %v891 = vpack.c.bf16 %v885, %v879
        %v892 = vpack.c.bf16 %v886, %v880
        %v893 = vpack.c.bf16 %v887, %v881
        %v894 = vld [vmem:[#allocation5] sm:$0xff]
        %v895 = vld [vmem:[#allocation5 + $0x8] sm:$0xf]
        %v896 = vld [vmem:[#allocation5 + $0xc] sm:$0xff]
        %v897 = vld [vmem:[#allocation5 + $0x14] sm:$0xf]
        %v898 = vld [vmem:[#allocation5 + $0x18] sm:$0xff]
        %v899 = vld [vmem:[#allocation5 + $0x20] sm:$0xf]
        %v900 = vld [vmem:[#allocation5 + $0x24] sm:$0xff]
        %v901 = vld [vmem:[#allocation5 + $0x2c] sm:$0xf]
        %v902 = vld [vmem:[#allocation5 + $0x30] sm:$0xff]
        %v903 = vld [vmem:[#allocation5 + $0x38] sm:$0xf]
        %v904 = vld [vmem:[#allocation5 + $0x3c] sm:$0xff]
        %v905 = vld [vmem:[#allocation5 + $0x44] sm:$0xf]
        %v906 = vld [vmem:[#allocation5 + $0x48] sm:$0xff]
        %v907 = vld [vmem:[#allocation5 + $0x50] sm:$0xf]
        %v908 = vld [vmem:[#allocation5 + $0x54] sm:$0xff]
        %v909 = vld [vmem:[#allocation5 + $0x5c] sm:$0xf]
        %v910 = vld [vmem:[#allocation5 + $0x60] sm:$0xff]
        %v911 = vld [vmem:[#allocation5 + $0x68] sm:$0xf]
        %v912 = vld [vmem:[#allocation5 + $0x6c] sm:$0xff]
        %v913 = vld [vmem:[#allocation5 + $0x74] sm:$0xf]
        %v914 = vld [vmem:[#allocation5 + $0x78] sm:$0xff]
        %v915 = vld [vmem:[#allocation5 + $0x80] sm:$0xf]
        %v916 = vld [vmem:[#allocation5 + $0x84] sm:$0xff]
        %v917 = vld [vmem:[#allocation5 + $0x8c] sm:$0xf]
        %v918 = vld [vmem:[#allocation5 + $0x90] sm:$0xff]
        %v919 = vld [vmem:[#allocation5 + $0x98] sm:$0xf]
        %v920 = vld [vmem:[#allocation5 + $0x9c] sm:$0xff]
        %v921 = vld [vmem:[#allocation5 + $0xa4] sm:$0xf]
        %v922 = vld [vmem:[#allocation5 + $0xa8] sm:$0xff]
        %v923 = vld [vmem:[#allocation5 + $0xb0] sm:$0xf]
        %v924 = vld [vmem:[#allocation5 + $0xb4] sm:$0xff]
        %v925 = vld [vmem:[#allocation5 + $0xbc] sm:$0xf]
        %v926 = vld [vmem:[#allocation5 + $0xc0] sm:$0xff]
        %v927 = vld [vmem:[#allocation5 + $0xc8] sm:$0xf]
        %v928 = vld [vmem:[#allocation5 + $0xcc] sm:$0xff]
        %v929 = vld [vmem:[#allocation5 + $0xd4] sm:$0xf]
        %v930 = vld [vmem:[#allocation5 + $0xd8] sm:$0xff]
        %v931 = vld [vmem:[#allocation5 + $0xe0] sm:$0xf]
        %v932 = vld [vmem:[#allocation5 + $0xe4] sm:$0xff]
        %v933 = vld [vmem:[#allocation5 + $0xec] sm:$0xf]
        %v934 = vld [vmem:[#allocation5 + $0xf0] sm:$0xff]
        %v935 = vld [vmem:[#allocation5 + $0xf8] sm:$0xf]
        %v936 = vld [vmem:[#allocation5 + $0xfc] sm:$0xff]
        %v937 = vld [vmem:[#allocation5 + $0x104] sm:$0xf]
        %v938 = vld [vmem:[#allocation5 + $0x108] sm:$0xff]
        %v939 = vld [vmem:[#allocation5 + $0x110] sm:$0xf]
        %v940 = vld [vmem:[#allocation5 + $0x114] sm:$0xff]
        %v941 = vld [vmem:[#allocation5 + $0x11c] sm:$0xf]
        %v942 = vld [vmem:[#allocation5 + $0x120] sm:$0xff]
        %v943 = vld [vmem:[#allocation5 + $0x128] sm:$0xf]
        %v944 = vld [vmem:[#allocation5 + $0x12c] sm:$0xff]
        %v945 = vld [vmem:[#allocation5 + $0x134] sm:$0xf]
        %v946 = vld [vmem:[#allocation5 + $0x138] sm:$0xff]
        %v947 = vld [vmem:[#allocation5 + $0x140] sm:$0xf]
        %v948 = vld [vmem:[#allocation5 + $0x144] sm:$0xff]
        %v949 = vld [vmem:[#allocation5 + $0x14c] sm:$0xf]
        %v950 = vld [vmem:[#allocation5 + $0x150] sm:$0xff]
        %v951 = vld [vmem:[#allocation5 + $0x158] sm:$0xf]
        %v952 = vld [vmem:[#allocation5 + $0x15c] sm:$0xff]
        %v953 = vld [vmem:[#allocation5 + $0x164] sm:$0xf]
        %v954 = vld [vmem:[#allocation5 + $0x168] sm:$0xff]
        %v955 = vld [vmem:[#allocation5 + $0x170] sm:$0xf]
        %v956 = vld [vmem:[#allocation5 + $0x174] sm:$0xff]
        %v957 = vld [vmem:[#allocation5 + $0x17c] sm:$0xf]
        %v958 = vld [vmem:[#allocation5 + $0x180] sm:$0xff]
        %v959 = vld [vmem:[#allocation5 + $0x188] sm:$0xf]
        %v960 = vld [vmem:[#allocation5 + $0x18c] sm:$0xff]
        %v961 = vld [vmem:[#allocation5 + $0x194] sm:$0xf]
        %v962 = vld [vmem:[#allocation5 + $0x198] sm:$0xff]
        %v963 = vld [vmem:[#allocation5 + $0x1a0] sm:$0xf]
        %v964 = vld [vmem:[#allocation5 + $0x1a4] sm:$0xff]
        %v965 = vld [vmem:[#allocation5 + $0x1ac] sm:$0xf]
        %v966 = vld [vmem:[#allocation5 + $0x1b0] sm:$0xff]
        %v967 = vld [vmem:[#allocation5 + $0x1b8] sm:$0xf]
        %v968 = vld [vmem:[#allocation5 + $0x1bc] sm:$0xff]
        %v969 = vld [vmem:[#allocation5 + $0x1c4] sm:$0xf]
        %v970 = vld [vmem:[#allocation5 + $0x1c8] sm:$0xff]
        %v971 = vld [vmem:[#allocation5 + $0x1d0] sm:$0xf]
        %v972 = vld [vmem:[#allocation5 + $0x1d4] sm:$0xff]
        %v973 = vld [vmem:[#allocation5 + $0x1dc] sm:$0xf]
        %v974 = vld [vmem:[#allocation5 + $0x1e0] sm:$0xff]
        %v975 = vld [vmem:[#allocation5 + $0x1e8] sm:$0xf]
        %v976 = vld [vmem:[#allocation5 + $0x1ec] sm:$0xff]
        %v977 = vld [vmem:[#allocation5 + $0x1f4] sm:$0xf]
        %v978 = vld [vmem:[#allocation5 + $0x1f8] sm:$0xff]
        %v979 = vld [vmem:[#allocation5 + $0x200] sm:$0xf]
        %v980 = vld [vmem:[#allocation5 + $0x204] sm:$0xff]
        %v981 = vld [vmem:[#allocation5 + $0x20c] sm:$0xf]
        %v982 = vld [vmem:[#allocation5 + $0x210] sm:$0xff]
        %v983 = vld [vmem:[#allocation5 + $0x218] sm:$0xf]
        %v984 = vld [vmem:[#allocation5 + $0x21c] sm:$0xff]
        %v985 = vld [vmem:[#allocation5 + $0x224] sm:$0xf]
        %v986 = vld [vmem:[#allocation5 + $0x228] sm:$0xff]
        %v987 = vld [vmem:[#allocation5 + $0x230] sm:$0xf]
        %v988 = vld [vmem:[#allocation5 + $0x234] sm:$0xff]
        %v989 = vld [vmem:[#allocation5 + $0x23c] sm:$0xf]
        %v990 = vld [vmem:[#allocation5 + $0x240] sm:$0xff]
        %v991 = vld [vmem:[#allocation5 + $0x248] sm:$0xf]
        %v992 = vld [vmem:[#allocation5 + $0x24c] sm:$0xff]
        %v993 = vld [vmem:[#allocation5 + $0x254] sm:$0xf]
        %v994 = vld [vmem:[#allocation5 + $0x258] sm:$0xff]
        %v995 = vld [vmem:[#allocation5 + $0x260] sm:$0xf]
        %v996 = vld [vmem:[#allocation5 + $0x264] sm:$0xff]
        %v997 = vld [vmem:[#allocation5 + $0x26c] sm:$0xf]
        %v998 = vld [vmem:[#allocation5 + $0x270] sm:$0xff]
        %v999 = vld [vmem:[#allocation5 + $0x278] sm:$0xf]
        %v1000 = vld [vmem:[#allocation5 + $0x27c] sm:$0xff]
        %v1001 = vld [vmem:[#allocation5 + $0x284] sm:$0xf]
        %v1002 = vld [vmem:[#allocation5 + $0x288] sm:$0xff]
        %v1003 = vld [vmem:[#allocation5 + $0x290] sm:$0xf]
        %v1004 = vld [vmem:[#allocation5 + $0x294] sm:$0xff]
        %v1005 = vld [vmem:[#allocation5 + $0x29c] sm:$0xf]
        %v1006 = vld [vmem:[#allocation5 + $0x2a0] sm:$0xff]
        %v1007 = vld [vmem:[#allocation5 + $0x2a8] sm:$0xf]
        %v1008 = vld [vmem:[#allocation5 + $0x2ac] sm:$0xff]
        %v1009 = vld [vmem:[#allocation5 + $0x2b4] sm:$0xf]
        %v1010 = vld [vmem:[#allocation5 + $0x2b8] sm:$0xff]
        %v1011 = vld [vmem:[#allocation5 + $0x2c0] sm:$0xf]
        %v1012 = vld [vmem:[#allocation5 + $0x2c4] sm:$0xff]
        %v1013 = vld [vmem:[#allocation5 + $0x2cc] sm:$0xf]
        %v1014 = vld [vmem:[#allocation5 + $0x2d0] sm:$0xff]
        %v1015 = vld [vmem:[#allocation5 + $0x2d8] sm:$0xf]
        %v1016 = vld [vmem:[#allocation5 + $0x2dc] sm:$0xff]
        %v1017 = vld [vmem:[#allocation5 + $0x2e4] sm:$0xf]
        %v1018 = vld [vmem:[#allocation5 + $0x2e8] sm:$0xff]
        %v1019 = vld [vmem:[#allocation5 + $0x2f0] sm:$0xf]
        %v1020 = vld [vmem:[#allocation5 + $0x2f4] sm:$0xff]
        %v1021 = vld [vmem:[#allocation5 + $0x2fc] sm:$0xf]
        %v1022 = vld [vmem:[#allocation5 + $0x300] sm:$0xff]
        %v1023 = vld [vmem:[#allocation5 + $0x308] sm:$0xf]
        %v1024 = vld [vmem:[#allocation5 + $0x30c] sm:$0xff]
        %v1025 = vld [vmem:[#allocation5 + $0x314] sm:$0xf]
        %v1026 = vld [vmem:[#allocation5 + $0x318] sm:$0xff]
        %v1027 = vld [vmem:[#allocation5 + $0x320] sm:$0xf]
        %v1028 = vld [vmem:[#allocation5 + $0x324] sm:$0xff]
        %v1029 = vld [vmem:[#allocation5 + $0x32c] sm:$0xf]
        %v1030 = vld [vmem:[#allocation5 + $0x330] sm:$0xff]
        %v1031 = vld [vmem:[#allocation5 + $0x338] sm:$0xf]
        %v1032 = vld [vmem:[#allocation5 + $0x33c] sm:$0xff]
        %v1033 = vld [vmem:[#allocation5 + $0x344] sm:$0xf]
        %v1034 = vld [vmem:[#allocation5 + $0x348] sm:$0xff]
        %v1035 = vld [vmem:[#allocation5 + $0x350] sm:$0xf]
        %v1036 = vld [vmem:[#allocation5 + $0x354] sm:$0xff]
        %v1037 = vld [vmem:[#allocation5 + $0x35c] sm:$0xf]
        %v1038 = vld [vmem:[#allocation5 + $0x360] sm:$0xff]
        %v1039 = vld [vmem:[#allocation5 + $0x368] sm:$0xf]
        %v1040 = vld [vmem:[#allocation5 + $0x36c] sm:$0xff]
        %v1041 = vld [vmem:[#allocation5 + $0x374] sm:$0xf]
        %v1042 = vld [vmem:[#allocation5 + $0x378] sm:$0xff]
        %v1043 = vld [vmem:[#allocation5 + $0x380] sm:$0xf]
        %v1044 = vld [vmem:[#allocation5 + $0x384] sm:$0xff]
        %v1045 = vld [vmem:[#allocation5 + $0x38c] sm:$0xf]
        %v1046 = vld [vmem:[#allocation5 + $0x390] sm:$0xff]
        %v1047 = vld [vmem:[#allocation5 + $0x398] sm:$0xf]
        %v1048 = vld [vmem:[#allocation5 + $0x39c] sm:$0xff]
        %v1049 = vld [vmem:[#allocation5 + $0x3a4] sm:$0xf]
        %v1050 = vld [vmem:[#allocation5 + $0x3a8] sm:$0xff]
        %v1051 = vld [vmem:[#allocation5 + $0x3b0] sm:$0xf]
        %v1052 = vld [vmem:[#allocation5 + $0x3b4] sm:$0xff]
        %v1053 = vld [vmem:[#allocation5 + $0x3bc] sm:$0xf]
        %v1054 = vld [vmem:[#allocation5 + $0x3c0] sm:$0xff]
        %v1055 = vld [vmem:[#allocation5 + $0x3c8] sm:$0xf]
        %v1056 = vld [vmem:[#allocation5 + $0x3cc] sm:$0xff]
        %v1057 = vld [vmem:[#allocation5 + $0x3d4] sm:$0xf]
        %v1058 = vld [vmem:[#allocation5 + $0x3d8] sm:$0xff]
        %v1059 = vld [vmem:[#allocation5 + $0x3e0] sm:$0xf]
        %v1060 = vld [vmem:[#allocation5 + $0x3e4] sm:$0xff]
        %v1061 = vld [vmem:[#allocation5 + $0x3ec] sm:$0xf]
        %v1062 = vld [vmem:[#allocation5 + $0x3f0] sm:$0xff]
        %v1063 = vld [vmem:[#allocation5 + $0x3f8] sm:$0xf]
        %v1064 = vld [vmem:[#allocation5 + $0x3fc] sm:$0xff]
        %v1065 = vld [vmem:[#allocation5 + $0x404] sm:$0xf]
        %v1066 = vld [vmem:[#allocation5 + $0x408] sm:$0xff]
        %v1067 = vld [vmem:[#allocation5 + $0x410] sm:$0xf]
        %v1068 = vld [vmem:[#allocation5 + $0x414] sm:$0xff]
        %v1069 = vld [vmem:[#allocation5 + $0x41c] sm:$0xf]
        %v1070 = vld [vmem:[#allocation5 + $0x420] sm:$0xff]
        %v1071 = vld [vmem:[#allocation5 + $0x428] sm:$0xf]
        %v1072 = vld [vmem:[#allocation5 + $0x42c] sm:$0xff]
        %v1073 = vld [vmem:[#allocation5 + $0x434] sm:$0xf]
        %v1074 = vld [vmem:[#allocation5 + $0x438] sm:$0xff]
        %v1075 = vld [vmem:[#allocation5 + $0x440] sm:$0xf]
        %v1076 = vld [vmem:[#allocation5 + $0x444] sm:$0xff]
        %v1077 = vld [vmem:[#allocation5 + $0x44c] sm:$0xf]
        %v1078 = vld [vmem:[#allocation5 + $0x450] sm:$0xff]
        %v1079 = vld [vmem:[#allocation5 + $0x458] sm:$0xf]
        %v1080 = vld [vmem:[#allocation5 + $0x45c] sm:$0xff]
        %v1081 = vld [vmem:[#allocation5 + $0x464] sm:$0xf]
        %v1082 = vld [vmem:[#allocation5 + $0x468] sm:$0xff]
        %v1083 = vld [vmem:[#allocation5 + $0x470] sm:$0xf]
        %v1084 = vld [vmem:[#allocation5 + $0x474] sm:$0xff]
        %v1085 = vld [vmem:[#allocation5 + $0x47c] sm:$0xf]
        %v1278 = vunpack.c.l.b16 %v894
        %v1279 = vunpack.c.h.b16 %v894
        %v1280 = vunpack.c.l.b16 %v895
        %v1281 = vunpack.c.l.b16 %v896
        %v1282 = vunpack.c.h.b16 %v896
        %v1283 = vunpack.c.l.b16 %v897
        %v1284 = vunpack.c.l.b16 %v898
        %v1285 = vunpack.c.h.b16 %v898
        %v1286 = vunpack.c.l.b16 %v899
        %v1287 = vunpack.c.l.b16 %v900
        %v1288 = vunpack.c.h.b16 %v900
        %v1289 = vunpack.c.l.b16 %v901
        %v1290 = vunpack.c.l.b16 %v902
        %v1291 = vunpack.c.h.b16 %v902
        %v1292 = vunpack.c.l.b16 %v903
        %v1293 = vunpack.c.l.b16 %v904
        %v1294 = vunpack.c.h.b16 %v904
        %v1295 = vunpack.c.l.b16 %v905
        %v1296 = vunpack.c.l.b16 %v906
        %v1297 = vunpack.c.h.b16 %v906
        %v1298 = vunpack.c.l.b16 %v907
        %v1299 = vunpack.c.l.b16 %v908
        %v1300 = vunpack.c.h.b16 %v908
        %v1301 = vunpack.c.l.b16 %v909
        %v1302 = vunpack.c.l.b16 %v910
        %v1303 = vunpack.c.h.b16 %v910
        %v1304 = vunpack.c.l.b16 %v911
        %v1305 = vunpack.c.l.b16 %v912
        %v1306 = vunpack.c.h.b16 %v912
        %v1307 = vunpack.c.l.b16 %v913
        %v1308 = vunpack.c.l.b16 %v914
        %v1309 = vunpack.c.h.b16 %v914
        %v1310 = vunpack.c.l.b16 %v915
        %v1311 = vunpack.c.l.b16 %v916
        %v1312 = vunpack.c.h.b16 %v916
        %v1313 = vunpack.c.l.b16 %v917
        %v1314 = vunpack.c.l.b16 %v918
        %v1315 = vunpack.c.h.b16 %v918
        %v1316 = vunpack.c.l.b16 %v919
        %v1317 = vunpack.c.l.b16 %v920
        %v1318 = vunpack.c.h.b16 %v920
        %v1319 = vunpack.c.l.b16 %v921
        %v1320 = vunpack.c.l.b16 %v922
        %v1321 = vunpack.c.h.b16 %v922
        %v1322 = vunpack.c.l.b16 %v923
        %v1323 = vunpack.c.l.b16 %v924
        %v1324 = vunpack.c.h.b16 %v924
        %v1325 = vunpack.c.l.b16 %v925
        %v1326 = vunpack.c.l.b16 %v926
        %v1327 = vunpack.c.h.b16 %v926
        %v1328 = vunpack.c.l.b16 %v927
        %v1329 = vunpack.c.l.b16 %v928
        %v1330 = vunpack.c.h.b16 %v928
        %v1331 = vunpack.c.l.b16 %v929
        %v1332 = vunpack.c.l.b16 %v930
        %v1333 = vunpack.c.h.b16 %v930
        %v1334 = vunpack.c.l.b16 %v931
        %v1335 = vunpack.c.l.b16 %v932
        %v1336 = vunpack.c.h.b16 %v932
        %v1337 = vunpack.c.l.b16 %v933
        %v1338 = vunpack.c.l.b16 %v934
        %v1339 = vunpack.c.h.b16 %v934
        %v1340 = vunpack.c.l.b16 %v935
        %v1341 = vunpack.c.l.b16 %v936
        %v1342 = vunpack.c.h.b16 %v936
        %v1343 = vunpack.c.l.b16 %v937
        %v1344 = vunpack.c.l.b16 %v938
        %v1345 = vunpack.c.h.b16 %v938
        %v1346 = vunpack.c.l.b16 %v939
        %v1347 = vunpack.c.l.b16 %v940
        %v1348 = vunpack.c.h.b16 %v940
        %v1349 = vunpack.c.l.b16 %v941
        %v1350 = vunpack.c.l.b16 %v942
        %v1351 = vunpack.c.h.b16 %v942
        %v1352 = vunpack.c.l.b16 %v943
        %v1353 = vunpack.c.l.b16 %v944
        %v1354 = vunpack.c.h.b16 %v944
        %v1355 = vunpack.c.l.b16 %v945
        %v1356 = vunpack.c.l.b16 %v946
        %v1357 = vunpack.c.h.b16 %v946
        %v1358 = vunpack.c.l.b16 %v947
        %v1359 = vunpack.c.l.b16 %v948
        %v1360 = vunpack.c.h.b16 %v948
        %v1361 = vunpack.c.l.b16 %v949
        %v1362 = vunpack.c.l.b16 %v950
        %v1363 = vunpack.c.h.b16 %v950
        %v1364 = vunpack.c.l.b16 %v951
        %v1365 = vunpack.c.l.b16 %v952
        %v1366 = vunpack.c.h.b16 %v952
        %v1367 = vunpack.c.l.b16 %v953
        %v1368 = vunpack.c.l.b16 %v954
        %v1369 = vunpack.c.h.b16 %v954
        %v1370 = vunpack.c.l.b16 %v955
        %v1371 = vunpack.c.l.b16 %v956
        %v1372 = vunpack.c.h.b16 %v956
        %v1373 = vunpack.c.l.b16 %v957
        %v1374 = vunpack.c.l.b16 %v958
        %v1375 = vunpack.c.h.b16 %v958
        %v1376 = vunpack.c.l.b16 %v959
        %v1377 = vunpack.c.l.b16 %v960
        %v1378 = vunpack.c.h.b16 %v960
        %v1379 = vunpack.c.l.b16 %v961
        %v1380 = vunpack.c.l.b16 %v962
        %v1381 = vunpack.c.h.b16 %v962
        %v1382 = vunpack.c.l.b16 %v963
        %v1383 = vunpack.c.l.b16 %v964
        %v1384 = vunpack.c.h.b16 %v964
        %v1385 = vunpack.c.l.b16 %v965
        %v1386 = vunpack.c.l.b16 %v966
        %v1387 = vunpack.c.h.b16 %v966
        %v1388 = vunpack.c.l.b16 %v967
        %v1389 = vunpack.c.l.b16 %v968
        %v1390 = vunpack.c.h.b16 %v968
        %v1391 = vunpack.c.l.b16 %v969
        %v1392 = vunpack.c.l.b16 %v970
        %v1393 = vunpack.c.h.b16 %v970
        %v1394 = vunpack.c.l.b16 %v971
        %v1395 = vunpack.c.l.b16 %v972
        %v1396 = vunpack.c.h.b16 %v972
        %v1397 = vunpack.c.l.b16 %v973
        %v1398 = vunpack.c.l.b16 %v974
        %v1399 = vunpack.c.h.b16 %v974
        %v1400 = vunpack.c.l.b16 %v975
        %v1401 = vunpack.c.l.b16 %v976
        %v1402 = vunpack.c.h.b16 %v976
        %v1403 = vunpack.c.l.b16 %v977
        %v1404 = vunpack.c.l.b16 %v978
        %v1405 = vunpack.c.h.b16 %v978
        %v1406 = vunpack.c.l.b16 %v979
        %v1407 = vunpack.c.l.b16 %v980
        %v1408 = vunpack.c.h.b16 %v980
        %v1409 = vunpack.c.l.b16 %v981
        %v1410 = vunpack.c.l.b16 %v982
        %v1411 = vunpack.c.h.b16 %v982
        %v1412 = vunpack.c.l.b16 %v983
        %v1413 = vunpack.c.l.b16 %v984
        %v1414 = vunpack.c.h.b16 %v984
        %v1415 = vunpack.c.l.b16 %v985
        %v1416 = vunpack.c.l.b16 %v986
        %v1417 = vunpack.c.h.b16 %v986
        %v1418 = vunpack.c.l.b16 %v987
        %v1419 = vunpack.c.l.b16 %v988
        %v1420 = vunpack.c.h.b16 %v988
        %v1421 = vunpack.c.l.b16 %v989
        %v1422 = vunpack.c.l.b16 %v990
        %v1423 = vunpack.c.h.b16 %v990
        %v1424 = vunpack.c.l.b16 %v991
        %v1425 = vunpack.c.l.b16 %v992
        %v1426 = vunpack.c.h.b16 %v992
        %v1427 = vunpack.c.l.b16 %v993
        %v1428 = vunpack.c.l.b16 %v994
        %v1429 = vunpack.c.h.b16 %v994
        %v1430 = vunpack.c.l.b16 %v995
        %v1431 = vunpack.c.l.b16 %v996
        %v1432 = vunpack.c.h.b16 %v996
        %v1433 = vunpack.c.l.b16 %v997
        %v1434 = vunpack.c.l.b16 %v998
        %v1435 = vunpack.c.h.b16 %v998
        %v1436 = vunpack.c.l.b16 %v999
        %v1437 = vunpack.c.l.b16 %v1000
        %v1438 = vunpack.c.h.b16 %v1000
        %v1439 = vunpack.c.l.b16 %v1001
        %v1440 = vunpack.c.l.b16 %v1002
        %v1441 = vunpack.c.h.b16 %v1002
        %v1442 = vunpack.c.l.b16 %v1003
        %v1443 = vunpack.c.l.b16 %v1004
        %v1444 = vunpack.c.h.b16 %v1004
        %v1445 = vunpack.c.l.b16 %v1005
        %v1446 = vunpack.c.l.b16 %v1006
        %v1447 = vunpack.c.h.b16 %v1006
        %v1448 = vunpack.c.l.b16 %v1007
        %v1449 = vunpack.c.l.b16 %v1008
        %v1450 = vunpack.c.h.b16 %v1008
        %v1451 = vunpack.c.l.b16 %v1009
        %v1452 = vunpack.c.l.b16 %v1010
        %v1453 = vunpack.c.h.b16 %v1010
        %v1454 = vunpack.c.l.b16 %v1011
        %v1455 = vunpack.c.l.b16 %v1012
        %v1456 = vunpack.c.h.b16 %v1012
        %v1457 = vunpack.c.l.b16 %v1013
        %v1458 = vunpack.c.l.b16 %v1014
        %v1459 = vunpack.c.h.b16 %v1014
        %v1460 = vunpack.c.l.b16 %v1015
        %v1461 = vunpack.c.l.b16 %v1016
        %v1462 = vunpack.c.h.b16 %v1016
        %v1463 = vunpack.c.l.b16 %v1017
        %v1464 = vunpack.c.l.b16 %v1018
        %v1465 = vunpack.c.h.b16 %v1018
        %v1466 = vunpack.c.l.b16 %v1019
        %v1467 = vunpack.c.l.b16 %v1020
        %v1468 = vunpack.c.h.b16 %v1020
        %v1469 = vunpack.c.l.b16 %v1021
        %v1470 = vunpack.c.l.b16 %v1022
        %v1471 = vunpack.c.h.b16 %v1022
        %v1472 = vunpack.c.l.b16 %v1023
        %v1473 = vunpack.c.l.b16 %v1024
        %v1474 = vunpack.c.h.b16 %v1024
        %v1475 = vunpack.c.l.b16 %v1025
        %v1476 = vunpack.c.l.b16 %v1026
        %v1477 = vunpack.c.h.b16 %v1026
        %v1478 = vunpack.c.l.b16 %v1027
        %v1479 = vunpack.c.l.b16 %v1028
        %v1480 = vunpack.c.h.b16 %v1028
        %v1481 = vunpack.c.l.b16 %v1029
        %v1482 = vunpack.c.l.b16 %v1030
        %v1483 = vunpack.c.h.b16 %v1030
        %v1484 = vunpack.c.l.b16 %v1031
        %v1485 = vunpack.c.l.b16 %v1032
        %v1486 = vunpack.c.h.b16 %v1032
        %v1487 = vunpack.c.l.b16 %v1033
        %v1488 = vunpack.c.l.b16 %v1034
        %v1489 = vunpack.c.h.b16 %v1034
        %v1490 = vunpack.c.l.b16 %v1035
        %v1491 = vunpack.c.l.b16 %v1036
        %v1492 = vunpack.c.h.b16 %v1036
        %v1493 = vunpack.c.l.b16 %v1037
        %v1494 = vunpack.c.l.b16 %v1038
        %v1495 = vunpack.c.h.b16 %v1038
        %v1496 = vunpack.c.l.b16 %v1039
        %v1497 = vunpack.c.l.b16 %v1040
        %v1498 = vunpack.c.h.b16 %v1040
        %v1499 = vunpack.c.l.b16 %v1041
        %v1500 = vunpack.c.l.b16 %v1042
        %v1501 = vunpack.c.h.b16 %v1042
        %v1502 = vunpack.c.l.b16 %v1043
        %v1503 = vunpack.c.l.b16 %v1044
        %v1504 = vunpack.c.h.b16 %v1044
        %v1505 = vunpack.c.l.b16 %v1045
        %v1506 = vunpack.c.l.b16 %v1046
        %v1507 = vunpack.c.h.b16 %v1046
        %v1508 = vunpack.c.l.b16 %v1047
        %v1509 = vunpack.c.l.b16 %v1048
        %v1510 = vunpack.c.h.b16 %v1048
        %v1511 = vunpack.c.l.b16 %v1049
        %v1512 = vunpack.c.l.b16 %v1050
        %v1513 = vunpack.c.h.b16 %v1050
        %v1514 = vunpack.c.l.b16 %v1051
        %v1515 = vunpack.c.l.b16 %v1052
        %v1516 = vunpack.c.h.b16 %v1052
        %v1517 = vunpack.c.l.b16 %v1053
        %v1518 = vunpack.c.l.b16 %v1054
        %v1519 = vunpack.c.h.b16 %v1054
        %v1520 = vunpack.c.l.b16 %v1055
        %v1521 = vunpack.c.l.b16 %v1056
        %v1522 = vunpack.c.h.b16 %v1056
        %v1523 = vunpack.c.l.b16 %v1057
        %v1524 = vunpack.c.l.b16 %v1058
        %v1525 = vunpack.c.h.b16 %v1058
        %v1526 = vunpack.c.l.b16 %v1059
        %v1527 = vunpack.c.l.b16 %v1060
        %v1528 = vunpack.c.h.b16 %v1060
        %v1529 = vunpack.c.l.b16 %v1061
        %v1530 = vunpack.c.l.b16 %v1062
        %v1531 = vunpack.c.h.b16 %v1062
        %v1532 = vunpack.c.l.b16 %v1063
        %v1533 = vunpack.c.l.b16 %v1064
        %v1534 = vunpack.c.h.b16 %v1064
        %v1535 = vunpack.c.l.b16 %v1065
        %v1536 = vunpack.c.l.b16 %v1066
        %v1537 = vunpack.c.h.b16 %v1066
        %v1538 = vunpack.c.l.b16 %v1067
        %v1539 = vunpack.c.l.b16 %v1068
        %v1540 = vunpack.c.h.b16 %v1068
        %v1541 = vunpack.c.l.b16 %v1069
        %v1542 = vunpack.c.l.b16 %v1070
        %v1543 = vunpack.c.h.b16 %v1070
        %v1544 = vunpack.c.l.b16 %v1071
        %v1545 = vunpack.c.l.b16 %v1072
        %v1546 = vunpack.c.h.b16 %v1072
        %v1547 = vunpack.c.l.b16 %v1073
        %v1548 = vunpack.c.l.b16 %v1074
        %v1549 = vunpack.c.h.b16 %v1074
        %v1550 = vunpack.c.l.b16 %v1075
        %v1551 = vunpack.c.l.b16 %v1076
        %v1552 = vunpack.c.h.b16 %v1076
        %v1553 = vunpack.c.l.b16 %v1077
        %v1554 = vunpack.c.l.b16 %v1078
        %v1555 = vunpack.c.h.b16 %v1078
        %v1556 = vunpack.c.l.b16 %v1079
        %v1557 = vunpack.c.l.b16 %v1080
        %v1558 = vunpack.c.h.b16 %v1080
        %v1559 = vunpack.c.l.b16 %v1081
        %v1560 = vunpack.c.l.b16 %v1082
        %v1561 = vunpack.c.h.b16 %v1082
        %v1562 = vunpack.c.l.b16 %v1083
        %v1563 = vunpack.c.l.b16 %v1084
        %v1564 = vunpack.c.h.b16 %v1084
        %v1565 = vunpack.c.l.b16 %v1085
        %v1566 = vpack.c.b16 %v1281, %v1278
        %v1567 = vpack.c.b16 %v1282, %v1279
        %v1568 = vpack.c.b16 %v1283, %v1280
        %v1569 = vpack.c.b16 %v1287, %v1284
        %v1570 = vpack.c.b16 %v1288, %v1285
        %v1571 = vpack.c.b16 %v1289, %v1286
        %v1572 = vpack.c.b16 %v1293, %v1290
        %v1573 = vpack.c.b16 %v1294, %v1291
        %v1574 = vpack.c.b16 %v1295, %v1292
        %v1575 = vpack.c.b16 %v1299, %v1296
        %v1576 = vpack.c.b16 %v1300, %v1297
        %v1577 = vpack.c.b16 %v1301, %v1298
        %v1578 = vpack.c.b16 %v1305, %v1302
        %v1579 = vpack.c.b16 %v1306, %v1303
        %v1580 = vpack.c.b16 %v1307, %v1304
        %v1581 = vpack.c.b16 %v1311, %v1308
        %v1582 = vpack.c.b16 %v1312, %v1309
        %v1583 = vpack.c.b16 %v1313, %v1310
        %v1584 = vpack.c.b16 %v1317, %v1314
        %v1585 = vpack.c.b16 %v1318, %v1315
        %v1586 = vpack.c.b16 %v1319, %v1316
        %v1587 = vpack.c.b16 %v1323, %v1320
        %v1588 = vpack.c.b16 %v1324, %v1321
        %v1589 = vpack.c.b16 %v1325, %v1322
        %v1590 = vpack.c.b16 %v1329, %v1326
        %v1591 = vpack.c.b16 %v1330, %v1327
        %v1592 = vpack.c.b16 %v1331, %v1328
        %v1593 = vpack.c.b16 %v1335, %v1332
        %v1594 = vpack.c.b16 %v1336, %v1333
        %v1595 = vpack.c.b16 %v1337, %v1334
        %v1596 = vpack.c.b16 %v1341, %v1338
        %v1597 = vpack.c.b16 %v1342, %v1339
        %v1598 = vpack.c.b16 %v1343, %v1340
        %v1599 = vpack.c.b16 %v1347, %v1344
        %v1600 = vpack.c.b16 %v1348, %v1345
        %v1601 = vpack.c.b16 %v1349, %v1346
        %v1602 = vpack.c.b16 %v1353, %v1350
        %v1603 = vpack.c.b16 %v1354, %v1351
        %v1604 = vpack.c.b16 %v1355, %v1352
        %v1605 = vpack.c.b16 %v1359, %v1356
        %v1606 = vpack.c.b16 %v1360, %v1357
        %v1607 = vpack.c.b16 %v1361, %v1358
        %v1608 = vpack.c.b16 %v1365, %v1362
        %v1609 = vpack.c.b16 %v1366, %v1363
        %v1610 = vpack.c.b16 %v1367, %v1364
        %v1611 = vpack.c.b16 %v1371, %v1368
        %v1612 = vpack.c.b16 %v1372, %v1369
        %v1613 = vpack.c.b16 %v1373, %v1370
        %v1614 = vpack.c.b16 %v1377, %v1374
        %v1615 = vpack.c.b16 %v1378, %v1375
        %v1616 = vpack.c.b16 %v1379, %v1376
        %v1617 = vpack.c.b16 %v1383, %v1380
        %v1618 = vpack.c.b16 %v1384, %v1381
        %v1619 = vpack.c.b16 %v1385, %v1382
        %v1620 = vpack.c.b16 %v1389, %v1386
        %v1621 = vpack.c.b16 %v1390, %v1387
        %v1622 = vpack.c.b16 %v1391, %v1388
        %v1623 = vpack.c.b16 %v1395, %v1392
        %v1624 = vpack.c.b16 %v1396, %v1393
        %v1625 = vpack.c.b16 %v1397, %v1394
        %v1626 = vpack.c.b16 %v1401, %v1398
        %v1627 = vpack.c.b16 %v1402, %v1399
        %v1628 = vpack.c.b16 %v1403, %v1400
        %v1629 = vpack.c.b16 %v1407, %v1404
        %v1630 = vpack.c.b16 %v1408, %v1405
        %v1631 = vpack.c.b16 %v1409, %v1406
        %v1632 = vpack.c.b16 %v1413, %v1410
        %v1633 = vpack.c.b16 %v1414, %v1411
        %v1634 = vpack.c.b16 %v1415, %v1412
        %v1635 = vpack.c.b16 %v1419, %v1416
        %v1636 = vpack.c.b16 %v1420, %v1417
        %v1637 = vpack.c.b16 %v1421, %v1418
        %v1638 = vpack.c.b16 %v1425, %v1422
        %v1639 = vpack.c.b16 %v1426, %v1423
        %v1640 = vpack.c.b16 %v1427, %v1424
        %v1641 = vpack.c.b16 %v1431, %v1428
        %v1642 = vpack.c.b16 %v1432, %v1429
        %v1643 = vpack.c.b16 %v1433, %v1430
        %v1644 = vpack.c.b16 %v1437, %v1434
        %v1645 = vpack.c.b16 %v1438, %v1435
        %v1646 = vpack.c.b16 %v1439, %v1436
        %v1647 = vpack.c.b16 %v1443, %v1440
        %v1648 = vpack.c.b16 %v1444, %v1441
        %v1649 = vpack.c.b16 %v1445, %v1442
        %v1650 = vpack.c.b16 %v1449, %v1446
        %v1651 = vpack.c.b16 %v1450, %v1447
        %v1652 = vpack.c.b16 %v1451, %v1448
        %v1653 = vpack.c.b16 %v1455, %v1452
        %v1654 = vpack.c.b16 %v1456, %v1453
        %v1655 = vpack.c.b16 %v1457, %v1454
        %v1656 = vpack.c.b16 %v1461, %v1458
        %v1657 = vpack.c.b16 %v1462, %v1459
        %v1658 = vpack.c.b16 %v1463, %v1460
        %v1659 = vpack.c.b16 %v1467, %v1464
        %v1660 = vpack.c.b16 %v1468, %v1465
        %v1661 = vpack.c.b16 %v1469, %v1466
        %v1662 = vpack.c.b16 %v1473, %v1470
        %v1663 = vpack.c.b16 %v1474, %v1471
        %v1664 = vpack.c.b16 %v1475, %v1472
        %v1665 = vpack.c.b16 %v1479, %v1476
        %v1666 = vpack.c.b16 %v1480, %v1477
        %v1667 = vpack.c.b16 %v1481, %v1478
        %v1668 = vpack.c.b16 %v1485, %v1482
        %v1669 = vpack.c.b16 %v1486, %v1483
        %v1670 = vpack.c.b16 %v1487, %v1484
        %v1671 = vpack.c.b16 %v1491, %v1488
        %v1672 = vpack.c.b16 %v1492, %v1489
        %v1673 = vpack.c.b16 %v1493, %v1490
        %v1674 = vpack.c.b16 %v1497, %v1494
        %v1675 = vpack.c.b16 %v1498, %v1495
        %v1676 = vpack.c.b16 %v1499, %v1496
        %v1677 = vpack.c.b16 %v1503, %v1500
        %v1678 = vpack.c.b16 %v1504, %v1501
        %v1679 = vpack.c.b16 %v1505, %v1502
        %v1680 = vpack.c.b16 %v1509, %v1506
        %v1681 = vpack.c.b16 %v1510, %v1507
        %v1682 = vpack.c.b16 %v1511, %v1508
        %v1683 = vpack.c.b16 %v1515, %v1512
        %v1684 = vpack.c.b16 %v1516, %v1513
        %v1685 = vpack.c.b16 %v1517, %v1514
        %v1686 = vpack.c.b16 %v1521, %v1518
        %v1687 = vpack.c.b16 %v1522, %v1519
        %v1688 = vpack.c.b16 %v1523, %v1520
        %v1689 = vpack.c.b16 %v1527, %v1524
        %v1690 = vpack.c.b16 %v1528, %v1525
        %v1691 = vpack.c.b16 %v1529, %v1526
        %v1692 = vpack.c.b16 %v1533, %v1530
        %v1693 = vpack.c.b16 %v1534, %v1531
        %v1694 = vpack.c.b16 %v1535, %v1532
        %v1695 = vpack.c.b16 %v1539, %v1536
        %v1696 = vpack.c.b16 %v1540, %v1537
        %v1697 = vpack.c.b16 %v1541, %v1538
        %v1698 = vpack.c.b16 %v1545, %v1542
        %v1699 = vpack.c.b16 %v1546, %v1543
        %v1700 = vpack.c.b16 %v1547, %v1544
        %v1701 = vpack.c.b16 %v1551, %v1548
        %v1702 = vpack.c.b16 %v1552, %v1549
        %v1703 = vpack.c.b16 %v1553, %v1550
        %v1704 = vpack.c.b16 %v1557, %v1554
        %v1705 = vpack.c.b16 %v1558, %v1555
        %v1706 = vpack.c.b16 %v1559, %v1556
        %v1707 = vpack.c.b16 %v1563, %v1560
        %v1708 = vpack.c.b16 %v1564, %v1561
        %v1709 = vpack.c.b16 %v1565, %v1562
        %1854 = vmatprep.subr.bf16.mxu0 %v1567
        %1855 = vmatpush1.bf16.msra.mxu0 %v1566
        %1856 = vmatprep.subr.bf16.mxu0 %v1570
        %1857 = vmatpush1.bf16.msra.mxu0 %v1569
        %1858 = vmatprep.subr.bf16.mxu0 %v1573
        %1859 = vmatpush1.bf16.msra.mxu0 %v1572
        %1860 = vmatprep.subr.bf16.mxu0 %v1576
        %1861 = vmatpush1.bf16.msra.mxu0 %v1575
        %1862 = vmatprep.subr.bf16.mxu0 %v1579
        %1863 = vmatpush1.bf16.msra.mxu0 %v1578
        %1864 = vmatprep.subr.bf16.mxu0 %v1582
        %1865 = vmatpush1.bf16.msra.mxu0 %v1581
        %1866 = vmatprep.subr.bf16.mxu0 %v1585
        %1867 = vmatpush1.bf16.msra.mxu0 %v1584
        %1868 = vmatprep.subr.bf16.mxu0 %v1588
        %1869 = vmatpush1.bf16.msra.mxu0 %v1587
        %1870 = vmatprep.subr.bf16.mxu0 %v1591
        %1871 = vmatpush1.bf16.msra.mxu0 %v1590
        %1872 = vmatprep.subr.bf16.mxu0 %v1594
        %1873 = vmatpush1.bf16.msra.mxu0 %v1593
        %1874 = vmatprep.subr.bf16.mxu0 %v1597
        %1875 = vmatpush1.bf16.msra.mxu0 %v1596
        %1876 = vmatprep.subr.bf16.mxu0 %v1600
        %1877 = vmatpush1.bf16.msra.mxu0 %v1599
        %1878 = vmatprep.subr.bf16.mxu0 %v1603
        %1879 = vmatpush1.bf16.msra.mxu0 %v1602
        %1880 = vmatprep.subr.bf16.mxu0 %v1606
        %1881 = vmatpush1.bf16.msra.mxu0 %v1605
        %1882 = vmatprep.subr.bf16.mxu0 %v1609
        %1883 = vmatpush1.bf16.msra.mxu0 %v1608
        %1884 = vmatprep.subr.bf16.mxu0 %v1612
        %1885 = vmatpush1.bf16.msra.mxu0 %v1611
        %1886 = vmatprep.mubr.bf16.mxu0 %v889
        %1887 = vmatmul.mubr.bf16.gmra.mrb[0].mxu0 %v888
        %v1888 = vpop.f32.mrb[0].mxu0
        %v1889 = vadd.f32 0.0, %v1888
        %v1890 = vpop.f32.mrb[0].mxu0
        %v1891 = vadd.f32 0.0, %v1890
        %v1892 = vpop.f32.mrb[0].mxu0
        %v1893 = vadd.f32 0.0, %v1892
        %v1894 = vpop.f32.mrb[0].mxu0
        %v1895 = vadd.f32 0.0, %v1894
        %1896 = vdwg.mxu0
        %1897 = vmatprep.subr.bf16.mxu0 %v1615
        %1898 = vmatpush1.bf16.msra.mxu0 %v1614
        %1899 = vmatprep.subr.bf16.mxu0 %v1618
        %1900 = vmatpush1.bf16.msra.mxu0 %v1617
        %1901 = vmatprep.subr.bf16.mxu0 %v1621
        %1902 = vmatpush1.bf16.msra.mxu0 %v1620
        %1903 = vmatprep.subr.bf16.mxu0 %v1624
        %1904 = vmatpush1.bf16.msra.mxu0 %v1623
        %1905 = vmatprep.subr.bf16.mxu0 %v1627
        %1906 = vmatpush1.bf16.msra.mxu0 %v1626
        %1907 = vmatprep.subr.bf16.mxu0 %v1630
        %1908 = vmatpush1.bf16.msra.mxu0 %v1629
        %1909 = vmatprep.subr.bf16.mxu0 %v1633
        %1910 = vmatpush1.bf16.msra.mxu0 %v1632
        %1911 = vmatprep.subr.bf16.mxu0 %v1636
        %1912 = vmatpush1.bf16.msra.mxu0 %v1635
        %1913 = vmatprep.subr.bf16.mxu0 %v1639
        %1914 = vmatpush1.bf16.msra.mxu0 %v1638
        %1915 = vmatprep.subr.bf16.mxu0 %v1642
        %1916 = vmatpush1.bf16.msra.mxu0 %v1641
        %1917 = vmatprep.subr.bf16.mxu0 %v1645
        %1918 = vmatpush1.bf16.msra.mxu0 %v1644
        %1919 = vmatprep.subr.bf16.mxu0 %v1648
        %1920 = vmatpush1.bf16.msra.mxu0 %v1647
        %1921 = vmatprep.subr.bf16.mxu0 %v1651
        %1922 = vmatpush1.bf16.msra.mxu0 %v1650
        %1923 = vmatprep.subr.bf16.mxu0 %v1654
        %1924 = vmatpush1.bf16.msra.mxu0 %v1653
        %1925 = vmatprep.subr.bf16.mxu0 %v1657
        %1926 = vmatpush1.bf16.msra.mxu0 %v1656
        %1927 = vmatprep.subr.bf16.mxu0 %v1660
        %1928 = vmatpush1.bf16.msra.mxu0 %v1659
        %1929 = vmatprep.mubr.bf16.mxu0 %v891
        %1930 = vmatmul.mubr.bf16.gmra.mrb[0].mxu0 %v890
        %v1931 = vpop.f32.mrb[0].mxu0
        %v1932 = vadd.f32 %v1889, %v1931
        %v1933 = vpop.f32.mrb[0].mxu0
        %v1934 = vadd.f32 %v1891, %v1933
        %v1935 = vpop.f32.mrb[0].mxu0
        %v1936 = vadd.f32 %v1893, %v1935
        %v1937 = vpop.f32.mrb[0].mxu0
        %v1938 = vadd.f32 %v1895, %v1937
        %1939 = vdwg.mxu0
        %1940 = vmatprep.subr.bf16.mxu0 %v1663
        %1941 = vmatpush1.bf16.msra.mxu0 %v1662
        %1942 = vmatprep.subr.bf16.mxu0 %v1666
        %1943 = vmatpush1.bf16.msra.mxu0 %v1665
        %1944 = vmatprep.subr.bf16.mxu0 %v1669
        %1945 = vmatpush1.bf16.msra.mxu0 %v1668
        %1946 = vmatprep.subr.bf16.mxu0 %v1672
        %1947 = vmatpush1.bf16.msra.mxu0 %v1671
        %1948 = vmatprep.subr.bf16.mxu0 %v1675
        %1949 = vmatpush1.bf16.msra.mxu0 %v1674
        %1950 = vmatprep.subr.bf16.mxu0 %v1678
        %1951 = vmatpush1.bf16.msra.mxu0 %v1677
        %1952 = vmatprep.subr.bf16.mxu0 %v1681
        %1953 = vmatpush1.bf16.msra.mxu0 %v1680
        %1954 = vmatprep.subr.bf16.mxu0 %v1684
        %1955 = vmatpush1.bf16.msra.mxu0 %v1683
        %1956 = vmatprep.subr.bf16.mxu0 %v1687
        %1957 = vmatpush1.bf16.msra.mxu0 %v1686
        %1958 = vmatprep.subr.bf16.mxu0 %v1690
        %1959 = vmatpush1.bf16.msra.mxu0 %v1689
        %1960 = vmatprep.subr.bf16.mxu0 %v1693
        %1961 = vmatpush1.bf16.msra.mxu0 %v1692
        %1962 = vmatprep.subr.bf16.mxu0 %v1696
        %1963 = vmatpush1.bf16.msra.mxu0 %v1695
        %1964 = vmatprep.subr.bf16.mxu0 %v1699
        %1965 = vmatpush1.bf16.msra.mxu0 %v1698
        %1966 = vmatprep.subr.bf16.mxu0 %v1702
        %1967 = vmatpush1.bf16.msra.mxu0 %v1701
        %1968 = vmatprep.subr.bf16.mxu0 %v1705
        %1969 = vmatpush1.bf16.msra.mxu0 %v1704
        %1970 = vmatprep.subr.bf16.mxu0 %v1708
        %1971 = vmatpush1.bf16.msra.mxu0 %v1707
        %1972 = vmatprep.mubr.bf16.mxu0 %v893
        %1973 = vmatmul.mubr.bf16.gmra.mrb[0].mxu0 %v892
        %v1974 = vpop.f32.mrb[0].mxu0
        %v1975 = vadd.f32 %v1932, %v1974
        %v1976 = vpop.f32.mrb[0].mxu0
        %v1977 = vadd.f32 %v1934, %v1976
        %v1978 = vpop.f32.mrb[0].mxu0
        %v1979 = vadd.f32 %v1936, %v1978
        %v1980 = vpop.f32.mrb[0].mxu0
        %v1981 = vadd.f32 %v1938, %v1980
        %1982 = vdwg.mxu0
        %1983 = vmatprep.subr.bf16.mxu0 0
        %1984 = vmatpush1.bf16.msra.mxu0 %v1568
        %1985 = vmatprep.subr.bf16.mxu0 0
        %1986 = vmatpush1.bf16.msra.mxu0 %v1571
        %1987 = vmatprep.subr.bf16.mxu0 0
        %1988 = vmatpush1.bf16.msra.mxu0 %v1574
        %1989 = vmatprep.subr.bf16.mxu0 0
        %1990 = vmatpush1.bf16.msra.mxu0 %v1577
        %1991 = vmatprep.subr.bf16.mxu0 0
        %1992 = vmatpush1.bf16.msra.mxu0 %v1580
        %1993 = vmatprep.subr.bf16.mxu0 0
        %1994 = vmatpush1.bf16.msra.mxu0 %v1583
        %1995 = vmatprep.subr.bf16.mxu0 0
        %1996 = vmatpush1.bf16.msra.mxu0 %v1586
        %1997 = vmatprep.subr.bf16.mxu0 0
        %1998 = vmatpush1.bf16.msra.mxu0 %v1589
        %1999 = vmatprep.subr.bf16.mxu0 0
        %2000 = vmatpush1.bf16.msra.mxu0 %v1592
        %2001 = vmatprep.subr.bf16.mxu0 0
        %2002 = vmatpush1.bf16.msra.mxu0 %v1595
        %2003 = vmatprep.subr.bf16.mxu0 0
        %2004 = vmatpush1.bf16.msra.mxu0 %v1598
        %2005 = vmatprep.subr.bf16.mxu0 0
        %2006 = vmatpush1.bf16.msra.mxu0 %v1601
        %2007 = vmatprep.subr.bf16.mxu0 0
        %2008 = vmatpush1.bf16.msra.mxu0 %v1604
        %2009 = vmatprep.subr.bf16.mxu0 0
        %2010 = vmatpush1.bf16.msra.mxu0 %v1607
        %2011 = vmatprep.subr.bf16.mxu0 0
        %2012 = vmatpush1.bf16.msra.mxu0 %v1610
        %2013 = vmatprep.subr.bf16.mxu0 0
        %2014 = vmatpush1.bf16.msra.mxu0 %v1613
        %2015 = vmatprep.mubr.bf16.mxu0 %v889
        %2016 = vmatmul.mubr.bf16.gmra.mrb[0].mxu0 %v888
        %v2017 = vpop.f32.mrb[0].mxu0
        %v2018 = vadd.f32 0.0, %v2017
        %v2019 = vpop.f32.mrb[0].mxu0
        %v2020 = vpop.f32.mrb[0].mxu0
        %v2021 = vadd.f32 0.0, %v2020
        %v2022 = vpop.f32.mrb[0].mxu0
        %2023 = vdwg.mxu0
        %2024 = vmatprep.subr.bf16.mxu0 0
        %2025 = vmatpush1.bf16.msra.mxu0 %v1616
        %2026 = vmatprep.subr.bf16.mxu0 0
        %2027 = vmatpush1.bf16.msra.mxu0 %v1619
        %2028 = vmatprep.subr.bf16.mxu0 0
        %2029 = vmatpush1.bf16.msra.mxu0 %v1622
        %2030 = vmatprep.subr.bf16.mxu0 0
        %2031 = vmatpush1.bf16.msra.mxu0 %v1625
        %2032 = vmatprep.subr.bf16.mxu0 0
        %2033 = vmatpush1.bf16.msra.mxu0 %v1628
        %2034 = vmatprep.subr.bf16.mxu0 0
        %2035 = vmatpush1.bf16.msra.mxu0 %v1631
        %2036 = vmatprep.subr.bf16.mxu0 0
        %2037 = vmatpush1.bf16.msra.mxu0 %v1634
        %2038 = vmatprep.subr.bf16.mxu0 0
        %2039 = vmatpush1.bf16.msra.mxu0 %v1637
        %2040 = vmatprep.subr.bf16.mxu0 0
        %2041 = vmatpush1.bf16.msra.mxu0 %v1640
        %2042 = vmatprep.subr.bf16.mxu0 0
        %2043 = vmatpush1.bf16.msra.mxu0 %v1643
        %2044 = vmatprep.subr.bf16.mxu0 0
        %2045 = vmatpush1.bf16.msra.mxu0 %v1646
        %2046 = vmatprep.subr.bf16.mxu0 0
        %2047 = vmatpush1.bf16.msra.mxu0 %v1649
        %2048 = vmatprep.subr.bf16.mxu0 0
        %2049 = vmatpush1.bf16.msra.mxu0 %v1652
        %2050 = vmatprep.subr.bf16.mxu0 0
        %2051 = vmatpush1.bf16.msra.mxu0 %v1655
        %2052 = vmatprep.subr.bf16.mxu0 0
        %2053 = vmatpush1.bf16.msra.mxu0 %v1658
        %2054 = vmatprep.subr.bf16.mxu0 0
        %2055 = vmatpush1.bf16.msra.mxu0 %v1661
        %2056 = vmatprep.mubr.bf16.mxu0 %v891
        %2057 = vmatmul.mubr.bf16.gmra.mrb[0].mxu0 %v890
        %v2058 = vpop.f32.mrb[0].mxu0
        %v2059 = vadd.f32 %v2018, %v2058
        %v2060 = vpop.f32.mrb[0].mxu0
        %v2061 = vpop.f32.mrb[0].mxu0
        %v2062 = vadd.f32 %v2021, %v2061
        %v2063 = vpop.f32.mrb[0].mxu0
        %2064 = vdwg.mxu0
        %2065 = vmatprep.subr.bf16.mxu0 0
        %2066 = vmatpush1.bf16.msra.mxu0 %v1664
        %2067 = vmatprep.subr.bf16.mxu0 0
        %2068 = vmatpush1.bf16.msra.mxu0 %v1667
        %2069 = vmatprep.subr.bf16.mxu0 0
        %2070 = vmatpush1.bf16.msra.mxu0 %v1670
        %2071 = vmatprep.subr.bf16.mxu0 0
        %2072 = vmatpush1.bf16.msra.mxu0 %v1673
        %2073 = vmatprep.subr.bf16.mxu0 0
        %2074 = vmatpush1.bf16.msra.mxu0 %v1676
        %2075 = vmatprep.subr.bf16.mxu0 0
        %2076 = vmatpush1.bf16.msra.mxu0 %v1679
        %2077 = vmatprep.subr.bf16.mxu0 0
        %2078 = vmatpush1.bf16.msra.mxu0 %v1682
        %2079 = vmatprep.subr.bf16.mxu0 0
        %2080 = vmatpush1.bf16.msra.mxu0 %v1685
        %2081 = vmatprep.subr.bf16.mxu0 0
        %2082 = vmatpush1.bf16.msra.mxu0 %v1688
        %2083 = vmatprep.subr.bf16.mxu0 0
        %2084 = vmatpush1.bf16.msra.mxu0 %v1691
        %2085 = vmatprep.subr.bf16.mxu0 0
        %2086 = vmatpush1.bf16.msra.mxu0 %v1694
        %2087 = vmatprep.subr.bf16.mxu0 0
        %2088 = vmatpush1.bf16.msra.mxu0 %v1697
        %2089 = vmatprep.subr.bf16.mxu0 0
        %2090 = vmatpush1.bf16.msra.mxu0 %v1700
        %2091 = vmatprep.subr.bf16.mxu0 0
        %2092 = vmatpush1.bf16.msra.mxu0 %v1703
        %2093 = vmatprep.subr.bf16.mxu0 0
        %2094 = vmatpush1.bf16.msra.mxu0 %v1706
        %2095 = vmatprep.subr.bf16.mxu0 0
        %2096 = vmatpush1.bf16.msra.mxu0 %v1709
        %2097 = vmatprep.mubr.bf16.mxu0 %v893
        %2098 = vmatmul.mubr.bf16.gmra.mrb[0].mxu0 %v892
        %v2099 = vpop.f32.mrb[0].mxu0
        %v2100 = vadd.f32 %v2059, %v2099
        %v2101 = vpop.f32.mrb[0].mxu0
        %v2102 = vpop.f32.mrb[0].mxu0
        %v2103 = vadd.f32 %v2062, %v2102
        %v2104 = vpop.f32.mrb[0].mxu0
        %2105 = vdwg.mxu0
        %v2106 = vrot.slane %v1977, 7
        %v2107 = vrot.slane %v1981, 7
        %v2108 = vlaneseq
        %v2109 = vshrl.u32 %v2108, 7
        %vm2110 = vcmp.lt.s32.totalorder %v2109, 1
        %v2111 = vsel %vm2110, %v2106, %v2107
        %v2112 = vsel %vm2110, %v2107, %v2106
        %v2113 = vadd.s32 %v2109, 8
        %vm2114 = vcmp.ge.s32.totalorder %v2109, 1
        %vm2115 = vcmp.ge.s32.totalorder %v2113, 1
        %v2116 = vsel %vm2114, %v2112, 0.0
        %v2117 = vsel %vm2115, %v2111, 0.0
        %v2118 = vadd.f32 %v1975, %v2116
        %v2119 = vadd.f32 %v1979, %v2117
        %v2120 = vld [vmem:[#allocation7] sm:$0x1]
        %v2122 = vlaneseq
        %v2123 = vshrl.u32 %v2122, 7
        %v2124 = vsub.s32 0, %v2123
        %v2125 = vrot.slane %v2120, %v2124
        %v2127 = vadd.f32 %v2118, %v2125
        %v2128 = vadd.f32 %v2119, %v2125
        %v2129 = vmax.f32 %v2127, 0.0
        %v2130 = vmax.f32 %v2128, 0.0
        %v2131 = vld [vmem:[#allocation8] sm:$0x1]
        %v2133 = vlaneseq
        %v2134 = vshrl.u32 %v2133, 7
        %v2135 = vsub.s32 0, %v2134
        %v2136 = vrot.slane %v2131, %v2135
        %v2138 = vadd.f32 %v2100, %v2136
        %v2139 = vadd.f32 %v2103, %v2136
        %v2140 = vrot.slane %v2129, 7
        %v2141 = vrot.slane %v2130, 7
        %v2142 = vsel %vm2110, %v2140, %v2141
        %v2143 = vsel %vm2110, %v2141, %v2140
        %v2144 = vsel %vm2114, %v2143, 0.0
        %v2145 = vsel %vm2115, %v2142, 0.0
        %v2146 = vpack.c.bf16 %v2130, %v2129
        %v2147 = vpack.c.bf16 %v2145, %v2144
        %v2148 = vld [vmem:[#allocation10] sm:$0xf]
        %v2149 = vld [vmem:[#allocation10 + $0x4] sm:$0xf]
        %v2150 = vld [vmem:[#allocation10 + $0x8] sm:$0xf]
        %v2151 = vld [vmem:[#allocation10 + $0xc] sm:$0xf]
        %v2152 = vld [vmem:[#allocation10 + $0x10] sm:$0xf]
        %v2153 = vld [vmem:[#allocation10 + $0x14] sm:$0xf]
        %v2154 = vld [vmem:[#allocation10 + $0x18] sm:$0xf]
        %v2155 = vld [vmem:[#allocation10 + $0x1c] sm:$0xf]
        %v2156 = vld [vmem:[#allocation10 + $0x20] sm:$0xf]
        %v2157 = vld [vmem:[#allocation10 + $0x24] sm:$0xf]
        %v2158 = vld [vmem:[#allocation10 + $0x28] sm:$0xf]
        %v2159 = vld [vmem:[#allocation10 + $0x2c] sm:$0xf]
        %v2160 = vld [vmem:[#allocation10 + $0x30] sm:$0xf]
        %v2161 = vld [vmem:[#allocation10 + $0x34] sm:$0xf]
        %v2162 = vld [vmem:[#allocation10 + $0x38] sm:$0xf]
        %v2163 = vld [vmem:[#allocation10 + $0x3c] sm:$0xf]
        %v2164 = vld [vmem:[#allocation10 + $0x40] sm:$0xf]
        %v2165 = vld [vmem:[#allocation10 + $0x44] sm:$0xf]
        %v2166 = vld [vmem:[#allocation10 + $0x48] sm:$0xf]
        %v2167 = vld [vmem:[#allocation10 + $0x4c] sm:$0xf]
        %v2168 = vld [vmem:[#allocation10 + $0x50] sm:$0xf]
        %v2169 = vld [vmem:[#allocation10 + $0x54] sm:$0xf]
        %v2170 = vld [vmem:[#allocation10 + $0x58] sm:$0xf]
        %v2171 = vld [vmem:[#allocation10 + $0x5c] sm:$0xf]
        %v2172 = vld [vmem:[#allocation10 + $0x60] sm:$0xf]
        %v2173 = vld [vmem:[#allocation10 + $0x64] sm:$0xf]
        %v2174 = vld [vmem:[#allocation10 + $0x68] sm:$0xf]
        %v2175 = vld [vmem:[#allocation10 + $0x6c] sm:$0xf]
        %v2176 = vld [vmem:[#allocation10 + $0x70] sm:$0xf]
        %v2177 = vld [vmem:[#allocation10 + $0x74] sm:$0xf]
        %v2178 = vld [vmem:[#allocation10 + $0x78] sm:$0xf]
        %v2179 = vld [vmem:[#allocation10 + $0x7c] sm:$0xf]
        %v2180 = vld [vmem:[#allocation11] sm:$0x1]
        %v2182 = vlaneseq
        %v2183 = vshrl.u32 %v2182, 7
        %v2184 = vsub.s32 0, %v2183
        %v2185 = vrot.slane %v2180, %v2184
        %v2219 = vunpack.c.l.b16 %v2148
        %v2220 = vunpack.c.l.b16 %v2149
        %v2221 = vunpack.c.l.b16 %v2150
        %v2222 = vunpack.c.l.b16 %v2151
        %v2223 = vunpack.c.l.b16 %v2152
        %v2224 = vunpack.c.l.b16 %v2153
        %v2225 = vunpack.c.l.b16 %v2154
        %v2226 = vunpack.c.l.b16 %v2155
        %v2227 = vunpack.c.l.b16 %v2156
        %v2228 = vunpack.c.l.b16 %v2157
        %v2229 = vunpack.c.l.b16 %v2158
        %v2230 = vunpack.c.l.b16 %v2159
        %v2231 = vunpack.c.l.b16 %v2160
        %v2232 = vunpack.c.l.b16 %v2161
        %v2233 = vunpack.c.l.b16 %v2162
        %v2234 = vunpack.c.l.b16 %v2163
        %v2235 = vunpack.c.l.b16 %v2164
        %v2236 = vunpack.c.l.b16 %v2165
        %v2237 = vunpack.c.l.b16 %v2166
        %v2238 = vunpack.c.l.b16 %v2167
        %v2239 = vunpack.c.l.b16 %v2168
        %v2240 = vunpack.c.l.b16 %v2169
        %v2241 = vunpack.c.l.b16 %v2170
        %v2242 = vunpack.c.l.b16 %v2171
        %v2243 = vunpack.c.l.b16 %v2172
        %v2244 = vunpack.c.l.b16 %v2173
        %v2245 = vunpack.c.l.b16 %v2174
        %v2246 = vunpack.c.l.b16 %v2175
        %v2247 = vunpack.c.l.b16 %v2176
        %v2248 = vunpack.c.l.b16 %v2177
        %v2249 = vunpack.c.l.b16 %v2178
        %v2250 = vunpack.c.l.b16 %v2179
        %v2251 = vpack.c.b16 %v2220, %v2219
        %v2252 = vpack.c.b16 %v2222, %v2221
        %v2253 = vpack.c.b16 %v2224, %v2223
        %v2254 = vpack.c.b16 %v2226, %v2225
        %v2255 = vpack.c.b16 %v2228, %v2227
        %v2256 = vpack.c.b16 %v2230, %v2229
        %v2257 = vpack.c.b16 %v2232, %v2231
        %v2258 = vpack.c.b16 %v2234, %v2233
        %v2259 = vpack.c.b16 %v2236, %v2235
        %v2260 = vpack.c.b16 %v2238, %v2237
        %v2261 = vpack.c.b16 %v2240, %v2239
        %v2262 = vpack.c.b16 %v2242, %v2241
        %v2263 = vpack.c.b16 %v2244, %v2243
        %v2264 = vpack.c.b16 %v2246, %v2245
        %v2265 = vpack.c.b16 %v2248, %v2247
        %v2266 = vpack.c.b16 %v2250, %v2249
        %2283 = vmatprep.subr.bf16.mxu0 0
        %2284 = vmatpush1.bf16.msra.mxu0 %v2251
        %2285 = vmatprep.subr.bf16.mxu0 0
        %2286 = vmatpush1.bf16.msra.mxu0 %v2252
        %2287 = vmatprep.subr.bf16.mxu0 0
        %2288 = vmatpush1.bf16.msra.mxu0 %v2253
        %2289 = vmatprep.subr.bf16.mxu0 0
        %2290 = vmatpush1.bf16.msra.mxu0 %v2254
        %2291 = vmatprep.subr.bf16.mxu0 0
        %2292 = vmatpush1.bf16.msra.mxu0 %v2255
        %2293 = vmatprep.subr.bf16.mxu0 0
        %2294 = vmatpush1.bf16.msra.mxu0 %v2256
        %2295 = vmatprep.subr.bf16.mxu0 0
        %2296 = vmatpush1.bf16.msra.mxu0 %v2257
        %2297 = vmatprep.subr.bf16.mxu0 0
        %2298 = vmatpush1.bf16.msra.mxu0 %v2258
        %2299 = vmatprep.subr.bf16.mxu0 0
        %2300 = vmatpush1.bf16.msra.mxu0 %v2259
        %2301 = vmatprep.subr.bf16.mxu0 0
        %2302 = vmatpush1.bf16.msra.mxu0 %v2260
        %2303 = vmatprep.subr.bf16.mxu0 0
        %2304 = vmatpush1.bf16.msra.mxu0 %v2261
        %2305 = vmatprep.subr.bf16.mxu0 0
        %2306 = vmatpush1.bf16.msra.mxu0 %v2262
        %2307 = vmatprep.subr.bf16.mxu0 0
        %2308 = vmatpush1.bf16.msra.mxu0 %v2263
        %2309 = vmatprep.subr.bf16.mxu0 0
        %2310 = vmatpush1.bf16.msra.mxu0 %v2264
        %2311 = vmatprep.subr.bf16.mxu0 0
        %2312 = vmatpush1.bf16.msra.mxu0 %v2265
        %2313 = vmatprep.subr.bf16.mxu0 0
        %2314 = vmatpush1.bf16.msra.mxu0 %v2266
        %2315 = vmatprep.mubr.bf16.mxu0 %v2147
        %2316 = vmatmul.mubr.bf16.gmra.mrb[0].mxu0 %v2146
        %v2317 = vpop.f32.mrb[0].mxu0
        %v2318 = vadd.f32 %v2185, %v2317
        %v2319 = vpop.f32.mrb[0].mxu0
        %v2320 = vpop.f32.mrb[0].mxu0
        %v2321 = vadd.f32 %v2185, %v2320
        %v2322 = vpop.f32.mrb[0].mxu0
        %2323 = vdwg.mxu0
        %v2324 = vmax.f32 %v2318, 0.0
        %v2325 = vmax.f32 %v2321, 0.0
        %v2326 = vadd.f32 %v2324, %v2138
        %v2327 = vadd.f32 %v2325, %v2139
        %v2328 = vmax.f32 %v2326, 0.0
        %v2329 = vmax.f32 %v2327, 0.0
        %v2330 = vrot.slane %v2328, 6
        %v2331 = vrot.slane %v2329, 6
        %vm2332 = vcmp.lt.s32.totalorder %v2109, 2
        %v2333 = vsel %vm2332, %v2330, %v2331
        %v2334 = vsel %vm2332, %v2331, %v2330
        %vm2335 = vcmp.ge.s32.totalorder %v2109, 2
        %vm2336 = vcmp.ge.s32.totalorder %v2113, 2
        %v2337 = vsel %vm2335, %v2334, 0.0
        %v2338 = vsel %vm2336, %v2333, 0.0
        %v2339 = vpack.c.bf16 %v2329, %v2328
        %v2340 = vpack.c.bf16 %v2338, %v2337
        %v2341 = vld [vmem:[#allocation13] sm:$0xf]
        %v2342 = vld [vmem:[#allocation13 + $0x4] sm:$0xf]
        %v2343 = vld [vmem:[#allocation13 + $0x8] sm:$0xf]
        %v2344 = vld [vmem:[#allocation13 + $0xc] sm:$0xf]
        %v2345 = vld [vmem:[#allocation13 + $0x10] sm:$0xf]
        %v2346 = vld [vmem:[#allocation13 + $0x14] sm:$0xf]
        %v2347 = vld [vmem:[#allocation13 + $0x18] sm:$0xf]
        %v2348 = vld [vmem:[#allocation13 + $0x1c] sm:$0xf]
        %v2349 = vld [vmem:[#allocation13 + $0x20] sm:$0xf]
        %v2350 = vld [vmem:[#allocation13 + $0x24] sm:$0xf]
        %v2351 = vld [vmem:[#allocation13 + $0x28] sm:$0xf]
        %v2352 = vld [vmem:[#allocation13 + $0x2c] sm:$0xf]
        %v2353 = vld [vmem:[#allocation13 + $0x30] sm:$0xf]
        %v2354 = vld [vmem:[#allocation13 + $0x34] sm:$0xf]
        %v2355 = vld [vmem:[#allocation13 + $0x38] sm:$0xf]
        %v2356 = vld [vmem:[#allocation13 + $0x3c] sm:$0xf]
        %v2357 = vld [vmem:[#allocation13 + $0x40] sm:$0xf]
        %v2358 = vld [vmem:[#allocation13 + $0x44] sm:$0xf]
        %v2359 = vld [vmem:[#allocation13 + $0x48] sm:$0xf]
        %v2360 = vld [vmem:[#allocation13 + $0x4c] sm:$0xf]
        %v2361 = vld [vmem:[#allocation13 + $0x50] sm:$0xf]
        %v2362 = vld [vmem:[#allocation13 + $0x54] sm:$0xf]
        %v2363 = vld [vmem:[#allocation13 + $0x58] sm:$0xf]
        %v2364 = vld [vmem:[#allocation13 + $0x5c] sm:$0xf]
        %v2365 = vld [vmem:[#allocation13 + $0x60] sm:$0xf]
        %v2366 = vld [vmem:[#allocation13 + $0x64] sm:$0xf]
        %v2367 = vld [vmem:[#allocation13 + $0x68] sm:$0xf]
        %v2368 = vld [vmem:[#allocation13 + $0x6c] sm:$0xf]
        %v2369 = vld [vmem:[#allocation13 + $0x70] sm:$0xf]
        %v2370 = vld [vmem:[#allocation13 + $0x74] sm:$0xf]
        %v2371 = vld [vmem:[#allocation13 + $0x78] sm:$0xf]
        %v2372 = vld [vmem:[#allocation13 + $0x7c] sm:$0xf]
        %v2373 = vld [vmem:[#allocation14] sm:$0x1]
        %v2375 = vlaneseq
        %v2376 = vshrl.u32 %v2375, 7
        %v2377 = vsub.s32 0, %v2376
        %v2378 = vrot.slane %v2373, %v2377
        %v2412 = vunpack.c.l.b16 %v2341
        %v2413 = vunpack.c.l.b16 %v2342
        %v2414 = vunpack.c.l.b16 %v2343
        %v2415 = vunpack.c.l.b16 %v2344
        %v2416 = vunpack.c.l.b16 %v2345
        %v2417 = vunpack.c.l.b16 %v2346
        %v2418 = vunpack.c.l.b16 %v2347
        %v2419 = vunpack.c.l.b16 %v2348
        %v2420 = vunpack.c.l.b16 %v2349
        %v2421 = vunpack.c.l.b16 %v2350
        %v2422 = vunpack.c.l.b16 %v2351
        %v2423 = vunpack.c.l.b16 %v2352
        %v2424 = vunpack.c.l.b16 %v2353
        %v2425 = vunpack.c.l.b16 %v2354
        %v2426 = vunpack.c.l.b16 %v2355
        %v2427 = vunpack.c.l.b16 %v2356
        %v2428 = vunpack.c.l.b16 %v2357
        %v2429 = vunpack.c.l.b16 %v2358
        %v2430 = vunpack.c.l.b16 %v2359
        %v2431 = vunpack.c.l.b16 %v2360
        %v2432 = vunpack.c.l.b16 %v2361
        %v2433 = vunpack.c.l.b16 %v2362
        %v2434 = vunpack.c.l.b16 %v2363
        %v2435 = vunpack.c.l.b16 %v2364
        %v2436 = vunpack.c.l.b16 %v2365
        %v2437 = vunpack.c.l.b16 %v2366
        %v2438 = vunpack.c.l.b16 %v2367
        %v2439 = vunpack.c.l.b16 %v2368
        %v2440 = vunpack.c.l.b16 %v2369
        %v2441 = vunpack.c.l.b16 %v2370
        %v2442 = vunpack.c.l.b16 %v2371
        %v2443 = vunpack.c.l.b16 %v2372
        %v2444 = vpack.c.b16 %v2413, %v2412
        %v2445 = vpack.c.b16 %v2415, %v2414
        %v2446 = vpack.c.b16 %v2417, %v2416
        %v2447 = vpack.c.b16 %v2419, %v2418
        %v2448 = vpack.c.b16 %v2421, %v2420
        %v2449 = vpack.c.b16 %v2423, %v2422
        %v2450 = vpack.c.b16 %v2425, %v2424
        %v2451 = vpack.c.b16 %v2427, %v2426
        %v2452 = vpack.c.b16 %v2429, %v2428
        %v2453 = vpack.c.b16 %v2431, %v2430
        %v2454 = vpack.c.b16 %v2433, %v2432
        %v2455 = vpack.c.b16 %v2435, %v2434
        %v2456 = vpack.c.b16 %v2437, %v2436
        %v2457 = vpack.c.b16 %v2439, %v2438
        %v2458 = vpack.c.b16 %v2441, %v2440
        %v2459 = vpack.c.b16 %v2443, %v2442
        %2476 = vmatprep.subr.bf16.mxu0 0
        %2477 = vmatpush1.bf16.msra.mxu0 %v2444
        %2478 = vmatprep.subr.bf16.mxu0 0
        %2479 = vmatpush1.bf16.msra.mxu0 %v2445
        %2480 = vmatprep.subr.bf16.mxu0 0
        %2481 = vmatpush1.bf16.msra.mxu0 %v2446
        %2482 = vmatprep.subr.bf16.mxu0 0
        %2483 = vmatpush1.bf16.msra.mxu0 %v2447
        %2484 = vmatprep.subr.bf16.mxu0 0
        %2485 = vmatpush1.bf16.msra.mxu0 %v2448
        %2486 = vmatprep.subr.bf16.mxu0 0
        %2487 = vmatpush1.bf16.msra.mxu0 %v2449
        %2488 = vmatprep.subr.bf16.mxu0 0
        %2489 = vmatpush1.bf16.msra.mxu0 %v2450
        %2490 = vmatprep.subr.bf16.mxu0 0
        %2491 = vmatpush1.bf16.msra.mxu0 %v2451
        %2492 = vmatprep.subr.bf16.mxu0 0
        %2493 = vmatpush1.bf16.msra.mxu0 %v2452
        %2494 = vmatprep.subr.bf16.mxu0 0
        %2495 = vmatpush1.bf16.msra.mxu0 %v2453
        %2496 = vmatprep.subr.bf16.mxu0 0
        %2497 = vmatpush1.bf16.msra.mxu0 %v2454
        %2498 = vmatprep.subr.bf16.mxu0 0
        %2499 = vmatpush1.bf16.msra.mxu0 %v2455
        %2500 = vmatprep.subr.bf16.mxu0 0
        %2501 = vmatpush1.bf16.msra.mxu0 %v2456
        %2502 = vmatprep.subr.bf16.mxu0 0
        %2503 = vmatpush1.bf16.msra.mxu0 %v2457
        %2504 = vmatprep.subr.bf16.mxu0 0
        %2505 = vmatpush1.bf16.msra.mxu0 %v2458
        %2506 = vmatprep.subr.bf16.mxu0 0
        %2507 = vmatpush1.bf16.msra.mxu0 %v2459
        %2508 = vmatprep.mubr.bf16.mxu0 %v2340
        %2509 = vmatmul.mubr.bf16.gmra.mrb[0].mxu0 %v2339
        %v2510 = vpop.f32.mrb[0].mxu0
        %v2511 = vadd.f32 %v2378, %v2510
        %v2512 = vpop.f32.mrb[0].mxu0
        %v2513 = vpop.f32.mrb[0].mxu0
        %v2514 = vadd.f32 %v2378, %v2513
        %v2515 = vpop.f32.mrb[0].mxu0
        %2516 = vdwg.mxu0
        %v2517 = vmax.f32 %v2511, 0.0
        %v2518 = vmax.f32 %v2514, 0.0
        %v2519 = vrot.slane %v2517, 6
        %v2520 = vrot.slane %v2518, 6
        %v2521 = vsel %vm2332, %v2519, %v2520
        %v2522 = vsel %vm2332, %v2520, %v2519
        %v2523 = vsel %vm2335, %v2522, 0.0
        %v2524 = vsel %vm2336, %v2521, 0.0
        %v2525 = vpack.c.bf16 %v2518, %v2517
        %v2526 = vpack.c.bf16 %v2524, %v2523
        %v2527 = vld [vmem:[#allocation16] sm:$0xf]
        %v2528 = vld [vmem:[#allocation16 + $0x4] sm:$0xf]
        %v2529 = vld [vmem:[#allocation16 + $0x8] sm:$0xf]
        %v2530 = vld [vmem:[#allocation16 + $0xc] sm:$0xf]
        %v2531 = vld [vmem:[#allocation16 + $0x10] sm:$0xf]
        %v2532 = vld [vmem:[#allocation16 + $0x14] sm:$0xf]
        %v2533 = vld [vmem:[#allocation16 + $0x18] sm:$0xf]
        %v2534 = vld [vmem:[#allocation16 + $0x1c] sm:$0xf]
        %v2535 = vld [vmem:[#allocation16 + $0x20] sm:$0xf]
        %v2536 = vld [vmem:[#allocation16 + $0x24] sm:$0xf]
        %v2537 = vld [vmem:[#allocation16 + $0x28] sm:$0xf]
        %v2538 = vld [vmem:[#allocation16 + $0x2c] sm:$0xf]
        %v2539 = vld [vmem:[#allocation16 + $0x30] sm:$0xf]
        %v2540 = vld [vmem:[#allocation16 + $0x34] sm:$0xf]
        %v2541 = vld [vmem:[#allocation16 + $0x38] sm:$0xf]
        %v2542 = vld [vmem:[#allocation16 + $0x3c] sm:$0xf]
        %v2543 = vld [vmem:[#allocation16 + $0x40] sm:$0xf]
        %v2544 = vld [vmem:[#allocation16 + $0x44] sm:$0xf]
        %v2545 = vld [vmem:[#allocation16 + $0x48] sm:$0xf]
        %v2546 = vld [vmem:[#allocation16 + $0x4c] sm:$0xf]
        %v2547 = vld [vmem:[#allocation16 + $0x50] sm:$0xf]
        %v2548 = vld [vmem:[#allocation16 + $0x54] sm:$0xf]
        %v2549 = vld [vmem:[#allocation16 + $0x58] sm:$0xf]
        %v2550 = vld [vmem:[#allocation16 + $0x5c] sm:$0xf]
        %v2551 = vld [vmem:[#allocation16 + $0x60] sm:$0xf]
        %v2552 = vld [vmem:[#allocation16 + $0x64] sm:$0xf]
        %v2553 = vld [vmem:[#allocation16 + $0x68] sm:$0xf]
        %v2554 = vld [vmem:[#allocation16 + $0x6c] sm:$0xf]
        %v2555 = vld [vmem:[#allocation16 + $0x70] sm:$0xf]
        %v2556 = vld [vmem:[#allocation16 + $0x74] sm:$0xf]
        %v2557 = vld [vmem:[#allocation16 + $0x78] sm:$0xf]
        %v2558 = vld [vmem:[#allocation16 + $0x7c] sm:$0xf]
        %v2559 = vld [vmem:[#allocation17] sm:$0x1]
        %v2561 = vlaneseq
        %v2562 = vshrl.u32 %v2561, 7
        %v2563 = vsub.s32 0, %v2562
        %v2564 = vrot.slane %v2559, %v2563
        %v2598 = vunpack.c.l.b16 %v2527
        %v2599 = vunpack.c.l.b16 %v2528
        %v2600 = vunpack.c.l.b16 %v2529
        %v2601 = vunpack.c.l.b16 %v2530
        %v2602 = vunpack.c.l.b16 %v2531
        %v2603 = vunpack.c.l.b16 %v2532
        %v2604 = vunpack.c.l.b16 %v2533
        %v2605 = vunpack.c.l.b16 %v2534
        %v2606 = vunpack.c.l.b16 %v2535
        %v2607 = vunpack.c.l.b16 %v2536
        %v2608 = vunpack.c.l.b16 %v2537
        %v2609 = vunpack.c.l.b16 %v2538
        %v2610 = vunpack.c.l.b16 %v2539
        %v2611 = vunpack.c.l.b16 %v2540
        %v2612 = vunpack.c.l.b16 %v2541
        %v2613 = vunpack.c.l.b16 %v2542
        %v2614 = vunpack.c.l.b16 %v2543
        %v2615 = vunpack.c.l.b16 %v2544
        %v2616 = vunpack.c.l.b16 %v2545
        %v2617 = vunpack.c.l.b16 %v2546
        %v2618 = vunpack.c.l.b16 %v2547
        %v2619 = vunpack.c.l.b16 %v2548
        %v2620 = vunpack.c.l.b16 %v2549
        %v2621 = vunpack.c.l.b16 %v2550
        %v2622 = vunpack.c.l.b16 %v2551
        %v2623 = vunpack.c.l.b16 %v2552
        %v2624 = vunpack.c.l.b16 %v2553
        %v2625 = vunpack.c.l.b16 %v2554
        %v2626 = vunpack.c.l.b16 %v2555
        %v2627 = vunpack.c.l.b16 %v2556
        %v2628 = vunpack.c.l.b16 %v2557
        %v2629 = vunpack.c.l.b16 %v2558
        %v2630 = vpack.c.b16 %v2599, %v2598
        %v2631 = vpack.c.b16 %v2601, %v2600
        %v2632 = vpack.c.b16 %v2603, %v2602
        %v2633 = vpack.c.b16 %v2605, %v2604
        %v2634 = vpack.c.b16 %v2607, %v2606
        %v2635 = vpack.c.b16 %v2609, %v2608
        %v2636 = vpack.c.b16 %v2611, %v2610
        %v2637 = vpack.c.b16 %v2613, %v2612
        %v2638 = vpack.c.b16 %v2615, %v2614
        %v2639 = vpack.c.b16 %v2617, %v2616
        %v2640 = vpack.c.b16 %v2619, %v2618
        %v2641 = vpack.c.b16 %v2621, %v2620
        %v2642 = vpack.c.b16 %v2623, %v2622
        %v2643 = vpack.c.b16 %v2625, %v2624
        %v2644 = vpack.c.b16 %v2627, %v2626
        %v2645 = vpack.c.b16 %v2629, %v2628
        %2662 = vmatprep.subr.bf16.mxu0 0
        %2663 = vmatpush1.bf16.msra.mxu0 %v2630
        %2664 = vmatprep.subr.bf16.mxu0 0
        %2665 = vmatpush1.bf16.msra.mxu0 %v2631
        %2666 = vmatprep.subr.bf16.mxu0 0
        %2667 = vmatpush1.bf16.msra.mxu0 %v2632
        %2668 = vmatprep.subr.bf16.mxu0 0
        %2669 = vmatpush1.bf16.msra.mxu0 %v2633
        %2670 = vmatprep.subr.bf16.mxu0 0
        %2671 = vmatpush1.bf16.msra.mxu0 %v2634
        %2672 = vmatprep.subr.bf16.mxu0 0
        %2673 = vmatpush1.bf16.msra.mxu0 %v2635
        %2674 = vmatprep.subr.bf16.mxu0 0
        %2675 = vmatpush1.bf16.msra.mxu0 %v2636
        %2676 = vmatprep.subr.bf16.mxu0 0
        %2677 = vmatpush1.bf16.msra.mxu0 %v2637
        %2678 = vmatprep.subr.bf16.mxu0 0
        %2679 = vmatpush1.bf16.msra.mxu0 %v2638
        %2680 = vmatprep.subr.bf16.mxu0 0
        %2681 = vmatpush1.bf16.msra.mxu0 %v2639
        %2682 = vmatprep.subr.bf16.mxu0 0
        %2683 = vmatpush1.bf16.msra.mxu0 %v2640
        %2684 = vmatprep.subr.bf16.mxu0 0
        %2685 = vmatpush1.bf16.msra.mxu0 %v2641
        %2686 = vmatprep.subr.bf16.mxu0 0
        %2687 = vmatpush1.bf16.msra.mxu0 %v2642
        %2688 = vmatprep.subr.bf16.mxu0 0
        %2689 = vmatpush1.bf16.msra.mxu0 %v2643
        %2690 = vmatprep.subr.bf16.mxu0 0
        %2691 = vmatpush1.bf16.msra.mxu0 %v2644
        %2692 = vmatprep.subr.bf16.mxu0 0
        %2693 = vmatpush1.bf16.msra.mxu0 %v2645
        %2694 = vmatprep.mubr.bf16.mxu0 %v2526
        %2695 = vmatmul.mubr.bf16.gmra.mrb[0].mxu0 %v2525
        %v2696 = vpop.f32.mrb[0].mxu0
        %v2697 = vadd.f32 %v2564, %v2696
        %v2698 = vpop.f32.mrb[0].mxu0
        %v2699 = vpop.f32.mrb[0].mxu0
        %v2700 = vadd.f32 %v2564, %v2699
        %v2701 = vpop.f32.mrb[0].mxu0
        %2702 = vdwg.mxu0
        %v2703 = vmax.f32 %v2697, 0.0
        %v2704 = vmax.f32 %v2700, 0.0
        %v2705 = vadd.f32 %v2703, %v2328
        %v2706 = vadd.f32 %v2704, %v2329
        %v2707 = vmax.f32 %v2705, 0.0
        %v2708 = vmax.f32 %v2706, 0.0
        %v2709 = vrot.slane %v2707, 4
        %v2710 = vrot.slane %v2708, 4
        %vm2711 = vcmp.lt.s32.totalorder %v2109, 4
        %v2712 = vsel %vm2711, %v2709, %v2710
        %v2713 = vsel %vm2711, %v2710, %v2709
        %vm2714 = vcmp.ge.s32.totalorder %v2109, 4
        %vm2715 = vcmp.ge.s32.totalorder %v2113, 4
        %v2716 = vsel %vm2714, %v2713, 0.0
        %v2717 = vsel %vm2715, %v2712, 0.0
        %v2718 = vpack.c.bf16 %v2708, %v2707
        %v2719 = vpack.c.bf16 %v2717, %v2716
        %v2720 = vld [vmem:[#allocation19] sm:$0xf]
        %v2721 = vld [vmem:[#allocation19 + $0x4] sm:$0xf]
        %v2722 = vld [vmem:[#allocation19 + $0x8] sm:$0xf]
        %v2723 = vld [vmem:[#allocation19 + $0xc] sm:$0xf]
        %v2724 = vld [vmem:[#allocation19 + $0x10] sm:$0xf]
        %v2725 = vld [vmem:[#allocation19 + $0x14] sm:$0xf]
        %v2726 = vld [vmem:[#allocation19 + $0x18] sm:$0xf]
        %v2727 = vld [vmem:[#allocation19 + $0x1c] sm:$0xf]
        %v2728 = vld [vmem:[#allocation19 + $0x20] sm:$0xf]
        %v2729 = vld [vmem:[#allocation19 + $0x24] sm:$0xf]
        %v2730 = vld [vmem:[#allocation19 + $0x28] sm:$0xf]
        %v2731 = vld [vmem:[#allocation19 + $0x2c] sm:$0xf]
        %v2732 = vld [vmem:[#allocation19 + $0x30] sm:$0xf]
        %v2733 = vld [vmem:[#allocation19 + $0x34] sm:$0xf]
        %v2734 = vld [vmem:[#allocation19 + $0x38] sm:$0xf]
        %v2735 = vld [vmem:[#allocation19 + $0x3c] sm:$0xf]
        %v2736 = vld [vmem:[#allocation19 + $0x40] sm:$0xf]
        %v2737 = vld [vmem:[#allocation19 + $0x44] sm:$0xf]
        %v2738 = vld [vmem:[#allocation19 + $0x48] sm:$0xf]
        %v2739 = vld [vmem:[#allocation19 + $0x4c] sm:$0xf]
        %v2740 = vld [vmem:[#allocation19 + $0x50] sm:$0xf]
        %v2741 = vld [vmem:[#allocation19 + $0x54] sm:$0xf]
        %v2742 = vld [vmem:[#allocation19 + $0x58] sm:$0xf]
        %v2743 = vld [vmem:[#allocation19 + $0x5c] sm:$0xf]
        %v2744 = vld [vmem:[#allocation19 + $0x60] sm:$0xf]
        %v2745 = vld [vmem:[#allocation19 + $0x64] sm:$0xf]
        %v2746 = vld [vmem:[#allocation19 + $0x68] sm:$0xf]
        %v2747 = vld [vmem:[#allocation19 + $0x6c] sm:$0xf]
        %v2748 = vld [vmem:[#allocation19 + $0x70] sm:$0xf]
        %v2749 = vld [vmem:[#allocation19 + $0x74] sm:$0xf]
        %v2750 = vld [vmem:[#allocation19 + $0x78] sm:$0xf]
        %v2751 = vld [vmem:[#allocation19 + $0x7c] sm:$0xf]
        %v2752 = vld [vmem:[#allocation20] sm:$0x1]
        %v2754 = vlaneseq
        %v2755 = vshrl.u32 %v2754, 7
        %v2756 = vsub.s32 0, %v2755
        %v2757 = vrot.slane %v2752, %v2756
        %v2791 = vunpack.c.l.b16 %v2720
        %v2792 = vunpack.c.l.b16 %v2721
        %v2793 = vunpack.c.l.b16 %v2722
        %v2794 = vunpack.c.l.b16 %v2723
        %v2795 = vunpack.c.l.b16 %v2724
        %v2796 = vunpack.c.l.b16 %v2725
        %v2797 = vunpack.c.l.b16 %v2726
        %v2798 = vunpack.c.l.b16 %v2727
        %v2799 = vunpack.c.l.b16 %v2728
        %v2800 = vunpack.c.l.b16 %v2729
        %v2801 = vunpack.c.l.b16 %v2730
        %v2802 = vunpack.c.l.b16 %v2731
        %v2803 = vunpack.c.l.b16 %v2732
        %v2804 = vunpack.c.l.b16 %v2733
        %v2805 = vunpack.c.l.b16 %v2734
        %v2806 = vunpack.c.l.b16 %v2735
        %v2807 = vunpack.c.l.b16 %v2736
        %v2808 = vunpack.c.l.b16 %v2737
        %v2809 = vunpack.c.l.b16 %v2738
        %v2810 = vunpack.c.l.b16 %v2739
        %v2811 = vunpack.c.l.b16 %v2740
        %v2812 = vunpack.c.l.b16 %v2741
        %v2813 = vunpack.c.l.b16 %v2742
        %v2814 = vunpack.c.l.b16 %v2743
        %v2815 = vunpack.c.l.b16 %v2744
        %v2816 = vunpack.c.l.b16 %v2745
        %v2817 = vunpack.c.l.b16 %v2746
        %v2818 = vunpack.c.l.b16 %v2747
        %v2819 = vunpack.c.l.b16 %v2748
        %v2820 = vunpack.c.l.b16 %v2749
        %v2821 = vunpack.c.l.b16 %v2750
        %v2822 = vunpack.c.l.b16 %v2751
        %v2823 = vpack.c.b16 %v2792, %v2791
        %v2824 = vpack.c.b16 %v2794, %v2793
        %v2825 = vpack.c.b16 %v2796, %v2795
        %v2826 = vpack.c.b16 %v2798, %v2797
        %v2827 = vpack.c.b16 %v2800, %v2799
        %v2828 = vpack.c.b16 %v2802, %v2801
        %v2829 = vpack.c.b16 %v2804, %v2803
        %v2830 = vpack.c.b16 %v2806, %v2805
        %v2831 = vpack.c.b16 %v2808, %v2807
        %v2832 = vpack.c.b16 %v2810, %v2809
        %v2833 = vpack.c.b16 %v2812, %v2811
        %v2834 = vpack.c.b16 %v2814, %v2813
        %v2835 = vpack.c.b16 %v2816, %v2815
        %v2836 = vpack.c.b16 %v2818, %v2817
        %v2837 = vpack.c.b16 %v2820, %v2819
        %v2838 = vpack.c.b16 %v2822, %v2821
        %2855 = vmatprep.subr.bf16.mxu0 0
        %2856 = vmatpush1.bf16.msra.mxu0 %v2823
        %2857 = vmatprep.subr.bf16.mxu0 0
        %2858 = vmatpush1.bf16.msra.mxu0 %v2824
        %2859 = vmatprep.subr.bf16.mxu0 0
        %2860 = vmatpush1.bf16.msra.mxu0 %v2825
        %2861 = vmatprep.subr.bf16.mxu0 0
        %2862 = vmatpush1.bf16.msra.mxu0 %v2826
        %2863 = vmatprep.subr.bf16.mxu0 0
        %2864 = vmatpush1.bf16.msra.mxu0 %v2827
        %2865 = vmatprep.subr.bf16.mxu0 0
        %2866 = vmatpush1.bf16.msra.mxu0 %v2828
        %2867 = vmatprep.subr.bf16.mxu0 0
        %2868 = vmatpush1.bf16.msra.mxu0 %v2829
        %2869 = vmatprep.subr.bf16.mxu0 0
        %2870 = vmatpush1.bf16.msra.mxu0 %v2830
        %2871 = vmatprep.subr.bf16.mxu0 0
        %2872 = vmatpush1.bf16.msra.mxu0 %v2831
        %2873 = vmatprep.subr.bf16.mxu0 0
        %2874 = vmatpush1.bf16.msra.mxu0 %v2832
        %2875 = vmatprep.subr.bf16.mxu0 0
        %2876 = vmatpush1.bf16.msra.mxu0 %v2833
        %2877 = vmatprep.subr.bf16.mxu0 0
        %2878 = vmatpush1.bf16.msra.mxu0 %v2834
        %2879 = vmatprep.subr.bf16.mxu0 0
        %2880 = vmatpush1.bf16.msra.mxu0 %v2835
        %2881 = vmatprep.subr.bf16.mxu0 0
        %2882 = vmatpush1.bf16.msra.mxu0 %v2836
        %2883 = vmatprep.subr.bf16.mxu0 0
        %2884 = vmatpush1.bf16.msra.mxu0 %v2837
        %2885 = vmatprep.subr.bf16.mxu0 0
        %2886 = vmatpush1.bf16.msra.mxu0 %v2838
        %2887 = vmatprep.mubr.bf16.mxu0 %v2719
        %2888 = vmatmul.mubr.bf16.gmra.mrb[0].mxu0 %v2718
        %v2889 = vpop.f32.mrb[0].mxu0
        %v2890 = vadd.f32 %v2757, %v2889
        %v2891 = vpop.f32.mrb[0].mxu0
        %v2892 = vpop.f32.mrb[0].mxu0
        %v2893 = vadd.f32 %v2757, %v2892
        %v2894 = vpop.f32.mrb[0].mxu0
        %2895 = vdwg.mxu0
        %v2896 = vmax.f32 %v2890, 0.0
        %v2897 = vmax.f32 %v2893, 0.0
        %v2898 = vrot.slane %v2896, 4
        %v2899 = vrot.slane %v2897, 4
        %v2900 = vsel %vm2711, %v2898, %v2899
        %v2901 = vsel %vm2711, %v2899, %v2898
        %v2902 = vsel %vm2714, %v2901, 0.0
        %v2903 = vsel %vm2715, %v2900, 0.0
        %v2904 = vpack.c.bf16 %v2897, %v2896
        %v2905 = vpack.c.bf16 %v2903, %v2902
        %v2906 = vld [vmem:[%s12] sm:$0xf]
        %v2907 = vld [vmem:[%s12 + $0x4] sm:$0xf]
        %v2908 = vld [vmem:[%s12 + $0x8] sm:$0xf]
        %v2909 = vld [vmem:[%s12 + $0xc] sm:$0xf]
        %v2910 = vld [vmem:[%s12 + $0x10] sm:$0xf]
        %v2911 = vld [vmem:[%s12 + $0x14] sm:$0xf]
        %v2912 = vld [vmem:[%s12 + $0x18] sm:$0xf]
        %v2913 = vld [vmem:[%s12 + $0x1c] sm:$0xf]
        %v2914 = vld [vmem:[%s12 + $0x20] sm:$0xf]
        %v2915 = vld [vmem:[%s12 + $0x24] sm:$0xf]
        %v2916 = vld [vmem:[%s12 + $0x28] sm:$0xf]
        %v2917 = vld [vmem:[%s12 + $0x2c] sm:$0xf]
        %v2918 = vld [vmem:[%s12 + $0x30] sm:$0xf]
        %v2919 = vld [vmem:[%s12 + $0x34] sm:$0xf]
        %v2920 = vld [vmem:[%s12 + $0x38] sm:$0xf]
        %v2921 = vld [vmem:[%s12 + $0x3c] sm:$0xf]
        %v2922 = vld [vmem:[%s12 + $0x40] sm:$0xf]
        %v2923 = vld [vmem:[%s12 + $0x44] sm:$0xf]
        %v2924 = vld [vmem:[%s12 + $0x48] sm:$0xf]
        %v2925 = vld [vmem:[%s12 + $0x4c] sm:$0xf]
        %v2926 = vld [vmem:[%s12 + $0x50] sm:$0xf]
        %v2927 = vld [vmem:[%s12 + $0x54] sm:$0xf]
        %v2928 = vld [vmem:[%s12 + $0x58] sm:$0xf]
        %v2929 = vld [vmem:[%s12 + $0x5c] sm:$0xf]
        %v2930 = vld [vmem:[%s12 + $0x60] sm:$0xf]
        %v2931 = vld [vmem:[%s12 + $0x64] sm:$0xf]
        %v2932 = vld [vmem:[%s12 + $0x68] sm:$0xf]
        %v2933 = vld [vmem:[%s12 + $0x6c] sm:$0xf]
        %v2934 = vld [vmem:[%s12 + $0x70] sm:$0xf]
        %v2935 = vld [vmem:[%s12 + $0x74] sm:$0xf]
        %v2936 = vld [vmem:[%s12 + $0x78] sm:$0xf]
        %v2937 = vld [vmem:[%s12 + $0x7c] sm:$0xf]
        %v2938 = vld [vmem:[#allocation22] sm:$0x1]
        %v2940 = vlaneseq
        %v2941 = vshrl.u32 %v2940, 7
        %v2942 = vsub.s32 0, %v2941
        %v2943 = vrot.slane %v2938, %v2942
        %v2977 = vunpack.c.l.b16 %v2906
        %v2978 = vunpack.c.l.b16 %v2907
        %v2979 = vunpack.c.l.b16 %v2908
        %v2980 = vunpack.c.l.b16 %v2909
        %v2981 = vunpack.c.l.b16 %v2910
        %v2982 = vunpack.c.l.b16 %v2911
        %v2983 = vunpack.c.l.b16 %v2912
        %v2984 = vunpack.c.l.b16 %v2913
        %v2985 = vunpack.c.l.b16 %v2914
        %v2986 = vunpack.c.l.b16 %v2915
        %v2987 = vunpack.c.l.b16 %v2916
        %v2988 = vunpack.c.l.b16 %v2917
        %v2989 = vunpack.c.l.b16 %v2918
        %v2990 = vunpack.c.l.b16 %v2919
        %v2991 = vunpack.c.l.b16 %v2920
        %v2992 = vunpack.c.l.b16 %v2921
        %v2993 = vunpack.c.l.b16 %v2922
        %v2994 = vunpack.c.l.b16 %v2923
        %v2995 = vunpack.c.l.b16 %v2924
        %v2996 = vunpack.c.l.b16 %v2925
        %v2997 = vunpack.c.l.b16 %v2926
        %v2998 = vunpack.c.l.b16 %v2927
        %v2999 = vunpack.c.l.b16 %v2928
        %v3000 = vunpack.c.l.b16 %v2929
        %v3001 = vunpack.c.l.b16 %v2930
        %v3002 = vunpack.c.l.b16 %v2931
        %v3003 = vunpack.c.l.b16 %v2932
        %v3004 = vunpack.c.l.b16 %v2933
        %v3005 = vunpack.c.l.b16 %v2934
        %v3006 = vunpack.c.l.b16 %v2935
        %v3007 = vunpack.c.l.b16 %v2936
        %v3008 = vunpack.c.l.b16 %v2937
        %v3009 = vpack.c.b16 %v2978, %v2977
        %v3010 = vpack.c.b16 %v2980, %v2979
        %v3011 = vpack.c.b16 %v2982, %v2981
        %v3012 = vpack.c.b16 %v2984, %v2983
        %v3013 = vpack.c.b16 %v2986, %v2985
        %v3014 = vpack.c.b16 %v2988, %v2987
        %v3015 = vpack.c.b16 %v2990, %v2989
        %v3016 = vpack.c.b16 %v2992, %v2991
        %v3017 = vpack.c.b16 %v2994, %v2993
        %v3018 = vpack.c.b16 %v2996, %v2995
        %v3019 = vpack.c.b16 %v2998, %v2997
        %v3020 = vpack.c.b16 %v3000, %v2999
        %v3021 = vpack.c.b16 %v3002, %v3001
        %v3022 = vpack.c.b16 %v3004, %v3003
        %v3023 = vpack.c.b16 %v3006, %v3005
        %v3024 = vpack.c.b16 %v3008, %v3007
        %3041 = vmatprep.subr.bf16.mxu0 0
        %3042 = vmatpush1.bf16.msra.mxu0 %v3009
        %3043 = vmatprep.subr.bf16.mxu0 0
        %3044 = vmatpush1.bf16.msra.mxu0 %v3010
        %3045 = vmatprep.subr.bf16.mxu0 0
        %3046 = vmatpush1.bf16.msra.mxu0 %v3011
        %3047 = vmatprep.subr.bf16.mxu0 0
        %3048 = vmatpush1.bf16.msra.mxu0 %v3012
        %3049 = vmatprep.subr.bf16.mxu0 0
        %3050 = vmatpush1.bf16.msra.mxu0 %v3013
        %3051 = vmatprep.subr.bf16.mxu0 0
        %3052 = vmatpush1.bf16.msra.mxu0 %v3014
        %3053 = vmatprep.subr.bf16.mxu0 0
        %3054 = vmatpush1.bf16.msra.mxu0 %v3015
        %3055 = vmatprep.subr.bf16.mxu0 0
        %3056 = vmatpush1.bf16.msra.mxu0 %v3016
        %3057 = vmatprep.subr.bf16.mxu0 0
        %3058 = vmatpush1.bf16.msra.mxu0 %v3017
        %3059 = vmatprep.subr.bf16.mxu0 0
        %3060 = vmatpush1.bf16.msra.mxu0 %v3018
        %3061 = vmatprep.subr.bf16.mxu0 0
        %3062 = vmatpush1.bf16.msra.mxu0 %v3019
        %3063 = vmatprep.subr.bf16.mxu0 0
        %3064 = vmatpush1.bf16.msra.mxu0 %v3020
        %3065 = vmatprep.subr.bf16.mxu0 0
        %3066 = vmatpush1.bf16.msra.mxu0 %v3021
        %3067 = vmatprep.subr.bf16.mxu0 0
        %3068 = vmatpush1.bf16.msra.mxu0 %v3022
        %3069 = vmatprep.subr.bf16.mxu0 0
        %3070 = vmatpush1.bf16.msra.mxu0 %v3023
        %3071 = vmatprep.subr.bf16.mxu0 0
        %3072 = vmatpush1.bf16.msra.mxu0 %v3024
        %3073 = vmatprep.mubr.bf16.mxu0 %v2905
        %3074 = vmatmul.mubr.bf16.gmra.mrb[0].mxu0 %v2904
        %v3075 = vpop.f32.mrb[0].mxu0
        %v3076 = vadd.f32 %v2943, %v3075
        %v3077 = vpop.f32.mrb[0].mxu0
        %v3078 = vpop.f32.mrb[0].mxu0
        %v3079 = vadd.f32 %v2943, %v3078
        %v3080 = vpop.f32.mrb[0].mxu0
        %3081 = vdwg.mxu0
        %v3082 = vmax.f32 %v3076, 0.0
        %v3083 = vmax.f32 %v3079, 0.0
        %v3084 = vadd.f32 %v3082, %v2707
        %v3085 = vadd.f32 %v3083, %v2708
        %v3086 = vmax.f32 %v3084, 0.0
        %v3087 = vmax.f32 %v3085, 0.0
        %vm3088 = vcmp.ge.s32.totalorder %v2109, 8
        %vm3089 = vcmp.ge.s32.totalorder %v2113, 8
        %v3090 = vsel %vm3088, %v3087, 0.0
        %v3091 = vsel %vm3089, %v3086, 0.0
        %v3092 = vpack.c.bf16 %v3087, %v3086
        %v3093 = vpack.c.bf16 %v3091, %v3090
        %v3094 = vld [vmem:[#allocation23] sm:$0xf]
        %v3095 = vld [vmem:[#allocation23 + $0x4] sm:$0xf]
        %v3096 = vld [vmem:[#allocation23 + $0x8] sm:$0xf]
        %v3097 = vld [vmem:[#allocation23 + $0xc] sm:$0xf]
        %v3098 = vld [vmem:[#allocation23 + $0x10] sm:$0xf]
        %v3099 = vld [vmem:[#allocation23 + $0x14] sm:$0xf]
        %v3100 = vld [vmem:[#allocation23 + $0x18] sm:$0xf]
        %v3101 = vld [vmem:[#allocation23 + $0x1c] sm:$0xf]
        %v3102 = vld [vmem:[#allocation23 + $0x20] sm:$0xf]
        %v3103 = vld [vmem:[#allocation23 + $0x24] sm:$0xf]
        %v3104 = vld [vmem:[#allocation23 + $0x28] sm:$0xf]
        %v3105 = vld [vmem:[#allocation23 + $0x2c] sm:$0xf]
        %v3106 = vld [vmem:[#allocation23 + $0x30] sm:$0xf]
        %v3107 = vld [vmem:[#allocation23 + $0x34] sm:$0xf]
        %v3108 = vld [vmem:[#allocation23 + $0x38] sm:$0xf]
        %v3109 = vld [vmem:[#allocation23 + $0x3c] sm:$0xf]
        %v3110 = vld [vmem:[#allocation23 + $0x40] sm:$0xf]
        %v3111 = vld [vmem:[#allocation23 + $0x44] sm:$0xf]
        %v3112 = vld [vmem:[#allocation23 + $0x48] sm:$0xf]
        %v3113 = vld [vmem:[#allocation23 + $0x4c] sm:$0xf]
        %v3114 = vld [vmem:[#allocation23 + $0x50] sm:$0xf]
        %v3115 = vld [vmem:[#allocation23 + $0x54] sm:$0xf]
        %v3116 = vld [vmem:[#allocation23 + $0x58] sm:$0xf]
        %v3117 = vld [vmem:[#allocation23 + $0x5c] sm:$0xf]
        %v3118 = vld [vmem:[#allocation23 + $0x60] sm:$0xf]
        %v3119 = vld [vmem:[#allocation23 + $0x64] sm:$0xf]
        %v3120 = vld [vmem:[#allocation23 + $0x68] sm:$0xf]
        %v3121 = vld [vmem:[#allocation23 + $0x6c] sm:$0xf]
        %v3122 = vld [vmem:[#allocation23 + $0x70] sm:$0xf]
        %v3123 = vld [vmem:[#allocation23 + $0x74] sm:$0xf]
        %v3124 = vld [vmem:[#allocation23 + $0x78] sm:$0xf]
        %v3125 = vld [vmem:[#allocation23 + $0x7c] sm:$0xf]
        %v3126 = vld [vmem:[#allocation25] sm:$0x1]
        %v3128 = vlaneseq
        %v3129 = vshrl.u32 %v3128, 7
        %v3130 = vsub.s32 0, %v3129
        %v3131 = vrot.slane %v3126, %v3130
        %v3165 = vunpack.c.l.b16 %v3094
        %v3166 = vunpack.c.l.b16 %v3095
        %v3167 = vunpack.c.l.b16 %v3096
        %v3168 = vunpack.c.l.b16 %v3097
        %v3169 = vunpack.c.l.b16 %v3098
        %v3170 = vunpack.c.l.b16 %v3099
        %v3171 = vunpack.c.l.b16 %v3100
        %v3172 = vunpack.c.l.b16 %v3101
        %v3173 = vunpack.c.l.b16 %v3102
        %v3174 = vunpack.c.l.b16 %v3103
        %v3175 = vunpack.c.l.b16 %v3104
        %v3176 = vunpack.c.l.b16 %v3105
        %v3177 = vunpack.c.l.b16 %v3106
        %v3178 = vunpack.c.l.b16 %v3107
        %v3179 = vunpack.c.l.b16 %v3108
        %v3180 = vunpack.c.l.b16 %v3109
        %v3181 = vunpack.c.l.b16 %v3110
        %v3182 = vunpack.c.l.b16 %v3111
        %v3183 = vunpack.c.l.b16 %v3112
        %v3184 = vunpack.c.l.b16 %v3113
        %v3185 = vunpack.c.l.b16 %v3114
        %v3186 = vunpack.c.l.b16 %v3115
        %v3187 = vunpack.c.l.b16 %v3116
        %v3188 = vunpack.c.l.b16 %v3117
        %v3189 = vunpack.c.l.b16 %v3118
        %v3190 = vunpack.c.l.b16 %v3119
        %v3191 = vunpack.c.l.b16 %v3120
        %v3192 = vunpack.c.l.b16 %v3121
        %v3193 = vunpack.c.l.b16 %v3122
        %v3194 = vunpack.c.l.b16 %v3123
        %v3195 = vunpack.c.l.b16 %v3124
        %v3196 = vunpack.c.l.b16 %v3125
        %v3197 = vpack.c.b16 %v3166, %v3165
        %v3198 = vpack.c.b16 %v3168, %v3167
        %v3199 = vpack.c.b16 %v3170, %v3169
        %v3200 = vpack.c.b16 %v3172, %v3171
        %v3201 = vpack.c.b16 %v3174, %v3173
        %v3202 = vpack.c.b16 %v3176, %v3175
        %v3203 = vpack.c.b16 %v3178, %v3177
        %v3204 = vpack.c.b16 %v3180, %v3179
        %v3205 = vpack.c.b16 %v3182, %v3181
        %v3206 = vpack.c.b16 %v3184, %v3183
        %v3207 = vpack.c.b16 %v3186, %v3185
        %v3208 = vpack.c.b16 %v3188, %v3187
        %v3209 = vpack.c.b16 %v3190, %v3189
        %v3210 = vpack.c.b16 %v3192, %v3191
        %v3211 = vpack.c.b16 %v3194, %v3193
        %v3212 = vpack.c.b16 %v3196, %v3195
        %3229 = vmatprep.subr.bf16.mxu0 0
        %3230 = vmatpush1.bf16.msra.mxu0 %v3197
        %3231 = vmatprep.subr.bf16.mxu0 0
        %3232 = vmatpush1.bf16.msra.mxu0 %v3198
        %3233 = vmatprep.subr.bf16.mxu0 0
        %3234 = vmatpush1.bf16.msra.mxu0 %v3199
        %3235 = vmatprep.subr.bf16.mxu0 0
        %3236 = vmatpush1.bf16.msra.mxu0 %v3200
        %3237 = vmatprep.subr.bf16.mxu0 0
        %3238 = vmatpush1.bf16.msra.mxu0 %v3201
        %3239 = vmatprep.subr.bf16.mxu0 0
        %3240 = vmatpush1.bf16.msra.mxu0 %v3202
        %3241 = vmatprep.subr.bf16.mxu0 0
        %3242 = vmatpush1.bf16.msra.mxu0 %v3203
        %3243 = vmatprep.subr.bf16.mxu0 0
        %3244 = vmatpush1.bf16.msra.mxu0 %v3204
        %3245 = vmatprep.subr.bf16.mxu0 0
        %3246 = vmatpush1.bf16.msra.mxu0 %v3205
        %3247 = vmatprep.subr.bf16.mxu0 0
        %3248 = vmatpush1.bf16.msra.mxu0 %v3206
        %3249 = vmatprep.subr.bf16.mxu0 0
        %3250 = vmatpush1.bf16.msra.mxu0 %v3207
        %3251 = vmatprep.subr.bf16.mxu0 0
        %3252 = vmatpush1.bf16.msra.mxu0 %v3208
        %3253 = vmatprep.subr.bf16.mxu0 0
        %3254 = vmatpush1.bf16.msra.mxu0 %v3209
        %3255 = vmatprep.subr.bf16.mxu0 0
        %3256 = vmatpush1.bf16.msra.mxu0 %v3210
        %3257 = vmatprep.subr.bf16.mxu0 0
        %3258 = vmatpush1.bf16.msra.mxu0 %v3211
        %3259 = vmatprep.subr.bf16.mxu0 0
        %3260 = vmatpush1.bf16.msra.mxu0 %v3212
        %3261 = vmatprep.mubr.bf16.mxu0 %v3093
        %3262 = vmatmul.mubr.bf16.gmra.mrb[0].mxu0 %v3092
        %v3263 = vpop.f32.mrb[0].mxu0
        %v3264 = vadd.f32 %v3131, %v3263
        %v3265 = vpop.f32.mrb[0].mxu0
        %v3266 = vpop.f32.mrb[0].mxu0
        %v3267 = vadd.f32 %v3131, %v3266
        %v3268 = vpop.f32.mrb[0].mxu0
        %3269 = vdwg.mxu0
        %v3270 = vmax.f32 %v3264, 0.0
        %v3271 = vmax.f32 %v3267, 0.0
        %v3272 = vsel %vm3088, %v3271, 0.0
        %v3273 = vsel %vm3089, %v3270, 0.0
        %v3274 = vpack.c.bf16 %v3271, %v3270
        %v3275 = vpack.c.bf16 %v3273, %v3272
        %v3276 = vld [vmem:[#allocation26] sm:$0xf]
        %v3277 = vld [vmem:[#allocation26 + $0x4] sm:$0xf]
        %v3278 = vld [vmem:[#allocation26 + $0x8] sm:$0xf]
        %v3279 = vld [vmem:[#allocation26 + $0xc] sm:$0xf]
        %v3280 = vld [vmem:[#allocation26 + $0x10] sm:$0xf]
        %v3281 = vld [vmem:[#allocation26 + $0x14] sm:$0xf]
        %v3282 = vld [vmem:[#allocation26 + $0x18] sm:$0xf]
        %v3283 = vld [vmem:[#allocation26 + $0x1c] sm:$0xf]
        %v3284 = vld [vmem:[#allocation26 + $0x20] sm:$0xf]
        %v3285 = vld [vmem:[#allocation26 + $0x24] sm:$0xf]
        %v3286 = vld [vmem:[#allocation26 + $0x28] sm:$0xf]
        %v3287 = vld [vmem:[#allocation26 + $0x2c] sm:$0xf]
        %v3288 = vld [vmem:[#allocation26 + $0x30] sm:$0xf]
        %v3289 = vld [vmem:[#allocation26 + $0x34] sm:$0xf]
        %v3290 = vld [vmem:[#allocation26 + $0x38] sm:$0xf]
        %v3291 = vld [vmem:[#allocation26 + $0x3c] sm:$0xf]
        %v3292 = vld [vmem:[#allocation26 + $0x40] sm:$0xf]
        %v3293 = vld [vmem:[#allocation26 + $0x44] sm:$0xf]
        %v3294 = vld [vmem:[#allocation26 + $0x48] sm:$0xf]
        %v3295 = vld [vmem:[#allocation26 + $0x4c] sm:$0xf]
        %v3296 = vld [vmem:[#allocation26 + $0x50] sm:$0xf]
        %v3297 = vld [vmem:[#allocation26 + $0x54] sm:$0xf]
        %v3298 = vld [vmem:[#allocation26 + $0x58] sm:$0xf]
        %v3299 = vld [vmem:[#allocation26 + $0x5c] sm:$0xf]
        %v3300 = vld [vmem:[#allocation26 + $0x60] sm:$0xf]
        %v3301 = vld [vmem:[#allocation26 + $0x64] sm:$0xf]
        %v3302 = vld [vmem:[#allocation26 + $0x68] sm:$0xf]
        %v3303 = vld [vmem:[#allocation26 + $0x6c] sm:$0xf]
        %v3304 = vld [vmem:[#allocation26 + $0x70] sm:$0xf]
        %v3305 = vld [vmem:[#allocation26 + $0x74] sm:$0xf]
        %v3306 = vld [vmem:[#allocation26 + $0x78] sm:$0xf]
        %v3307 = vld [vmem:[#allocation26 + $0x7c] sm:$0xf]
        %v3308 = vld [vmem:[#allocation28] sm:$0x1]
        %v3310 = vlaneseq
        %v3311 = vshrl.u32 %v3310, 7
        %v3312 = vsub.s32 0, %v3311
        %v3313 = vrot.slane %v3308, %v3312
        %v3347 = vunpack.c.l.b16 %v3276
        %v3348 = vunpack.c.l.b16 %v3277
        %v3349 = vunpack.c.l.b16 %v3278
        %v3350 = vunpack.c.l.b16 %v3279
        %v3351 = vunpack.c.l.b16 %v3280
        %v3352 = vunpack.c.l.b16 %v3281
        %v3353 = vunpack.c.l.b16 %v3282
        %v3354 = vunpack.c.l.b16 %v3283
        %v3355 = vunpack.c.l.b16 %v3284
        %v3356 = vunpack.c.l.b16 %v3285
        %v3357 = vunpack.c.l.b16 %v3286
        %v3358 = vunpack.c.l.b16 %v3287
        %v3359 = vunpack.c.l.b16 %v3288
        %v3360 = vunpack.c.l.b16 %v3289
        %v3361 = vunpack.c.l.b16 %v3290
        %v3362 = vunpack.c.l.b16 %v3291
        %v3363 = vunpack.c.l.b16 %v3292
        %v3364 = vunpack.c.l.b16 %v3293
        %v3365 = vunpack.c.l.b16 %v3294
        %v3366 = vunpack.c.l.b16 %v3295
        %v3367 = vunpack.c.l.b16 %v3296
        %v3368 = vunpack.c.l.b16 %v3297
        %v3369 = vunpack.c.l.b16 %v3298
        %v3370 = vunpack.c.l.b16 %v3299
        %v3371 = vunpack.c.l.b16 %v3300
        %v3372 = vunpack.c.l.b16 %v3301
        %v3373 = vunpack.c.l.b16 %v3302
        %v3374 = vunpack.c.l.b16 %v3303
        %v3375 = vunpack.c.l.b16 %v3304
        %v3376 = vunpack.c.l.b16 %v3305
        %v3377 = vunpack.c.l.b16 %v3306
        %v3378 = vunpack.c.l.b16 %v3307
        %v3379 = vpack.c.b16 %v3348, %v3347
        %v3380 = vpack.c.b16 %v3350, %v3349
        %v3381 = vpack.c.b16 %v3352, %v3351
        %v3382 = vpack.c.b16 %v3354, %v3353
        %v3383 = vpack.c.b16 %v3356, %v3355
        %v3384 = vpack.c.b16 %v3358, %v3357
        %v3385 = vpack.c.b16 %v3360, %v3359
        %v3386 = vpack.c.b16 %v3362, %v3361
        %v3387 = vpack.c.b16 %v3364, %v3363
        %v3388 = vpack.c.b16 %v3366, %v3365
        %v3389 = vpack.c.b16 %v3368, %v3367
        %v3390 = vpack.c.b16 %v3370, %v3369
        %v3391 = vpack.c.b16 %v3372, %v3371
        %v3392 = vpack.c.b16 %v3374, %v3373
        %v3393 = vpack.c.b16 %v3376, %v3375
        %v3394 = vpack.c.b16 %v3378, %v3377
        %3411 = vmatprep.subr.bf16.mxu0 0
        %3412 = vmatpush1.bf16.msra.mxu0 %v3379
        %3413 = vmatprep.subr.bf16.mxu0 0
        %3414 = vmatpush1.bf16.msra.mxu0 %v3380
        %3415 = vmatprep.subr.bf16.mxu0 0
        %3416 = vmatpush1.bf16.msra.mxu0 %v3381
        %3417 = vmatprep.subr.bf16.mxu0 0
        %3418 = vmatpush1.bf16.msra.mxu0 %v3382
        %3419 = vmatprep.subr.bf16.mxu0 0
        %3420 = vmatpush1.bf16.msra.mxu0 %v3383
        %3421 = vmatprep.subr.bf16.mxu0 0
        %3422 = vmatpush1.bf16.msra.mxu0 %v3384
        %3423 = vmatprep.subr.bf16.mxu0 0
        %3424 = vmatpush1.bf16.msra.mxu0 %v3385
        %3425 = vmatprep.subr.bf16.mxu0 0
        %3426 = vmatpush1.bf16.msra.mxu0 %v3386
        %3427 = vmatprep.subr.bf16.mxu0 0
        %3428 = vmatpush1.bf16.msra.mxu0 %v3387
        %3429 = vmatprep.subr.bf16.mxu0 0
        %3430 = vmatpush1.bf16.msra.mxu0 %v3388
        %3431 = vmatprep.subr.bf16.mxu0 0
        %3432 = vmatpush1.bf16.msra.mxu0 %v3389
        %3433 = vmatprep.subr.bf16.mxu0 0
        %3434 = vmatpush1.bf16.msra.mxu0 %v3390
        %3435 = vmatprep.subr.bf16.mxu0 0
        %3436 = vmatpush1.bf16.msra.mxu0 %v3391
        %3437 = vmatprep.subr.bf16.mxu0 0
        %3438 = vmatpush1.bf16.msra.mxu0 %v3392
        %3439 = vmatprep.subr.bf16.mxu0 0
        %3440 = vmatpush1.bf16.msra.mxu0 %v3393
        %3441 = vmatprep.subr.bf16.mxu0 0
        %3442 = vmatpush1.bf16.msra.mxu0 %v3394
        %3443 = vmatprep.mubr.bf16.mxu0 %v3275
        %3444 = vmatmul.mubr.bf16.gmra.mrb[0].mxu0 %v3274
        %v3445 = vpop.f32.mrb[0].mxu0
        %v3446 = vadd.f32 %v3313, %v3445
        %v3447 = vpop.f32.mrb[0].mxu0
        %v3448 = vpop.f32.mrb[0].mxu0
        %v3449 = vadd.f32 %v3313, %v3448
        %v3450 = vpop.f32.mrb[0].mxu0
        %3451 = vdwg.mxu0
        %v3452 = vmax.f32 %v3446, 0.0
        %v3453 = vmax.f32 %v3449, 0.0
        %v3454 = vadd.f32 %v3452, %v3086
        %v3455 = vadd.f32 %v3453, %v3087
        %v3456 = vmax.f32 %v3454, 0.0
        %v3457 = vmax.f32 %v3455, 0.0
        %v3458 = vpack.c.bf16 %v3457, %v3456
        %v3459 = vld [vmem:[%s18] sm:$0xf]
        %v3460 = vld [vmem:[%s18 + $0x4] sm:$0xf]
        %v3461 = vld [vmem:[%s18 + $0x8] sm:$0xf]
        %v3462 = vld [vmem:[%s18 + $0xc] sm:$0xf]
        %v3463 = vld [vmem:[%s18 + $0x10] sm:$0xf]
        %v3464 = vld [vmem:[%s18 + $0x14] sm:$0xf]
        %v3465 = vld [vmem:[%s18 + $0x18] sm:$0xf]
        %v3466 = vld [vmem:[%s18 + $0x1c] sm:$0xf]
        %v3467 = vld [vmem:[%s18 + $0x20] sm:$0xf]
        %v3468 = vld [vmem:[%s18 + $0x24] sm:$0xf]
        %v3469 = vld [vmem:[%s18 + $0x28] sm:$0xf]
        %v3470 = vld [vmem:[%s18 + $0x2c] sm:$0xf]
        %v3471 = vld [vmem:[%s18 + $0x30] sm:$0xf]
        %v3472 = vld [vmem:[%s18 + $0x34] sm:$0xf]
        %v3473 = vld [vmem:[%s18 + $0x38] sm:$0xf]
        %v3474 = vld [vmem:[%s18 + $0x3c] sm:$0xf]
        %v3475 = vld [vmem:[#allocation29] sm:$0x1]
        %v3477 = vlaneseq
        %v3478 = vshrl.u32 %v3477, 7
        %v3479 = vsub.s32 0, %v3478
        %v3480 = vrot.slane %v3475, %v3479
        %v3498 = vunpack.c.l.b16 %v3459
        %v3499 = vunpack.c.l.b16 %v3460
        %v3500 = vunpack.c.l.b16 %v3461
        %v3501 = vunpack.c.l.b16 %v3462
        %v3502 = vunpack.c.l.b16 %v3463
        %v3503 = vunpack.c.l.b16 %v3464
        %v3504 = vunpack.c.l.b16 %v3465
        %v3505 = vunpack.c.l.b16 %v3466
        %v3506 = vunpack.c.l.b16 %v3467
        %v3507 = vunpack.c.l.b16 %v3468
        %v3508 = vunpack.c.l.b16 %v3469
        %v3509 = vunpack.c.l.b16 %v3470
        %v3510 = vunpack.c.l.b16 %v3471
        %v3511 = vunpack.c.l.b16 %v3472
        %v3512 = vunpack.c.l.b16 %v3473
        %v3513 = vunpack.c.l.b16 %v3474
        %v3514 = vpack.c.b16 %v3499, %v3498
        %v3515 = vpack.c.b16 %v3501, %v3500
        %v3516 = vpack.c.b16 %v3503, %v3502
        %v3517 = vpack.c.b16 %v3505, %v3504
        %v3518 = vpack.c.b16 %v3507, %v3506
        %v3519 = vpack.c.b16 %v3509, %v3508
        %v3520 = vpack.c.b16 %v3511, %v3510
        %v3521 = vpack.c.b16 %v3513, %v3512
        %3530 = vmatprep.subr.bf16.mxu0 0
        %3531 = vmatpush1.bf16.msra.mxu0 %v3514
        %3532 = vmatprep.subr.bf16.mxu0 0
        %3533 = vmatpush1.bf16.msra.mxu0 %v3515
        %3534 = vmatprep.subr.bf16.mxu0 0
        %3535 = vmatpush1.bf16.msra.mxu0 %v3516
        %3536 = vmatprep.subr.bf16.mxu0 0
        %3537 = vmatpush1.bf16.msra.mxu0 %v3517
        %3538 = vmatprep.subr.bf16.mxu0 0
        %3539 = vmatpush1.bf16.msra.mxu0 %v3518
        %3540 = vmatprep.subr.bf16.mxu0 0
        %3541 = vmatpush1.bf16.msra.mxu0 %v3519
        %3542 = vmatprep.subr.bf16.mxu0 0
        %3543 = vmatpush1.bf16.msra.mxu0 %v3520
        %3544 = vmatprep.subr.bf16.mxu0 0
        %3545 = vmatpush1.bf16.msra.mxu0 %v3521
        %3546 = vmatprep.subr.bf16.mxu0 0
        %3547 = vmatpush1.bf16.msra.mxu0 0
        %3548 = vmatprep.subr.bf16.mxu0 0
        %3549 = vmatpush1.bf16.msra.mxu0 0
        %3550 = vmatprep.subr.bf16.mxu0 0
        %3551 = vmatpush1.bf16.msra.mxu0 0
        %3552 = vmatprep.subr.bf16.mxu0 0
        %3553 = vmatpush1.bf16.msra.mxu0 0
        %3554 = vmatprep.subr.bf16.mxu0 0
        %3555 = vmatpush1.bf16.msra.mxu0 0
        %3556 = vmatprep.subr.bf16.mxu0 0
        %3557 = vmatpush1.bf16.msra.mxu0 0
        %3558 = vmatprep.subr.bf16.mxu0 0
        %3559 = vmatpush1.bf16.msra.mxu0 0
        %3560 = vmatprep.subr.bf16.mxu0 0
        %3561 = vmatpush1.bf16.msra.mxu0 0
        %3562 = vmatprep.mubr.bf16.mxu0 0
        %3563 = vmatmul.mubr.bf16.gmra.mrb[0].mxu0 %v3458
        %v3564 = vpop.f32.mrb[0].mxu0
        %v3565 = vadd.f32 %v3480, %v3564
        %v3566 = vpop.f32.mrb[0].mxu0
        %v3567 = vpop.f32.mrb[0].mxu0
        %v3568 = vadd.f32 %v3480, %v3567
        %v3569 = vpop.f32.mrb[0].mxu0
        %3570 = vdwg.mxu0
        %vm3571 = vcmask 261120
        %3572 = vst.msk [vmem:[%s874] sm:$0xff] %vm3571, %v3565
        %3573 = vst.msk [vmem:[%s874 + $0x8] sm:$0xff] %vm3571, %v3568
        %s3574 = sand.u32 %s479, 1
        %s3575 = scalar_lea.sflag [#allocation4], %s3574
        %s3576 = sand.u32 %s479, 1
        %s3577 = smul.addr %s3576, 16
        %s3578 = scalar_lea.vmem [#allocation31], %s3577
        // Predicated region
        $region173: #{text_encoder_tcn_forward.1} parent=99 // pred_check
          %p3579 = pneg %p489
        $region174: #{text_encoder_tcn_forward.1} parent=99 // pred_check_branch
          %3581 = sbr.rel (%p3579) target = $region176
        $region175: #{text_encoder_tcn_forward.1} parent=99 // pred_region
          %s3583 = ssub.s32 256, 256
          %3584 = vsyncadd %s3575, %s3583
          %s3585 = smul.addr %s46, 2
          %s3586 = smul.addr %s3585, 128
          %s3587 = scalar_lea.hbm %s20, %s3586
          %s3588 = sshll.u32 %s3578, 4
          %s3589 = int_to_ptr.vmem [resolvable:$true] %s3588
          %3594 = dma.vmem_to_hbm [thread:$0]  %s3589, 256, %s3587, %s3575, 128, 128, 8
        $region176: #{text_encoder_tcn_forward.1} parent=99 // pred_fallthru
          _
      $region100: #{text_encoder_tcn_forward.1} parent=5 // pred_fallthru
        _
      %p3595 = scmp.le.s32.totalorder 2, %s41
      // Predicated region
      $region177: #{text_encoder_tcn_forward.1} parent=5 // pred_check
        %p3596 = pneg %p3595
      $region178: #{text_encoder_tcn_forward.1} parent=5 // pred_check_branch
        %3598 = sbr.rel (%p3596) target = $region180
      $region179: #{text_encoder_tcn_forward.1} parent=5 // pred_region
        %s3599 = ssub.s32 %s41, 2
        // Predicated region
        $region181: #{text_encoder_tcn_forward.1} parent=179 // pred_check
          %p3600 = pneg %p495
        $region182: #{text_encoder_tcn_forward.1} parent=179 // pred_check_branch
          %3602 = sbr.rel (%p3600) target = $region184
        $region183: #{text_encoder_tcn_forward.1} parent=179 // pred_region
          %s3603 = sand.u32 %s480, 1
          %s3604 = scalar_lea.sflag [#allocation4], %s3603
          %s3605 = sand.u32 %s480, 1
          %s3606 = smul.addr %s3605, 16
          %s3607 = scalar_lea.vmem [#allocation31], %s3606
          %3608 = dma.done %s3604, 256
        $region184: #{text_encoder_tcn_forward.1} parent=179 // pred_fallthru
          _
      $region180: #{text_encoder_tcn_forward.1} parent=5 // pred_fallthru
        _
    $region6: #{text_encoder_tcn_forward.1} parent=1 // loop_footer
      %s45 = sadd.s32 1, %s41
    $region7: #{text_encoder_tcn_forward.1} parent=1 // loop_footer_branch
      %40 = sbr.rel target = $region3
    $region8: #{text_encoder_tcn_forward.1} parent=1 // loop_exit
      _
    %3609 = vsyncpa [#allocation3], 1
    %s3610 = scalar_lea.sflag [#allocation3], 1
    %3611 = vsyncpa %s3610, 1
    %3612 = vsyncpa [#allocation6], 1
    %3613 = vsyncpa [#allocation9], 1
    %3614 = vsyncpa [#allocation12], 1
    %3615 = vsyncpa [#allocation15], 1
    %3616 = vsyncpa [#allocation18], 1
    %3617 = vsyncpa [#allocation21], 1
    %3618 = vsyncpa [#allocation24], 1
    %3619 = vsyncpa [#allocation27], 1
    %3620 = vsyncpa [#allocation30], 1
    %3621 = vsyncpa [#allocation4], 1
    %s3622 = scalar_lea.sflag [#allocation4], 1
    %3623 = vsyncpa %s3622, 1

</llo_original>
